<compile_context>
chip_gen: v7x
topology: tpu7x:2x2x1
jax: 0.10.0
libtpu: 0.0.40
codegen_flags: <defaults>
</compile_context>

<pallas_src>
import functools

import jax
import jax.numpy as jnp
from jax.experimental import pallas as pl
from jax.experimental.pallas import tpu as pltpu


# -----------------------------------------------------------------------------
# Model constants
# -----------------------------------------------------------------------------
HIDDEN_DIM = 32        # transformer.d_model
INPUT_DIM_GT = 3       # dist, angle1, angle2
INPUT_IMG_CH = 3       # image channels
BACKBONE_CH = 4        # backbone.num_channels
NUM_DEC_LAYERS = 3     # stand-in decoder depth (-> hs leading dim)

CIN_PAD = 8            # 3-channel contractions zero-padded to 8
B_PAD = 8              # backbone channels zero-padded to 8
HEAD_SLAB = 128        # lane-dense head output width (class col 0, bbox 1:5)


# -----------------------------------------------------------------------------
# Kernel 1: backbone 1x1 conv + input_proj + pos-add + concatenated k/v proj
# -----------------------------------------------------------------------------
def _memory_kv_kernel(x_ref, pos_ref, wb_ref, bb_ref, wi_ref, bi_ref,
                      wkv_ref, bkv_ref, o_ref):
    f32, bf16 = jnp.float32, jnp.bfloat16
    x = x_ref[...]                                              # (tm, 8) f32
    # backbone stand-in: 1x1 conv + relu   (bf16 MXU operands, f32 accum)
    f = jnp.dot(x.astype(bf16), wb_ref[...].astype(bf16),
                preferred_element_type=f32)
    f = jnp.maximum(f + bb_ref[...], 0.0)                       # (tm, 8)
    # input_proj (1x1 conv) + positional embedding
    e = jnp.dot(f.astype(bf16), wi_ref[...].astype(bf16),
                preferred_element_type=f32)
    mem = e + bi_ref[...] + pos_ref[...]                        # (tm, D)
    # concatenated k/v projections for all decoder layers -> lane-dense 6*D
    kv = jnp.dot(mem.astype(bf16), wkv_ref[...].astype(bf16),
                 preferred_element_type=f32)
    o_ref[...] = (kv + bkv_ref[...]).astype(o_ref.dtype)        # (tm, 6*D)


def memory_kv_pallas(x2d, pos2d, wb, bb, wi, bi, wkv, bkv, tile_m=256):
    M, KIN = x2d.shape
    BC = wb.shape[1]
    D = wi.shape[1]
    N = wkv.shape[1]
    tm = min(tile_m, M)
    grid = (pl.cdiv(M, tm),)
    return pl.pallas_call(
        _memory_kv_kernel,
        out_shape=jax.ShapeDtypeStruct((M, N), jnp.float32),
        grid=grid,
        in_specs=[
            pl.BlockSpec((tm, KIN), lambda i: (i, 0)),
            pl.BlockSpec((tm, D), lambda i: (i, 0)),
            pl.BlockSpec((KIN, BC), lambda i: (0, 0)),
            pl.BlockSpec((1, BC), lambda i: (0, 0)),
            pl.BlockSpec((BC, D), lambda i: (0, 0)),
            pl.BlockSpec((1, D), lambda i: (0, 0)),
            pl.BlockSpec((D, N), lambda i: (0, 0)),
            pl.BlockSpec((1, N), lambda i: (0, 0)),
        ],
        out_specs=pl.BlockSpec((tm, N), lambda i: (i, 0)),
        compiler_params=pltpu.CompilerParams(dimension_semantics=("parallel",)),
    )(x2d, pos2d, wb, bb, wi, bi, wkv, bkv)


# -----------------------------------------------------------------------------
# Kernel 2: query-embed MLP + decoder layers (q/attn/o + residual) + heads
# -----------------------------------------------------------------------------
def _decoder_heads_kernel(qx_ref, kv_ref,
                          wm1_ref, bm1_ref, wm2_ref, bm2_ref, wm3_ref, bm3_ref,
                          wq_ref, bq_ref, wo_ref, bo_ref,
                          wh1_ref, bh1_ref, wh2_ref, bh2_ref,
                          wc_ref, w3_ref, bh_ref,
                          out_ref, *, num_layers, B, Q, D):
    f32 = jnp.float32

    # ---- query_embed: MLP(3, D//2, D, 3)  (Linear+ReLU, Linear+ReLU, Linear)
    x = qx_ref[...]                                             # (B*Q, 8)
    h = jnp.maximum(
        jnp.dot(x, wm1_ref[...], preferred_element_type=f32) + bm1_ref[...], 0.0)
    h = jnp.maximum(
        jnp.dot(h, wm2_ref[...], preferred_element_type=f32) + bm2_ref[...], 0.0)
    tgt2 = jnp.dot(h, wm3_ref[...], preferred_element_type=f32) + bm3_ref[...]

    kv = kv_ref[...]                                            # (B, S, 2*L*D)

    # ---- stand-in transformer decoder (sequential over layers) ----
    for l in range(num_layers):
        k = kv[:, :, 2 * l * D:(2 * l + 1) * D]                 # (B, S, D)
        v = kv[:, :, (2 * l + 1) * D:(2 * l + 2) * D]           # (B, S, D)

        # q projection (attention scale pre-folded into wq/bq)
        q2 = jnp.dot(tgt2, wq_ref[l], preferred_element_type=f32) + bq_ref[l]
        q = q2.reshape(B, Q, D)

        s = jnp.einsum("bqd,bkd->bqk", q, k, preferred_element_type=f32)
        m = jnp.max(s, axis=-1, keepdims=True)
        p = jnp.exp(s - m)
        p = p * pl.reciprocal(jnp.sum(p, axis=-1, keepdims=True), approx=True)
        attn = jnp.einsum("bqk,bkd->bqd", p, v, preferred_element_type=f32)

        upd = jnp.dot(attn.reshape(B * Q, D), wo_ref[l],
                      preferred_element_type=f32) + bo_ref[l]
        tgt2 = tgt2 + upd                                       # (B*Q, D)

    # ---- detection heads on the FINAL layer's hidden state (aux_loss=False)
    # lane-dense 128 slab:  col 0 = sigmoid(class_embed(hs)),
    #                       cols 1:5 = sigmoid(bbox_embed(hs))
    hb = jnp.maximum(
        jnp.dot(tgt2, wh1_ref[...], preferred_element_type=f32) + bh1_ref[...], 0.0)
    hb = jnp.maximum(
        jnp.dot(hb, wh2_ref[...], preferred_element_type=f32) + bh2_ref[...], 0.0)
    logits = (jnp.dot(tgt2, wc_ref[...], preferred_element_type=f32)
              + jnp.dot(hb, w3_ref[...], preferred_element_type=f32)
              + bh_ref[...])                                    # (B*Q, 128)
    out_ref[...] = jax.nn.sigmoid(logits).astype(out_ref.dtype)


def _zero_index_map(ndim):
    return lambda i: (0,) * ndim


def decoder_heads_pallas(args, *, L, B, Q, D):
    in_specs = [pl.BlockSpec(a.shape, _zero_index_map(a.ndim)) for a in args]
    return pl.pallas_call(
        functools.partial(_decoder_heads_kernel, num_layers=L, B=B, Q=Q, D=D),
        out_shape=jax.ShapeDtypeStruct((B * Q, HEAD_SLAB), jnp.float32),
        grid=(1,),
        in_specs=in_specs,
        out_specs=pl.BlockSpec((B * Q, HEAD_SLAB), lambda i: (0, 0)),
    )(*args)


# -----------------------------------------------------------------------------
# Parameter init (deterministic, PyTorch-shape-consistent)
# -----------------------------------------------------------------------------
def _linear_init(key, fan_in, fan_out):
    kw, kb = jax.random.split(key)
    w = jax.random.normal(kw, (fan_in, fan_out), jnp.float32) / jnp.sqrt(float(fan_in))
    b = 0.01 * jax.random.normal(kb, (fan_out,), jnp.float32)
    return w, b


def init_detr_params(key):
    keys = jax.random.split(key, 32)
    ki = iter(keys)
    p = {}
    # backbone stand-in: 1x1 conv (3 -> BACKBONE_CH)
    p["backbone_proj"] = _linear_init(next(ki), INPUT_IMG_CH, BACKBONE_CH)
    # input_proj: nn.Conv2d(backbone.num_channels, hidden_dim, kernel_size=1)
    p["input_proj"] = _linear_init(next(ki), BACKBONE_CH, HIDDEN_DIM)
    # query_embed: MLP(input_dim_gt, hidden_dim // 2, hidden_dim, 3)
    p["query_embed"] = [
        _linear_init(next(ki), INPUT_DIM_GT, HIDDEN_DIM // 2),
        _linear_init(next(ki), HIDDEN_DIM // 2, HIDDEN_DIM // 2),
        _linear_init(next(ki), HIDDEN_DIM // 2, HIDDEN_DIM),
    ]
    # class_embed: nn.Linear(hidden_dim, 1)
    p["class_embed"] = _linear_init(next(ki), HIDDEN_DIM, 1)
    # bbox_embed: MLP(hidden_dim, hidden_dim, 4, 3)
    p["bbox_embed"] = [
        _linear_init(next(ki), HIDDEN_DIM, HIDDEN_DIM),
        _linear_init(next(ki), HIDDEN_DIM, HIDDEN_DIM),
        _linear_init(next(ki), HIDDEN_DIM, 4),
    ]
    # transformer stand-in: per-decoder-layer q/k/v/o projections
    p["transformer"] = []
    for _ in range(NUM_DEC_LAYERS):
        layer = {
            "q": _linear_init(next(ki), HIDDEN_DIM, HIDDEN_DIM),
            "k": _linear_init(next(ki), HIDDEN_DIM, HIDDEN_DIM),
            "v": _linear_init(next(ki), HIDDEN_DIM, HIDDEN_DIM),
            "o": _linear_init(next(ki), HIDDEN_DIM, HIDDEN_DIM),
        }
        p["transformer"].append(layer)
    return p


# -----------------------------------------------------------------------------
# Glue (channels-last end-to-end)
# -----------------------------------------------------------------------------
def make_pos_embed_cl(B, D, H, W):
    """Channels-last sinusoid positional embedding, shape (B*H*W, D)."""
    y = jnp.linspace(0.0, 1.0, H)
    x = jnp.linspace(0.0, 1.0, W)
    yy, xx = jnp.meshgrid(y, x, indexing="ij")                  # (H, W)
    freq = 1.0 / (100.0 ** (jnp.arange(D // 2) / (D // 2)))
    pos_y = jnp.sin(2.0 * jnp.pi * yy[..., None] * freq)        # (H, W, D//2)
    pos_x = jnp.cos(2.0 * jnp.pi * xx[..., None] * freq)        # (H, W, D//2)
    pos = jnp.concatenate([pos_y, pos_x], axis=-1)              # (H, W, D)
    pos = jnp.broadcast_to(pos[None], (B, H, W, D))
    return pos.reshape(B * H * W, D).astype(jnp.float32)


def detr_forward(params, images, queries, queries_mask):
    # TODO(synk): queries_mask unused by the stand-in transformer.
    del queries_mask
    B, C, H, W = images.shape
    D = HIDDEN_DIM
    S = H * W
    Q = queries.shape[1]
    L = NUM_DEC_LAYERS

    # single NCHW -> channels-last transpose at the boundary; pad channels 3->8
    x2d = jnp.transpose(images, (0, 2, 3, 1)).reshape(B * S, C)
    x2d = jnp.pad(x2d, ((0, 0), (0, CIN_PAD - C)))
    pos2d = make_pos_embed_cl(B, D, H, W)                       # (B*S, D)

    # zero-padded backbone / input_proj weights (K=3 -> 8, BACKBONE_CH=4 -> 8)
    wb, bb = params["backbone_proj"]
    wb8 = jnp.zeros((CIN_PAD, B_PAD), jnp.float32).at[:INPUT_IMG_CH, :BACKBONE_CH].set(wb)
    bb8 = jnp.zeros((1, B_PAD), jnp.float32).at[0, :BACKBONE_CH].set(bb)
    wi, bi = params["input_proj"]
    wi8 = jnp.zeros((B_PAD, D), jnp.float32).at[:BACKBONE_CH, :].set(wi)
    bi2 = bi.reshape(1, D)

    # concatenated k/v projection weights for all decoder layers: (D, 2*L*D)
    wkv = jnp.concatenate(
        [jnp.concatenate([lay["k"][0], lay["v"][0]], axis=1)
         for lay in params["transformer"]], axis=1)
    bkv = jnp.concatenate(
        [jnp.concatenate([lay["k"][1], lay["v"][1]])
         for lay in params["transformer"]]).reshape(1, 2 * L * D)

    # ---- kernel 1: backbone + input_proj + pos + all k/v projections ----
    kv = memory_kv_pallas(x2d, pos2d, wb8, bb8, wi8, bi2, wkv, bkv)  # (B*S, 6D)
    kv = kv.reshape(B, S, 2 * L * D)

    # query-embed MLP weights (pad input 3 -> 8), biases as (1, N)
    (wm1, bm1), (wm2, bm2), (wm3, bm3) = params["query_embed"]
    wm1p = jnp.zeros((CIN_PAD, D // 2), jnp.float32).at[:INPUT_DIM_GT, :].set(wm1)
    qx = jnp.pad(queries.reshape(B * Q, INPUT_DIM_GT),
                 ((0, 0), (0, CIN_PAD - INPUT_DIM_GT)))

    # per-layer q/o projections; attention scale folded into wq/bq
    scale = 1.0 / (D ** 0.5)
    wq_all = jnp.stack([lay["q"][0] for lay in params["transformer"]]) * scale
    bq_all = (jnp.stack([lay["q"][1] for lay in params["transformer"]]) * scale
              ).reshape(L, 1, D)
    wo_all = jnp.stack([lay["o"][0] for lay in params["transformer"]])
    bo_all = jnp.stack([lay["o"][1] for lay in params["transformer"]]).reshape(L, 1, D)

    # heads: class_embed + bbox_embed packed into one lane-dense 128-wide slab
    (wh1, bh1), (wh2, bh2), (wh3, bh3) = params["bbox_embed"]
    wc, bc = params["class_embed"]
    wc_pad = jnp.zeros((D, HEAD_SLAB), jnp.float32).at[:, 0:1].set(wc)
    w3_pad = jnp.zeros((D, HEAD_SLAB), jnp.float32).at[:, 1:5].set(wh3)
    bh_pad = jnp.zeros((1, HEAD_SLAB), jnp.float32).at[0, 0].set(bc[0]).at[0, 1:5].set(bh3)

    args = (qx, kv,
            wm1p, bm1.reshape(1, -1), wm2, bm2.reshape(1, -1), wm3, bm3.reshape(1, -1),
            wq_all, bq_all, wo_all, bo_all,
            wh1, bh1.reshape(1, -1), wh2, bh2.reshape(1, -1),
            wc_pad, w3_pad, bh_pad)

    # ---- kernel 2: query MLP + decoder layers + final-layer heads ----
    head_out = decoder_heads_pallas(args, L=L, B=B, Q=Q, D=D)   # (B*Q, 128)
    head_out = head_out.reshape(B, Q, HEAD_SLAB)

    # outputs_objectness = class_embed(hs).sigmoid().squeeze(-1)  -> col 0
    # outputs_coord      = bbox_embed(hs).sigmoid()               -> cols 1:5
    # aux_loss = False -> only the last decoder layer is returned
    return {
        "pred_logits": head_out[:, :, 0],            # (B, Q)
        "pred_boxes": head_out[:, :, 1:5],           # (B, Q, 4)
    }


# -----------------------------------------------------------------------------
# Main
# -----------------------------------------------------------------------------
if __name__ == "__main__":
    key = jax.random.PRNGKey(0)
    k_params, k_img, k_q = jax.random.split(key, 3)

    params = init_detr_params(k_params)

    B, H, W, Q = 2, 16, 16, 8
    images = jax.random.normal(k_img, (B, 3, H, W), jnp.float32)       # NCHW
    queries = jax.random.uniform(k_q, (B, Q, INPUT_DIM_GT), jnp.float32,
                                 minval=-1.0, maxval=1.0)
    queries_mask = jnp.zeros((B, Q), dtype=jnp.bool_)

    out = jax.jit(detr_forward)(params, images, queries, queries_mask)
    out = jax.block_until_ready(out)

    assert out["pred_logits"].shape == (B, Q)
    assert out["pred_boxes"].shape == (B, Q, 4)
    assert bool(jnp.all(jnp.isfinite(out["pred_logits"])))
    assert bool(jnp.all((out["pred_boxes"] >= 0.0) & (out["pred_boxes"] <= 1.0)))
    print("KERNEL_OK")
</pallas_src>

<mosaic_0001>
module attributes {stable_mosaic.version = 11 : i64} {
  func.func @_memory_kv_kernel(%arg0: i32, %arg1: memref<256x8xf32, #tpu.memory_space<vmem>>, %arg2: memref<256x32xf32, #tpu.memory_space<vmem>>, %arg3: memref<8x8xf32, #tpu.memory_space<vmem>>, %arg4: memref<1x8xf32, #tpu.memory_space<vmem>>, %arg5: memref<8x32xf32, #tpu.memory_space<vmem>>, %arg6: memref<1x32xf32, #tpu.memory_space<vmem>>, %arg7: memref<32x192xf32, #tpu.memory_space<vmem>>, %arg8: memref<1x192xf32, #tpu.memory_space<vmem>>, %arg9: memref<256x192xf32, #tpu.memory_space<vmem>>) attributes {dimension_semantics = [#tpu.dimension_semantics<parallel>], iteration_bounds = array<i64: 2>, scalar_prefetch = 0 : i64, scratch_operands = 0 : i64, tpu.core_type = #tpu.core_type<tc>, window_params = [{transform_indices = @transform_0, window_bounds = array<i64: 256, 8>}, {transform_indices = @transform_1, window_bounds = array<i64: 256, 32>}, {pipeline_mode = #tpu.pipeline_mode<synchronous>, transform_indices = @transform_2, window_bounds = array<i64: 8, 8>}, {pipeline_mode = #tpu.pipeline_mode<synchronous>, transform_indices = @transform_3, window_bounds = array<i64: 1, 8>}, {pipeline_mode = #tpu.pipeline_mode<synchronous>, transform_indices = @transform_4, window_bounds = array<i64: 8, 32>}, {pipeline_mode = #tpu.pipeline_mode<synchronous>, transform_indices = @transform_5, window_bounds = array<i64: 1, 32>}, {pipeline_mode = #tpu.pipeline_mode<synchronous>, transform_indices = @transform_6, window_bounds = array<i64: 32, 192>}, {pipeline_mode = #tpu.pipeline_mode<synchronous>, transform_indices = @transform_7, window_bounds = array<i64: 1, 192>}, {transform_indices = @transform_8, window_bounds = array<i64: 256, 192>}]} {
    %c0 = arith.constant 0 : index
    %c0_0 = arith.constant 0 : index
    %0 = vector.load %arg1[%c0, %c0_0] : memref<256x8xf32, #tpu.memory_space<vmem>>, vector<256x8xf32>
    %1 = arith.truncf %0 : vector<256x8xf32> to vector<256x8xbf16>
    %c0_1 = arith.constant 0 : index
    %c0_2 = arith.constant 0 : index
    %2 = vector.load %arg3[%c0_1, %c0_2] : memref<8x8xf32, #tpu.memory_space<vmem>>, vector<8x8xf32>
    %3 = arith.truncf %2 : vector<8x8xf32> to vector<8x8xbf16>
    %cst = arith.constant dense<0.000000e+00> : vector<256x8xf32>
    %4 = tpu.matmul %1, %3, %cst {dimension_numbers = #tpu.dot_dimension_numbers<[1], [0], [0], [1], [0, 0, 1, 1], [], []>} : vector<256x8xbf16>, vector<8x8xbf16>, vector<256x8xf32> -> vector<256x8xf32>
    %c0_3 = arith.constant 0 : index
    %c0_4 = arith.constant 0 : index
    %5 = vector.load %arg4[%c0_3, %c0_4] : memref<1x8xf32, #tpu.memory_space<vmem>>, vector<1x8xf32>
    %6 = vector.broadcast %5 : vector<1x8xf32> to vector<256x8xf32>
    %7 = arith.addf %4, %6 : vector<256x8xf32>
    %cst_5 = arith.constant 0.000000e+00 : f32
    %8 = vector.broadcast %cst_5 : f32 to vector<256x8xf32>
    %9 = arith.maximumf %7, %8 : vector<256x8xf32>
    %10 = arith.truncf %9 : vector<256x8xf32> to vector<256x8xbf16>
    %c0_6 = arith.constant 0 : index
    %c0_7 = arith.constant 0 : index
    %11 = vector.load %arg5[%c0_6, %c0_7] : memref<8x32xf32, #tpu.memory_space<vmem>>, vector<8x32xf32>
    %12 = arith.truncf %11 : vector<8x32xf32> to vector<8x32xbf16>
    %cst_8 = arith.constant dense<0.000000e+00> : vector<256x32xf32>
    %13 = tpu.matmul %10, %12, %cst_8 {dimension_numbers = #tpu.dot_dimension_numbers<[1], [0], [0], [1], [0, 0, 1, 1], [], []>} : vector<256x8xbf16>, vector<8x32xbf16>, vector<256x32xf32> -> vector<256x32xf32>
    %c0_9 = arith.constant 0 : index
    %c0_10 = arith.constant 0 : index
    %14 = vector.load %arg6[%c0_9, %c0_10] : memref<1x32xf32, #tpu.memory_space<vmem>>, vector<1x32xf32>
    %15 = vector.broadcast %14 : vector<1x32xf32> to vector<256x32xf32>
    %16 = arith.addf %13, %15 : vector<256x32xf32>
    %c0_11 = arith.constant 0 : index
    %c0_12 = arith.constant 0 : index
    %17 = vector.load %arg2[%c0_11, %c0_12] : memref<256x32xf32, #tpu.memory_space<vmem>>, vector<256x32xf32>
    %18 = arith.addf %16, %17 : vector<256x32xf32>
    %19 = arith.truncf %18 : vector<256x32xf32> to vector<256x32xbf16>
    %c0_13 = arith.constant 0 : index
    %c0_14 = arith.constant 0 : index
    %20 = vector.load %arg7[%c0_13, %c0_14] : memref<32x192xf32, #tpu.memory_space<vmem>>, vector<32x192xf32>
    %21 = arith.truncf %20 : vector<32x192xf32> to vector<32x192xbf16>
    %cst_15 = arith.constant dense<0.000000e+00> : vector<256x192xf32>
    %22 = tpu.matmul %19, %21, %cst_15 {dimension_numbers = #tpu.dot_dimension_numbers<[1], [0], [0], [1], [0, 0, 1, 1], [], []>} : vector<256x32xbf16>, vector<32x192xbf16>, vector<256x192xf32> -> vector<256x192xf32>
    %c0_16 = arith.constant 0 : index
    %c0_17 = arith.constant 0 : index
    %23 = vector.load %arg8[%c0_16, %c0_17] : memref<1x192xf32, #tpu.memory_space<vmem>>, vector<1x192xf32>
    %24 = vector.broadcast %23 : vector<1x192xf32> to vector<256x192xf32>
    %25 = arith.addf %22, %24 : vector<256x192xf32>
    %c0_18 = arith.constant 0 : index
    %c0_19 = arith.constant 0 : index
    %26 = vector.load %arg9[%c0_18, %c0_19] : memref<256x192xf32, #tpu.memory_space<vmem>>, vector<256x192xf32>
    tpu.vector_store %arg9[%c0_18, %c0_19], %25 {strides = array<i32>} : memref<256x192xf32, #tpu.memory_space<vmem>>, vector<256x192xf32>,
    return
  }
  func.func @transform_0(%arg0: i32) -> (i32, i32) {
    %c0_i32 = arith.constant 0 : i32
    %c0_i32_0 = arith.constant 0 : i32
    return %arg0, %c0_i32 : i32, i32
  }
  func.func @transform_1(%arg0: i32) -> (i32, i32) {
    %c0_i32 = arith.constant 0 : i32
    %c0_i32_0 = arith.constant 0 : i32
    return %arg0, %c0_i32 : i32, i32
  }
  func.func @transform_2(%arg0: i32) -> (i32, i32) {
    %c0_i32 = arith.constant 0 : i32
    %c0_i32_0 = arith.constant 0 : i32
    %c0_i32_1 = arith.constant 0 : i32
    return %c0_i32, %c0_i32_0 : i32, i32
  }
  func.func @transform_3(%arg0: i32) -> (i32, i32) {
    %c0_i32 = arith.constant 0 : i32
    %c0_i32_0 = arith.constant 0 : i32
    %c0_i32_1 = arith.constant 0 : i32
    return %c0_i32, %c0_i32_0 : i32, i32
  }
  func.func @transform_4(%arg0: i32) -> (i32, i32) {
    %c0_i32 = arith.constant 0 : i32
    %c0_i32_0 = arith.constant 0 : i32
    %c0_i32_1 = arith.constant 0 : i32
    return %c0_i32, %c0_i32_0 : i32, i32
  }
  func.func @transform_5(%arg0: i32) -> (i32, i32) {
    %c0_i32 = arith.constant 0 : i32
    %c0_i32_0 = arith.constant 0 : i32
    %c0_i32_1 = arith.constant 0 : i32
    return %c0_i32, %c0_i32_0 : i32, i32
  }
  func.func @transform_6(%arg0: i32) -> (i32, i32) {
    %c0_i32 = arith.constant 0 : i32
    %c0_i32_0 = arith.constant 0 : i32
    %c0_i32_1 = arith.constant 0 : i32
    return %c0_i32, %c0_i32_0 : i32, i32
  }
  func.func @transform_7(%arg0: i32) -> (i32, i32) {
    %c0_i32 = arith.constant 0 : i32
    %c0_i32_0 = arith.constant 0 : i32
    %c0_i32_1 = arith.constant 0 : i32
    return %c0_i32, %c0_i32_0 : i32, i32
  }
  func.func @transform_8(%arg0: i32) -> (i32, i32) {
    %c0_i32 = arith.constant 0 : i32
    %c0_i32_0 = arith.constant 0 : i32
    return %arg0, %c0_i32 : i32, i32
  }
}

module attributes {stable_mosaic.version = 11 : i64} {
  func.func @_decoder_heads_kernel(%arg0: i32, %arg1: memref<16x8xf32, #tpu.memory_space<vmem>>, %arg2: memref<2x256x192xf32, #tpu.memory_space<vmem>>, %arg3: memref<8x16xf32, #tpu.memory_space<vmem>>, %arg4: memref<1x16xf32, #tpu.memory_space<vmem>>, %arg5: memref<16x16xf32, #tpu.memory_space<vmem>>, %arg6: memref<1x16xf32, #tpu.memory_space<vmem>>, %arg7: memref<16x32xf32, #tpu.memory_space<vmem>>, %arg8: memref<1x32xf32, #tpu.memory_space<vmem>>, %arg9: memref<3x32x32xf32, #tpu.memory_space<vmem>>, %arg10: memref<3x1x32xf32, #tpu.memory_space<vmem>>, %arg11: memref<3x32x32xf32, #tpu.memory_space<vmem>>, %arg12: memref<3x1x32xf32, #tpu.memory_space<vmem>>, %arg13: memref<32x32xf32, #tpu.memory_space<vmem>>, %arg14: memref<1x32xf32, #tpu.memory_space<vmem>>, %arg15: memref<32x32xf32, #tpu.memory_space<vmem>>, %arg16: memref<1x32xf32, #tpu.memory_space<vmem>>, %arg17: memref<32x128xf32, #tpu.memory_space<vmem>>, %arg18: memref<32x128xf32, #tpu.memory_space<vmem>>, %arg19: memref<1x128xf32, #tpu.memory_space<vmem>>, %arg20: memref<16x128xf32, #tpu.memory_space<vmem>>) attributes {dimension_semantics = [#tpu.dimension_semantics<arbitrary>], iteration_bounds = array<i64: 1>, scalar_prefetch = 0 : i64, scratch_operands = 0 : i64, tpu.core_type = #tpu.core_type<tc>, window_params = [{pipeline_mode = #tpu.pipeline_mode<synchronous>, transform_indices = @transform_0, window_bounds = array<i64: 16, 8>}, {pipeline_mode = #tpu.pipeline_mode<synchronous>, transform_indices = @transform_1, window_bounds = array<i64: 2, 256, 192>}, {pipeline_mode = #tpu.pipeline_mode<synchronous>, transform_indices = @transform_2, window_bounds = array<i64: 8, 16>}, {pipeline_mode = #tpu.pipeline_mode<synchronous>, transform_indices = @transform_3, window_bounds = array<i64: 1, 16>}, {pipeline_mode = #tpu.pipeline_mode<synchronous>, transform_indices = @transform_4, window_bounds = array<i64: 16, 16>}, {pipeline_mode = #tpu.pipeline_mode<synchronous>, transform_indices = @transform_5, window_bounds = array<i64: 1, 16>}, {pipeline_mode = #tpu.pipeline_mode<synchronous>, transform_indices = @transform_6, window_bounds = array<i64: 16, 32>}, {pipeline_mode = #tpu.pipeline_mode<synchronous>, transform_indices = @transform_7, window_bounds = array<i64: 1, 32>}, {pipeline_mode = #tpu.pipeline_mode<synchronous>, transform_indices = @transform_8, window_bounds = array<i64: 3, 32, 32>}, {pipeline_mode = #tpu.pipeline_mode<synchronous>, transform_indices = @transform_9, window_bounds = array<i64: 3, 1, 32>}, {pipeline_mode = #tpu.pipeline_mode<synchronous>, transform_indices = @transform_10, window_bounds = array<i64: 3, 32, 32>}, {pipeline_mode = #tpu.pipeline_mode<synchronous>, transform_indices = @transform_11, window_bounds = array<i64: 3, 1, 32>}, {pipeline_mode = #tpu.pipeline_mode<synchronous>, transform_indices = @transform_12, window_bounds = array<i64: 32, 32>}, {pipeline_mode = #tpu.pipeline_mode<synchronous>, transform_indices = @transform_13, window_bounds = array<i64: 1, 32>}, {pipeline_mode = #tpu.pipeline_mode<synchronous>, transform_indices = @transform_14, window_bounds = array<i64: 32, 32>}, {pipeline_mode = #tpu.pipeline_mode<synchronous>, transform_indices = @transform_15, window_bounds = array<i64: 1, 32>}, {pipeline_mode = #tpu.pipeline_mode<synchronous>, transform_indices = @transform_16, window_bounds = array<i64: 32, 128>}, {pipeline_mode = #tpu.pipeline_mode<synchronous>, transform_indices = @transform_17, window_bounds = array<i64: 32, 128>}, {pipeline_mode = #tpu.pipeline_mode<synchronous>, transform_indices = @transform_18, window_bounds = array<i64: 1, 128>}, {pipeline_mode = #tpu.pipeline_mode<synchronous>, transform_indices = @transform_19, window_bounds = array<i64: 16, 128>}]} {
    %c0 = arith.constant 0 : index
    %c0_0 = arith.constant 0 : index
    %0 = vector.load %arg1[%c0, %c0_0] : memref<16x8xf32, #tpu.memory_space<vmem>>, vector<16x8xf32>
    %c0_1 = arith.constant 0 : index
    %c0_2 = arith.constant 0 : index
    %1 = vector.load %arg3[%c0_1, %c0_2] : memref<8x16xf32, #tpu.memory_space<vmem>>, vector<8x16xf32>
    %cst = arith.constant dense<0.000000e+00> : vector<16x16xf32>
    %2 = tpu.matmul %0, %1, %cst {dimension_numbers = #tpu.dot_dimension_numbers<[1], [0], [0], [1], [0, 0, 1, 1], [], []>} : vector<16x8xf32>, vector<8x16xf32>, vector<16x16xf32> -> vector<16x16xf32>
    %c0_3 = arith.constant 0 : index
    %c0_4 = arith.constant 0 : index
    %3 = vector.load %arg4[%c0_3, %c0_4] : memref<1x16xf32, #tpu.memory_space<vmem>>, vector<1x16xf32>
    %4 = vector.broadcast %3 : vector<1x16xf32> to vector<16x16xf32>
    %5 = arith.addf %2, %4 : vector<16x16xf32>
    %cst_5 = arith.constant 0.000000e+00 : f32
    %6 = vector.broadcast %cst_5 : f32 to vector<16x16xf32>
    %7 = arith.maximumf %5, %6 : vector<16x16xf32>
    %c0_6 = arith.constant 0 : index
    %c0_7 = arith.constant 0 : index
    %8 = vector.load %arg5[%c0_6, %c0_7] : memref<16x16xf32, #tpu.memory_space<vmem>>, vector<16x16xf32>
    %cst_8 = arith.constant dense<0.000000e+00> : vector<16x16xf32>
    %9 = tpu.matmul %7, %8, %cst_8 {dimension_numbers = #tpu.dot_dimension_numbers<[1], [0], [0], [1], [0, 0, 1, 1], [], []>} : vector<16x16xf32>, vector<16x16xf32>, vector<16x16xf32> -> vector<16x16xf32>
    %c0_9 = arith.constant 0 : index
    %c0_10 = arith.constant 0 : index
    %10 = vector.load %arg6[%c0_9, %c0_10] : memref<1x16xf32, #tpu.memory_space<vmem>>, vector<1x16xf32>
    %11 = vector.broadcast %10 : vector<1x16xf32> to vector<16x16xf32>
    %12 = arith.addf %9, %11 : vector<16x16xf32>
    %cst_11 = arith.constant 0.000000e+00 : f32
    %13 = vector.broadcast %cst_11 : f32 to vector<16x16xf32>
    %14 = arith.maximumf %12, %13 : vector<16x16xf32>
    %c0_12 = arith.constant 0 : index
    %c0_13 = arith.constant 0 : index
    %15 = vector.load %arg7[%c0_12, %c0_13] : memref<16x32xf32, #tpu.memory_space<vmem>>, vector<16x32xf32>
    %cst_14 = arith.constant dense<0.000000e+00> : vector<16x32xf32>
    %16 = tpu.matmul %14, %15, %cst_14 {dimension_numbers = #tpu.dot_dimension_numbers<[1], [0], [0], [1], [0, 0, 1, 1], [], []>} : vector<16x16xf32>, vector<16x32xf32>, vector<16x32xf32> -> vector<16x32xf32>
    %c0_15 = arith.constant 0 : index
    %c0_16 = arith.constant 0 : index
    %17 = vector.load %arg8[%c0_15, %c0_16] : memref<1x32xf32, #tpu.memory_space<vmem>>, vector<1x32xf32>
    %18 = vector.broadcast %17 : vector<1x32xf32> to vector<16x32xf32>
    %19 = arith.addf %16, %18 : vector<16x32xf32>
    %c0_17 = arith.constant 0 : index
    %c0_18 = arith.constant 0 : index
    %c0_19 = arith.constant 0 : index
    %20 = vector.load %arg2[%c0_17, %c0_18, %c0_19] : memref<2x256x192xf32, #tpu.memory_space<vmem>>, vector<2x256x192xf32>
    %21 = vector.extract_strided_slice %20 {offsets = [0, 0, 0], sizes = [2, 256, 32], strides = [1, 1, 1]} : vector<2x256x192xf32> to vector<2x256x32xf32>
    %22 = vector.extract_strided_slice %20 {offsets = [0, 0, 32], sizes = [2, 256, 32], strides = [1, 1, 1]} : vector<2x256x192xf32> to vector<2x256x32xf32>
    %c0_20 = arith.constant 0 : index
    %c0_21 = arith.constant 0 : index
    %c0_22 = arith.constant 0 : index
    %23 = vector.load %arg9[%c0_20, %c0_21, %c0_22] : memref<3x32x32xf32, #tpu.memory_space<vmem>>, vector<1x32x32xf32>
    %24 = vector.shape_cast %23 : vector<1x32x32xf32> to vector<32x32xf32>
    %cst_23 = arith.constant dense<0.000000e+00> : vector<16x32xf32>
    %25 = tpu.matmul %19, %24, %cst_23 {dimension_numbers = #tpu.dot_dimension_numbers<[1], [0], [0], [1], [0, 0, 1, 1], [], []>} : vector<16x32xf32>, vector<32x32xf32>, vector<16x32xf32> -> vector<16x32xf32>
    %c0_24 = arith.constant 0 : index
    %c0_25 = arith.constant 0 : index
    %c0_26 = arith.constant 0 : index
    %26 = vector.load %arg10[%c0_24, %c0_25, %c0_26] : memref<3x1x32xf32, #tpu.memory_space<vmem>>, vector<1x1x32xf32>
    %27 = vector.shape_cast %26 : vector<1x1x32xf32> to vector<1x32xf32>
    %28 = vector.broadcast %27 : vector<1x32xf32> to vector<16x32xf32>
    %29 = arith.addf %25, %28 : vector<16x32xf32>
    %30 = vector.shape_cast %29 : vector<16x32xf32> to vector<2x8x32xf32>
    "tpu.trace_start"() <{level = 10 : i32, message = "bqd,bkd->bqk"}> : () -> ()
    %cst_27 = arith.constant dense<0.000000e+00> : vector<2x8x256xf32>
    %31 = tpu.matmul %30, %21, %cst_27 {dimension_numbers = #tpu.dot_dimension_numbers<[2], [2], [1], [1], [0, 0, 0, 1, 1, 1], [0], [0]>} : vector<2x8x32xf32>, vector<2x256x32xf32>, vector<2x8x256xf32> -> vector<2x8x256xf32>
    "tpu.trace_stop"() : () -> ()
    %cst_28 = arith.constant dense<0xFF800000> : vector<2x8xf32>
    %32 = vector.multi_reduction <maximumf>, %31, %cst_28 [2] : vector<2x8x256xf32> to vector<2x8xf32>
    %33 = vector.shape_cast %32 : vector<2x8xf32> to vector<2x8x1xf32>
    %34 = vector.broadcast %33 : vector<2x8x1xf32> to vector<2x8x256xf32>
    %35 = arith.subf %31, %34 : vector<2x8x256xf32>
    %36 = math.exp %35 : vector<2x8x256xf32>
    %cst_29 = arith.constant dense<0.000000e+00> : vector<2x8xf32>
    %37 = vector.multi_reduction <add>, %36, %cst_29 [2] : vector<2x8x256xf32> to vector<2x8xf32>
    %38 = vector.shape_cast %37 : vector<2x8xf32> to vector<2x8x1xf32>
    %39 = tpu.reciprocal %38 {approx = true} : vector<2x8x1xf32> -> vector<2x8x1xf32>
    %40 = vector.broadcast %39 : vector<2x8x1xf32> to vector<2x8x256xf32>
    %41 = arith.mulf %36, %40 : vector<2x8x256xf32>
    "tpu.trace_start"() <{level = 10 : i32, message = "bqk,bkd->bqd"}> : () -> ()
    %cst_30 = arith.constant dense<0.000000e+00> : vector<2x8x32xf32>
    %42 = tpu.matmul %41, %22, %cst_30 {dimension_numbers = #tpu.dot_dimension_numbers<[2], [1], [1], [2], [0, 0, 0, 1, 1, 2], [0], [0]>} : vector<2x8x256xf32>, vector<2x256x32xf32>, vector<2x8x32xf32> -> vector<2x8x32xf32>
    "tpu.trace_stop"() : () -> ()
    %43 = vector.shape_cast %42 : vector<2x8x32xf32> to vector<16x32xf32>
    %c0_31 = arith.constant 0 : index
    %c0_32 = arith.constant 0 : index
    %c0_33 = arith.constant 0 : index
    %44 = vector.load %arg11[%c0_31, %c0_32, %c0_33] : memref<3x32x32xf32, #tpu.memory_space<vmem>>, vector<1x32x32xf32>
    %45 = vector.shape_cast %44 : vector<1x32x32xf32> to vector<32x32xf32>
    %cst_34 = arith.constant dense<0.000000e+00> : vector<16x32xf32>
    %46 = tpu.matmul %43, %45, %cst_34 {dimension_numbers = #tpu.dot_dimension_numbers<[1], [0], [0], [1], [0, 0, 1, 1], [], []>} : vector<16x32xf32>, vector<32x32xf32>, vector<16x32xf32> -> vector<16x32xf32>
    %c0_35 = arith.constant 0 : index
    %c0_36 = arith.constant 0 : index
    %c0_37 = arith.constant 0 : index
    %47 = vector.load %arg12[%c0_35, %c0_36, %c0_37] : memref<3x1x32xf32, #tpu.memory_space<vmem>>, vector<1x1x32xf32>
    %48 = vector.shape_cast %47 : vector<1x1x32xf32> to vector<1x32xf32>
    %49 = vector.broadcast %48 : vector<1x32xf32> to vector<16x32xf32>
    %50 = arith.addf %46, %49 : vector<16x32xf32>
    %51 = arith.addf %19, %50 : vector<16x32xf32>
    %52 = vector.extract_strided_slice %20 {offsets = [0, 0, 64], sizes = [2, 256, 32], strides = [1, 1, 1]} : vector<2x256x192xf32> to vector<2x256x32xf32>
    %53 = vector.extract_strided_slice %20 {offsets = [0, 0, 96], sizes = [2, 256, 32], strides = [1, 1, 1]} : vector<2x256x192xf32> to vector<2x256x32xf32>
    %c1 = arith.constant 1 : index
    %c0_38 = arith.constant 0 : index
    %c0_39 = arith.constant 0 : index
    %54 = vector.load %arg9[%c1, %c0_38, %c0_39] : memref<3x32x32xf32, #tpu.memory_space<vmem>>, vector<1x32x32xf32>
    %55 = vector.shape_cast %54 : vector<1x32x32xf32> to vector<32x32xf32>
    %cst_40 = arith.constant dense<0.000000e+00> : vector<16x32xf32>
    %56 = tpu.matmul %51, %55, %cst_40 {dimension_numbers = #tpu.dot_dimension_numbers<[1], [0], [0], [1], [0, 0, 1, 1], [], []>} : vector<16x32xf32>, vector<32x32xf32>, vector<16x32xf32> -> vector<16x32xf32>
    %c1_41 = arith.constant 1 : index
    %c0_42 = arith.constant 0 : index
    %c0_43 = arith.constant 0 : index
    %57 = vector.load %arg10[%c1_41, %c0_42, %c0_43] : memref<3x1x32xf32, #tpu.memory_space<vmem>>, vector<1x1x32xf32>
    %58 = vector.shape_cast %57 : vector<1x1x32xf32> to vector<1x32xf32>
    %59 = vector.broadcast %58 : vector<1x32xf32> to vector<16x32xf32>
    %60 = arith.addf %56, %59 : vector<16x32xf32>
    %61 = vector.shape_cast %60 : vector<16x32xf32> to vector<2x8x32xf32>
    "tpu.trace_start"() <{level = 10 : i32, message = "bqd,bkd->bqk"}> : () -> ()
    %cst_44 = arith.constant dense<0.000000e+00> : vector<2x8x256xf32>
    %62 = tpu.matmul %61, %52, %cst_44 {dimension_numbers = #tpu.dot_dimension_numbers<[2], [2], [1], [1], [0, 0, 0, 1, 1, 1], [0], [0]>} : vector<2x8x32xf32>, vector<2x256x32xf32>, vector<2x8x256xf32> -> vector<2x8x256xf32>
    "tpu.trace_stop"() : () -> ()
    %cst_45 = arith.constant dense<0xFF800000> : vector<2x8xf32>
    %63 = vector.multi_reduction <maximumf>, %62, %cst_45 [2] : vector<2x8x256xf32> to vector<2x8xf32>
    %64 = vector.shape_cast %63 : vector<2x8xf32> to vector<2x8x1xf32>
    %65 = vector.broadcast %64 : vector<2x8x1xf32> to vector<2x8x256xf32>
    %66 = arith.subf %62, %65 : vector<2x8x256xf32>
    %67 = math.exp %66 : vector<2x8x256xf32>
    %cst_46 = arith.constant dense<0.000000e+00> : vector<2x8xf32>
    %68 = vector.multi_reduction <add>, %67, %cst_46 [2] : vector<2x8x256xf32> to vector<2x8xf32>
    %69 = vector.shape_cast %68 : vector<2x8xf32> to vector<2x8x1xf32>
    %70 = tpu.reciprocal %69 {approx = true} : vector<2x8x1xf32> -> vector<2x8x1xf32>
    %71 = vector.broadcast %70 : vector<2x8x1xf32> to vector<2x8x256xf32>
    %72 = arith.mulf %67, %71 : vector<2x8x256xf32>
    "tpu.trace_start"() <{level = 10 : i32, message = "bqk,bkd->bqd"}> : () -> ()
    %cst_47 = arith.constant dense<0.000000e+00> : vector<2x8x32xf32>
    %73 = tpu.matmul %72, %53, %cst_47 {dimension_numbers = #tpu.dot_dimension_numbers<[2], [1], [1], [2], [0, 0, 0, 1, 1, 2], [0], [0]>} : vector<2x8x256xf32>, vector<2x256x32xf32>, vector<2x8x32xf32> -> vector<2x8x32xf32>
    "tpu.trace_stop"() : () -> ()
    %74 = vector.shape_cast %73 : vector<2x8x32xf32> to vector<16x32xf32>
    %c1_48 = arith.constant 1 : index
    %c0_49 = arith.constant 0 : index
    %c0_50 = arith.constant 0 : index
    %75 = vector.load %arg11[%c1_48, %c0_49, %c0_50] : memref<3x32x32xf32, #tpu.memory_space<vmem>>, vector<1x32x32xf32>
    %76 = vector.shape_cast %75 : vector<1x32x32xf32> to vector<32x32xf32>
    %cst_51 = arith.constant dense<0.000000e+00> : vector<16x32xf32>
    %77 = tpu.matmul %74, %76, %cst_51 {dimension_numbers = #tpu.dot_dimension_numbers<[1], [0], [0], [1], [0, 0, 1, 1], [], []>} : vector<16x32xf32>, vector<32x32xf32>, vector<16x32xf32> -> vector<16x32xf32>
    %c1_52 = arith.constant 1 : index
    %c0_53 = arith.constant 0 : index
    %c0_54 = arith.constant 0 : index
    %78 = vector.load %arg12[%c1_52, %c0_53, %c0_54] : memref<3x1x32xf32, #tpu.memory_space<vmem>>, vector<1x1x32xf32>
    %79 = vector.shape_cast %78 : vector<1x1x32xf32> to vector<1x32xf32>
    %80 = vector.broadcast %79 : vector<1x32xf32> to vector<16x32xf32>
    %81 = arith.addf %77, %80 : vector<16x32xf32>
    %82 = arith.addf %51, %81 : vector<16x32xf32>
    %83 = vector.extract_strided_slice %20 {offsets = [0, 0, 128], sizes = [2, 256, 32], strides = [1, 1, 1]} : vector<2x256x192xf32> to vector<2x256x32xf32>
    %84 = vector.extract_strided_slice %20 {offsets = [0, 0, 160], sizes = [2, 256, 32], strides = [1, 1, 1]} : vector<2x256x192xf32> to vector<2x256x32xf32>
    %c2 = arith.constant 2 : index
    %c0_55 = arith.constant 0 : index
    %c0_56 = arith.constant 0 : index
    %85 = vector.load %arg9[%c2, %c0_55, %c0_56] : memref<3x32x32xf32, #tpu.memory_space<vmem>>, vector<1x32x32xf32>
    %86 = vector.shape_cast %85 : vector<1x32x32xf32> to vector<32x32xf32>
    %cst_57 = arith.constant dense<0.000000e+00> : vector<16x32xf32>
    %87 = tpu.matmul %82, %86, %cst_57 {dimension_numbers = #tpu.dot_dimension_numbers<[1], [0], [0], [1], [0, 0, 1, 1], [], []>} : vector<16x32xf32>, vector<32x32xf32>, vector<16x32xf32> -> vector<16x32xf32>
    %c2_58 = arith.constant 2 : index
    %c0_59 = arith.constant 0 : index
    %c0_60 = arith.constant 0 : index
    %88 = vector.load %arg10[%c2_58, %c0_59, %c0_60] : memref<3x1x32xf32, #tpu.memory_space<vmem>>, vector<1x1x32xf32>
    %89 = vector.shape_cast %88 : vector<1x1x32xf32> to vector<1x32xf32>
    %90 = vector.broadcast %89 : vector<1x32xf32> to vector<16x32xf32>
    %91 = arith.addf %87, %90 : vector<16x32xf32>
    %92 = vector.shape_cast %91 : vector<16x32xf32> to vector<2x8x32xf32>
    "tpu.trace_start"() <{level = 10 : i32, message = "bqd,bkd->bqk"}> : () -> ()
    %cst_61 = arith.constant dense<0.000000e+00> : vector<2x8x256xf32>
    %93 = tpu.matmul %92, %83, %cst_61 {dimension_numbers = #tpu.dot_dimension_numbers<[2], [2], [1], [1], [0, 0, 0, 1, 1, 1], [0], [0]>} : vector<2x8x32xf32>, vector<2x256x32xf32>, vector<2x8x256xf32> -> vector<2x8x256xf32>
    "tpu.trace_stop"() : () -> ()
    %cst_62 = arith.constant dense<0xFF800000> : vector<2x8xf32>
    %94 = vector.multi_reduction <maximumf>, %93, %cst_62 [2] : vector<2x8x256xf32> to vector<2x8xf32>
    %95 = vector.shape_cast %94 : vector<2x8xf32> to vector<2x8x1xf32>
    %96 = vector.broadcast %95 : vector<2x8x1xf32> to vector<2x8x256xf32>
    %97 = arith.subf %93, %96 : vector<2x8x256xf32>
    %98 = math.exp %97 : vector<2x8x256xf32>
    %cst_63 = arith.constant dense<0.000000e+00> : vector<2x8xf32>
    %99 = vector.multi_reduction <add>, %98, %cst_63 [2] : vector<2x8x256xf32> to vector<2x8xf32>
    %100 = vector.shape_cast %99 : vector<2x8xf32> to vector<2x8x1xf32>
    %101 = tpu.reciprocal %100 {approx = true} : vector<2x8x1xf32> -> vector<2x8x1xf32>
    %102 = vector.broadcast %101 : vector<2x8x1xf32> to vector<2x8x256xf32>
    %103 = arith.mulf %98, %102 : vector<2x8x256xf32>
    "tpu.trace_start"() <{level = 10 : i32, message = "bqk,bkd->bqd"}> : () -> ()
    %cst_64 = arith.constant dense<0.000000e+00> : vector<2x8x32xf32>
    %104 = tpu.matmul %103, %84, %cst_64 {dimension_numbers = #tpu.dot_dimension_numbers<[2], [1], [1], [2], [0, 0, 0, 1, 1, 2], [0], [0]>} : vector<2x8x256xf32>, vector<2x256x32xf32>, vector<2x8x32xf32> -> vector<2x8x32xf32>
    "tpu.trace_stop"() : () -> ()
    %105 = vector.shape_cast %104 : vector<2x8x32xf32> to vector<16x32xf32>
    %c2_65 = arith.constant 2 : index
    %c0_66 = arith.constant 0 : index
    %c0_67 = arith.constant 0 : index
    %106 = vector.load %arg11[%c2_65, %c0_66, %c0_67] : memref<3x32x32xf32, #tpu.memory_space<vmem>>, vector<1x32x32xf32>
    %107 = vector.shape_cast %106 : vector<1x32x32xf32> to vector<32x32xf32>
    %cst_68 = arith.constant dense<0.000000e+00> : vector<16x32xf32>
    %108 = tpu.matmul %105, %107, %cst_68 {dimension_numbers = #tpu.dot_dimension_numbers<[1], [0], [0], [1], [0, 0, 1, 1], [], []>} : vector<16x32xf32>, vector<32x32xf32>, vector<16x32xf32> -> vector<16x32xf32>
    %c2_69 = arith.constant 2 : index
    %c0_70 = arith.constant 0 : index
    %c0_71 = arith.constant 0 : index
    %109 = vector.load %arg12[%c2_69, %c0_70, %c0_71] : memref<3x1x32xf32, #tpu.memory_space<vmem>>, vector<1x1x32xf32>
    %110 = vector.shape_cast %109 : vector<1x1x32xf32> to vector<1x32xf32>
    %111 = vector.broadcast %110 : vector<1x32xf32> to vector<16x32xf32>
    %112 = arith.addf %108, %111 : vector<16x32xf32>
    %113 = arith.addf %82, %112 : vector<16x32xf32>
    %c0_72 = arith.constant 0 : index
    %c0_73 = arith.constant 0 : index
    %114 = vector.load %arg13[%c0_72, %c0_73] : memref<32x32xf32, #tpu.memory_space<vmem>>, vector<32x32xf32>
    %cst_74 = arith.constant dense<0.000000e+00> : vector<16x32xf32>
    %115 = tpu.matmul %113, %114, %cst_74 {dimension_numbers = #tpu.dot_dimension_numbers<[1], [0], [0], [1], [0, 0, 1, 1], [], []>} : vector<16x32xf32>, vector<32x32xf32>, vector<16x32xf32> -> vector<16x32xf32>
    %c0_75 = arith.constant 0 : index
    %c0_76 = arith.constant 0 : index
    %116 = vector.load %arg14[%c0_75, %c0_76] : memref<1x32xf32, #tpu.memory_space<vmem>>, vector<1x32xf32>
    %117 = vector.broadcast %116 : vector<1x32xf32> to vector<16x32xf32>
    %118 = arith.addf %115, %117 : vector<16x32xf32>
    %cst_77 = arith.constant 0.000000e+00 : f32
    %119 = vector.broadcast %cst_77 : f32 to vector<16x32xf32>
    %120 = arith.maximumf %118, %119 : vector<16x32xf32>
    %c0_78 = arith.constant 0 : index
    %c0_79 = arith.constant 0 : index
    %121 = vector.load %arg15[%c0_78, %c0_79] : memref<32x32xf32, #tpu.memory_space<vmem>>, vector<32x32xf32>
    %cst_80 = arith.constant dense<0.000000e+00> : vector<16x32xf32>
    %122 = tpu.matmul %120, %121, %cst_80 {dimension_numbers = #tpu.dot_dimension_numbers<[1], [0], [0], [1], [0, 0, 1, 1], [], []>} : vector<16x32xf32>, vector<32x32xf32>, vector<16x32xf32> -> vector<16x32xf32>
    %c0_81 = arith.constant 0 : index
    %c0_82 = arith.constant 0 : index
    %123 = vector.load %arg16[%c0_81, %c0_82] : memref<1x32xf32, #tpu.memory_space<vmem>>, vector<1x32xf32>
    %124 = vector.broadcast %123 : vector<1x32xf32> to vector<16x32xf32>
    %125 = arith.addf %122, %124 : vector<16x32xf32>
    %cst_83 = arith.constant 0.000000e+00 : f32
    %126 = vector.broadcast %cst_83 : f32 to vector<16x32xf32>
    %127 = arith.maximumf %125, %126 : vector<16x32xf32>
    %c0_84 = arith.constant 0 : index
    %c0_85 = arith.constant 0 : index
    %128 = vector.load %arg17[%c0_84, %c0_85] : memref<32x128xf32, #tpu.memory_space<vmem>>, vector<32x128xf32>
    %cst_86 = arith.constant dense<0.000000e+00> : vector<16x128xf32>
    %129 = tpu.matmul %113, %128, %cst_86 {dimension_numbers = #tpu.dot_dimension_numbers<[1], [0], [0], [1], [0, 0, 1, 1], [], []>} : vector<16x32xf32>, vector<32x128xf32>, vector<16x128xf32> -> vector<16x128xf32>
    %c0_87 = arith.constant 0 : index
    %c0_88 = arith.constant 0 : index
    %130 = vector.load %arg18[%c0_87, %c0_88] : memref<32x128xf32, #tpu.memory_space<vmem>>, vector<32x128xf32>
    %cst_89 = arith.constant dense<0.000000e+00> : vector<16x128xf32>
    %131 = tpu.matmul %127, %130, %cst_89 {dimension_numbers = #tpu.dot_dimension_numbers<[1], [0], [0], [1], [0, 0, 1, 1], [], []>} : vector<16x32xf32>, vector<32x128xf32>, vector<16x128xf32> -> vector<16x128xf32>
    %132 = arith.addf %129, %131 : vector<16x128xf32>
    %c0_90 = arith.constant 0 : index
    %c0_91 = arith.constant 0 : index
    %133 = vector.load %arg19[%c0_90, %c0_91] : memref<1x128xf32, #tpu.memory_space<vmem>>, vector<1x128xf32>
    %134 = vector.broadcast %133 : vector<1x128xf32> to vector<16x128xf32>
    %135 = arith.addf %132, %134 : vector<16x128xf32>
    %136 = arith.negf %135 : vector<16x128xf32>
    %137 = math.exp %136 : vector<16x128xf32>
    %cst_92 = arith.constant 1.000000e+00 : f32
    %138 = vector.broadcast %cst_92 : f32 to vector<16x128xf32>
    %139 = arith.addf %138, %137 : vector<16x128xf32>
    %140 = arith.divf %138, %139 : vector<16x128xf32>
    %c0_93 = arith.constant 0 : index
    %c0_94 = arith.constant 0 : index
    %141 = vector.load %arg20[%c0_93, %c0_94] : memref<16x128xf32, #tpu.memory_space<vmem>>, vector<16x128xf32>
    tpu.vector_store %arg20[%c0_93, %c0_94], %140 {strides = array<i32>} : memref<16x128xf32, #tpu.memory_space<vmem>>, vector<16x128xf32>,
    return
  }
  func.func @transform_0(%arg0: i32) -> (i32, i32) {
    %c0_i32 = arith.constant 0 : i32
    %c0_i32_0 = arith.constant 0 : i32
    %c0_i32_1 = arith.constant 0 : i32
    return %c0_i32, %c0_i32_0 : i32, i32
  }
  func.func @transform_1(%arg0: i32) -> (i32, i32, i32) {
    %c0_i32 = arith.constant 0 : i32
    %c0_i32_0 = arith.constant 0 : i32
    %c0_i32_1 = arith.constant 0 : i32
    %c0_i32_2 = arith.constant 0 : i32
    return %c0_i32, %c0_i32_0, %c0_i32_1 : i32, i32, i32
  }
  func.func @transform_2(%arg0: i32) -> (i32, i32) {
    %c0_i32 = arith.constant 0 : i32
    %c0_i32_0 = arith.constant 0 : i32
    %c0_i32_1 = arith.constant 0 : i32
    return %c0_i32, %c0_i32_0 : i32, i32
  }
  func.func @transform_3(%arg0: i32) -> (i32, i32) {
    %c0_i32 = arith.constant 0 : i32
    %c0_i32_0 = arith.constant 0 : i32
    %c0_i32_1 = arith.constant 0 : i32
    return %c0_i32, %c0_i32_0 : i32, i32
  }
  func.func @transform_4(%arg0: i32) -> (i32, i32) {
    %c0_i32 = arith.constant 0 : i32
    %c0_i32_0 = arith.constant 0 : i32
    %c0_i32_1 = arith.constant 0 : i32
    return %c0_i32, %c0_i32_0 : i32, i32
  }
  func.func @transform_5(%arg0: i32) -> (i32, i32) {
    %c0_i32 = arith.constant 0 : i32
    %c0_i32_0 = arith.constant 0 : i32
    %c0_i32_1 = arith.constant 0 : i32
    return %c0_i32, %c0_i32_0 : i32, i32
  }
  func.func @transform_6(%arg0: i32) -> (i32, i32) {
    %c0_i32 = arith.constant 0 : i32
    %c0_i32_0 = arith.constant 0 : i32
    %c0_i32_1 = arith.constant 0 : i32
    return %c0_i32, %c0_i32_0 : i32, i32
  }
  func.func @transform_7(%arg0: i32) -> (i32, i32) {
    %c0_i32 = arith.constant 0 : i32
    %c0_i32_0 = arith.constant 0 : i32
    %c0_i32_1 = arith.constant 0 : i32
    return %c0_i32, %c0_i32_0 : i32, i32
  }
  func.func @transform_8(%arg0: i32) -> (i32, i32, i32) {
    %c0_i32 = arith.constant 0 : i32
    %c0_i32_0 = arith.constant 0 : i32
    %c0_i32_1 = arith.constant 0 : i32
    %c0_i32_2 = arith.constant 0 : i32
    return %c0_i32, %c0_i32_0, %c0_i32_1 : i32, i32, i32
  }
  func.func @transform_9(%arg0: i32) -> (i32, i32, i32) {
    %c0_i32 = arith.constant 0 : i32
    %c0_i32_0 = arith.constant 0 : i32
    %c0_i32_1 = arith.constant 0 : i32
    %c0_i32_2 = arith.constant 0 : i32
    return %c0_i32, %c0_i32_0, %c0_i32_1 : i32, i32, i32
  }
  func.func @transform_10(%arg0: i32) -> (i32, i32, i32) {
    %c0_i32 = arith.constant 0 : i32
    %c0_i32_0 = arith.constant 0 : i32
    %c0_i32_1 = arith.constant 0 : i32
    %c0_i32_2 = arith.constant 0 : i32
    return %c0_i32, %c0_i32_0, %c0_i32_1 : i32, i32, i32
  }
  func.func @transform_11(%arg0: i32) -> (i32, i32, i32) {
    %c0_i32 = arith.constant 0 : i32
    %c0_i32_0 = arith.constant 0 : i32
    %c0_i32_1 = arith.constant 0 : i32
    %c0_i32_2 = arith.constant 0 : i32
    return %c0_i32, %c0_i32_0, %c0_i32_1 : i32, i32, i32
  }
  func.func @transform_12(%arg0: i32) -> (i32, i32) {
    %c0_i32 = arith.constant 0 : i32
    %c0_i32_0 = arith.constant 0 : i32
    %c0_i32_1 = arith.constant 0 : i32
    return %c0_i32, %c0_i32_0 : i32, i32
  }
  func.func @transform_13(%arg0: i32) -> (i32, i32) {
    %c0_i32 = arith.constant 0 : i32
    %c0_i32_0 = arith.constant 0 : i32
    %c0_i32_1 = arith.constant 0 : i32
    return %c0_i32, %c0_i32_0 : i32, i32
  }
  func.func @transform_14(%arg0: i32) -> (i32, i32) {
    %c0_i32 = arith.constant 0 : i32
    %c0_i32_0 = arith.constant 0 : i32
    %c0_i32_1 = arith.constant 0 : i32
    return %c0_i32, %c0_i32_0 : i32, i32
  }
  func.func @transform_15(%arg0: i32) -> (i32, i32) {
    %c0_i32 = arith.constant 0 : i32
    %c0_i32_0 = arith.constant 0 : i32
    %c0_i32_1 = arith.constant 0 : i32
    return %c0_i32, %c0_i32_0 : i32, i32
  }
  func.func @transform_16(%arg0: i32) -> (i32, i32) {
    %c0_i32 = arith.constant 0 : i32
    %c0_i32_0 = arith.constant 0 : i32
    %c0_i32_1 = arith.constant 0 : i32
    return %c0_i32, %c0_i32_0 : i32, i32
  }
  func.func @transform_17(%arg0: i32) -> (i32, i32) {
    %c0_i32 = arith.constant 0 : i32
    %c0_i32_0 = arith.constant 0 : i32
    %c0_i32_1 = arith.constant 0 : i32
    return %c0_i32, %c0_i32_0 : i32, i32
  }
  func.func @transform_18(%arg0: i32) -> (i32, i32) {
    %c0_i32 = arith.constant 0 : i32
    %c0_i32_0 = arith.constant 0 : i32
    %c0_i32_1 = arith.constant 0 : i32
    return %c0_i32, %c0_i32_0 : i32, i32
  }
  func.func @transform_19(%arg0: i32) -> (i32, i32) {
    %c0_i32 = arith.constant 0 : i32
    %c0_i32_0 = arith.constant 0 : i32
    %c0_i32_1 = arith.constant 0 : i32
    return %c0_i32, %c0_i32_0 : i32, i32
  }
}

</mosaic_0001>

<llo_original>
// kernel: detr_forward.2
$region0: #{detr_forward.2}
  #allocation0 [shape = 'u32[]', space=smem, size = 0x4, offset = 0x4, fixed_abs, tag = 'smem constant byte address 0x4 - core index']
  #allocation1 [shape = 'u32[144,128]{1,0:T(1,128)}', space=vmem, size = 0x12000, scoped, tag = 'internal scratch']
  %s0 = inlined_call_operand.vmem [shape: f32[512,8], index: 0, kind: input, shape index: {}]
  %s1 = inlined_call_operand.vmem [shape: f32[512,32], index: 1, kind: input, shape index: {}]
  %s2 = inlined_call_operand.vmem [shape: f32[8,8], index: 2, kind: input, shape index: {}]
  %s3 = inlined_call_operand.vmem [shape: f32[1,8], index: 3, kind: input, shape index: {}]
  %s4 = inlined_call_operand.vmem [shape: f32[8,32], index: 4, kind: input, shape index: {}]
  %s5 = inlined_call_operand.vmem [shape: f32[1,32], index: 5, kind: input, shape index: {}]
  %s6 = inlined_call_operand.vmem [shape: f32[32,192], index: 6, kind: input, shape index: {}]
  %s7 = inlined_call_operand.vmem [shape: f32[1,192], index: 7, kind: input, shape index: {}]
  %s8 = inlined_call_operand.vmem [shape: f32[512,192], index: 8, kind: output, shape index: {}]
  %s9 = sld [smem:[#allocation0]]
  $region65: #{detr_forward.2} parent=0
    _
  %s11 = ssub.s32 1, %s9
  %s12 = scalar_select 0, %s11, %s9
  loop: start=0, step=1, limit=4
  $region2: #{detr_forward.2} parent=0 // loop_pre_header
    _
  $region3: #{detr_forward.2} parent=0 // loop_header
    %s14 = sphi 0, %s18
    %p15 = scmp.ge.s32.totalorder %s14, 4
    %s24 = sphi 0, %s26
    %s27 = sphi 0, %s24
    %s28 = sphi 0, %s27
    %s44 = sphi 0, %s28
    %s50 = sphi 0, %s52
    %s53 = sphi 0, %s50
    %s54 = sphi 0, %s53
    %s70 = sphi 0, %s54
    %s74 = sphi 0, %s74
    %s76 = sphi 0, %s74
    %s77 = sphi 0, %s76
    %s91 = sphi 0, %s77
    %s95 = sphi 0, %s95
    %s97 = sphi 0, %s95
    %s98 = sphi 0, %s97
    %s112 = sphi 0, %s98
    %s116 = sphi 0, %s116
    %s118 = sphi 0, %s116
    %s119 = sphi 0, %s118
    %s133 = sphi 0, %s119
    %s137 = sphi 0, %s137
    %s139 = sphi 0, %s137
    %s140 = sphi 0, %s139
    %s154 = sphi 0, %s140
    %s158 = sphi 0, %s158
    %s160 = sphi 0, %s158
    %s161 = sphi 0, %s160
    %s175 = sphi 0, %s161
    %s179 = sphi 0, %s179
    %s181 = sphi 0, %s179
    %s182 = sphi 0, %s181
    %s196 = sphi 0, %s182
    %s202 = sphi 0, %s204
    %s205 = sphi 0, %s202
    %s206 = sphi 0, %s205
    %s222 = sphi 0, %s206
  $region4: #{detr_forward.2} parent=0 // loop_header_branch
    %17 = sbr.rel (%p15) target = $region8
  $region5: #{detr_forward.2} parent=0 // loop_body
    %s19 = ssub.s32 %s14, 1
    %s20 = ssub.s32 %s14, 2
    %s21 = sadd.s32 %s14, 1
    %s22 = ssub.s32 %s14, %s21
    %p23 = scmp.eq.s32.totalorder %s22, 0
    %s25 = sadd.s32 %s24, 1
    %s26 = scalar_select %p23, %s24, %s25
    %p29 = pneg %p23
    %p30 = scmp.eq.s32.totalorder %s14, 1
    %p31 = por %p29, %p30
    %p32 = scmp.ne.s32.totalorder %s24, %s27
    %p33 = scmp.eq.s32.totalorder %s14, 0
    %p34 = por %p32, %p33
    %p35 = scmp.ne.s32.totalorder %s24, %s27
    %p36 = scmp.eq.s32.totalorder %s19, 1
    %p37 = por %p35, %p36
    %p38 = scmp.ne.s32.totalorder %s27, %s28
    %p39 = scmp.eq.s32.totalorder %s19, 0
    %p40 = por %p38, %p39
    %p41 = scmp.ne.s32.totalorder %s27, %s28
    %p42 = scmp.eq.s32.totalorder %s20, 1
    %p43 = por %p41, %p42
    %p45 = scmp.ne.s32.totalorder %s28, %s44
    %p46 = scmp.eq.s32.totalorder %s20, 0
    %p47 = por %p45, %p46
    %s48 = ssub.s32 %s14, %s21
    %p49 = scmp.eq.s32.totalorder %s48, 0
    %s51 = sadd.s32 %s50, 1
    %s52 = scalar_select %p49, %s50, %s51
    %p55 = pneg %p49
    %p56 = scmp.eq.s32.totalorder %s14, 1
    %p57 = por %p55, %p56
    %p58 = scmp.ne.s32.totalorder %s50, %s53
    %p59 = scmp.eq.s32.totalorder %s14, 0
    %p60 = por %p58, %p59
    %p61 = scmp.ne.s32.totalorder %s50, %s53
    %p62 = scmp.eq.s32.totalorder %s19, 1
    %p63 = por %p61, %p62
    %p64 = scmp.ne.s32.totalorder %s53, %s54
    %p65 = scmp.eq.s32.totalorder %s19, 0
    %p66 = por %p64, %p65
    %p67 = scmp.ne.s32.totalorder %s53, %s54
    %p68 = scmp.eq.s32.totalorder %s20, 1
    %p69 = por %p67, %p68
    %p71 = scmp.ne.s32.totalorder %s54, %s70
    %p72 = scmp.eq.s32.totalorder %s20, 0
    %p73 = por %p71, %p72
    %s75 = sadd.s32 %s74, 1
    %p78 = scmp.eq.s32.totalorder %s14, 1
    %p79 = scmp.ne.s32.totalorder %s74, %s76
    %p80 = scmp.eq.s32.totalorder %s14, 0
    %p81 = por %p79, %p80
    %p82 = scmp.ne.s32.totalorder %s74, %s76
    %p83 = scmp.eq.s32.totalorder %s19, 1
    %p84 = por %p82, %p83
    %p85 = scmp.ne.s32.totalorder %s76, %s77
    %p86 = scmp.eq.s32.totalorder %s19, 0
    %p87 = por %p85, %p86
    %p88 = scmp.ne.s32.totalorder %s76, %s77
    %p89 = scmp.eq.s32.totalorder %s20, 1
    %p90 = por %p88, %p89
    %p92 = scmp.ne.s32.totalorder %s77, %s91
    %p93 = scmp.eq.s32.totalorder %s20, 0
    %p94 = por %p92, %p93
    %s96 = sadd.s32 %s95, 1
    %p99 = scmp.eq.s32.totalorder %s14, 1
    %p100 = scmp.ne.s32.totalorder %s95, %s97
    %p101 = scmp.eq.s32.totalorder %s14, 0
    %p102 = por %p100, %p101
    %p103 = scmp.ne.s32.totalorder %s95, %s97
    %p104 = scmp.eq.s32.totalorder %s19, 1
    %p105 = por %p103, %p104
    %p106 = scmp.ne.s32.totalorder %s97, %s98
    %p107 = scmp.eq.s32.totalorder %s19, 0
    %p108 = por %p106, %p107
    %p109 = scmp.ne.s32.totalorder %s97, %s98
    %p110 = scmp.eq.s32.totalorder %s20, 1
    %p111 = por %p109, %p110
    %p113 = scmp.ne.s32.totalorder %s98, %s112
    %p114 = scmp.eq.s32.totalorder %s20, 0
    %p115 = por %p113, %p114
    %s117 = sadd.s32 %s116, 1
    %p120 = scmp.eq.s32.totalorder %s14, 1
    %p121 = scmp.ne.s32.totalorder %s116, %s118
    %p122 = scmp.eq.s32.totalorder %s14, 0
    %p123 = por %p121, %p122
    %p124 = scmp.ne.s32.totalorder %s116, %s118
    %p125 = scmp.eq.s32.totalorder %s19, 1
    %p126 = por %p124, %p125
    %p127 = scmp.ne.s32.totalorder %s118, %s119
    %p128 = scmp.eq.s32.totalorder %s19, 0
    %p129 = por %p127, %p128
    %p130 = scmp.ne.s32.totalorder %s118, %s119
    %p131 = scmp.eq.s32.totalorder %s20, 1
    %p132 = por %p130, %p131
    %p134 = scmp.ne.s32.totalorder %s119, %s133
    %p135 = scmp.eq.s32.totalorder %s20, 0
    %p136 = por %p134, %p135
    %s138 = sadd.s32 %s137, 1
    %p141 = scmp.eq.s32.totalorder %s14, 1
    %p142 = scmp.ne.s32.totalorder %s137, %s139
    %p143 = scmp.eq.s32.totalorder %s14, 0
    %p144 = por %p142, %p143
    %p145 = scmp.ne.s32.totalorder %s137, %s139
    %p146 = scmp.eq.s32.totalorder %s19, 1
    %p147 = por %p145, %p146
    %p148 = scmp.ne.s32.totalorder %s139, %s140
    %p149 = scmp.eq.s32.totalorder %s19, 0
    %p150 = por %p148, %p149
    %p151 = scmp.ne.s32.totalorder %s139, %s140
    %p152 = scmp.eq.s32.totalorder %s20, 1
    %p153 = por %p151, %p152
    %p155 = scmp.ne.s32.totalorder %s140, %s154
    %p156 = scmp.eq.s32.totalorder %s20, 0
    %p157 = por %p155, %p156
    %s159 = sadd.s32 %s158, 1
    %p162 = scmp.eq.s32.totalorder %s14, 1
    %p163 = scmp.ne.s32.totalorder %s158, %s160
    %p164 = scmp.eq.s32.totalorder %s14, 0
    %p165 = por %p163, %p164
    %p166 = scmp.ne.s32.totalorder %s158, %s160
    %p167 = scmp.eq.s32.totalorder %s19, 1
    %p168 = por %p166, %p167
    %p169 = scmp.ne.s32.totalorder %s160, %s161
    %p170 = scmp.eq.s32.totalorder %s19, 0
    %p171 = por %p169, %p170
    %p172 = scmp.ne.s32.totalorder %s160, %s161
    %p173 = scmp.eq.s32.totalorder %s20, 1
    %p174 = por %p172, %p173
    %p176 = scmp.ne.s32.totalorder %s161, %s175
    %p177 = scmp.eq.s32.totalorder %s20, 0
    %p178 = por %p176, %p177
    %s180 = sadd.s32 %s179, 1
    %p183 = scmp.eq.s32.totalorder %s14, 1
    %p184 = scmp.ne.s32.totalorder %s179, %s181
    %p185 = scmp.eq.s32.totalorder %s14, 0
    %p186 = por %p184, %p185
    %p187 = scmp.ne.s32.totalorder %s179, %s181
    %p188 = scmp.eq.s32.totalorder %s19, 1
    %p189 = por %p187, %p188
    %p190 = scmp.ne.s32.totalorder %s181, %s182
    %p191 = scmp.eq.s32.totalorder %s19, 0
    %p192 = por %p190, %p191
    %p193 = scmp.ne.s32.totalorder %s181, %s182
    %p194 = scmp.eq.s32.totalorder %s20, 1
    %p195 = por %p193, %p194
    %p197 = scmp.ne.s32.totalorder %s182, %s196
    %p198 = scmp.eq.s32.totalorder %s20, 0
    %p199 = por %p197, %p198
    %s200 = ssub.s32 %s14, %s21
    %p201 = scmp.eq.s32.totalorder %s200, 0
    %s203 = sadd.s32 %s202, 1
    %s204 = scalar_select %p201, %s202, %s203
    %p207 = pneg %p201
    %p208 = scmp.eq.s32.totalorder %s14, 1
    %p209 = por %p207, %p208
    %p210 = scmp.ne.s32.totalorder %s202, %s205
    %p211 = scmp.eq.s32.totalorder %s14, 0
    %p212 = por %p210, %p211
    %p213 = scmp.ne.s32.totalorder %s202, %s205
    %p214 = scmp.eq.s32.totalorder %s19, 1
    %p215 = por %p213, %p214
    %p216 = scmp.ne.s32.totalorder %s205, %s206
    %p217 = scmp.eq.s32.totalorder %s19, 0
    %p218 = por %p216, %p217
    %p219 = scmp.ne.s32.totalorder %s205, %s206
    %p220 = scmp.eq.s32.totalorder %s20, 1
    %p221 = por %p219, %p220
    %p223 = scmp.ne.s32.totalorder %s206, %s222
    %p224 = scmp.eq.s32.totalorder %s20, 0
    %p225 = por %p223, %p224
    %p226 = scmp.le.s32.totalorder 1, %s14
    %p227 = scmp.lt.s32.totalorder %s14, 3
    %p228 = pnand %p226, %p227
    %p229 = pneg %p228
    // Predicated region
    $region9: #{detr_forward.2} parent=5 // pred_check
      _
    $region10: #{detr_forward.2} parent=5 // pred_check_branch
      %231 = sbr.rel (%p228) target = $region12
    $region11: #{detr_forward.2} parent=5 // pred_region
      %s232 = ssub.s32 %s14, 1
      // Predicated region
      $region13: #{detr_forward.2} parent=11 // pred_check
        %p233 = pneg %p87
      $region14: #{detr_forward.2} parent=11 // pred_check_branch
        %235 = sbr.rel (%p233) target = $region16
      $region15: #{detr_forward.2} parent=11 // pred_region
        _
      $region16: #{detr_forward.2} parent=11 // pred_fallthru
        _
      // Predicated region
      $region17: #{detr_forward.2} parent=11 // pred_check
        %p236 = pneg %p108
      $region18: #{detr_forward.2} parent=11 // pred_check_branch
        %238 = sbr.rel (%p236) target = $region20
      $region19: #{detr_forward.2} parent=11 // pred_region
        _
      $region20: #{detr_forward.2} parent=11 // pred_fallthru
        _
      // Predicated region
      $region21: #{detr_forward.2} parent=11 // pred_check
        %p239 = pneg %p129
      $region22: #{detr_forward.2} parent=11 // pred_check_branch
        %241 = sbr.rel (%p239) target = $region24
      $region23: #{detr_forward.2} parent=11 // pred_region
        _
      $region24: #{detr_forward.2} parent=11 // pred_fallthru
        _
      // Predicated region
      $region25: #{detr_forward.2} parent=11 // pred_check
        %p242 = pneg %p150
      $region26: #{detr_forward.2} parent=11 // pred_check_branch
        %244 = sbr.rel (%p242) target = $region28
      $region27: #{detr_forward.2} parent=11 // pred_region
        _
      $region28: #{detr_forward.2} parent=11 // pred_fallthru
        _
      // Predicated region
      $region29: #{detr_forward.2} parent=11 // pred_check
        %p245 = pneg %p171
      $region30: #{detr_forward.2} parent=11 // pred_check_branch
        %247 = sbr.rel (%p245) target = $region32
      $region31: #{detr_forward.2} parent=11 // pred_region
        _
      $region32: #{detr_forward.2} parent=11 // pred_fallthru
        _
      // Predicated region
      $region33: #{detr_forward.2} parent=11 // pred_check
        %p248 = pneg %p192
      $region34: #{detr_forward.2} parent=11 // pred_check_branch
        %250 = sbr.rel (%p248) target = $region36
      $region35: #{detr_forward.2} parent=11 // pred_region
        _
      $region36: #{detr_forward.2} parent=11 // pred_fallthru
        _
    $region12: #{detr_forward.2} parent=5 // pred_fallthru
      _
    %p251 = scmp.lt.s32.totalorder %s14, 2
    // Predicated region
    $region37: #{detr_forward.2} parent=5 // pred_check
      %p252 = pneg %p251
    $region38: #{detr_forward.2} parent=5 // pred_check_branch
      %254 = sbr.rel (%p252) target = $region40
    $region39: #{detr_forward.2} parent=5 // pred_region
      // Predicated region
      $region41: #{detr_forward.2} parent=39 // pred_check
        %p255 = pneg %p34
      $region42: #{detr_forward.2} parent=39 // pred_check_branch
        %257 = sbr.rel (%p255) target = $region44
      $region43: #{detr_forward.2} parent=39 // pred_region
        %s258 = smul.u32 32, %s14
        %p259 = scmp.lt.s32.totalorder %s258, 63
        %s260 = scalar_select %p259, %s258, 63
        %s261 = smul.addr %s260, 8
        %s262 = scalar_lea.vmem %s0, %s261
        %s263 = smul.u32 32, %s14
      $region44: #{detr_forward.2} parent=39 // pred_fallthru
        _
      // Predicated region
      $region45: #{detr_forward.2} parent=39 // pred_check
        %p264 = pneg %p60
      $region46: #{detr_forward.2} parent=39 // pred_check_branch
        %266 = sbr.rel (%p264) target = $region48
      $region47: #{detr_forward.2} parent=39 // pred_region
        %s267 = smul.u32 32, %s14
        %p268 = scmp.lt.s32.totalorder %s267, 63
        %s269 = scalar_select %p268, %s267, 63
        %s270 = smul.addr %s269, 8
        %s271 = scalar_lea.vmem %s1, %s270
        %s272 = smul.u32 32, %s14
      $region48: #{detr_forward.2} parent=39 // pred_fallthru
        _
    $region40: #{detr_forward.2} parent=5 // pred_fallthru
      _
    %p273 = scmp.le.s32.totalorder 1, %s14
    %p274 = scmp.lt.s32.totalorder %s14, 3
    %p275 = pnand %p273, %p274
    %p276 = pneg %p275
    // Predicated region
    $region49: #{detr_forward.2} parent=5 // pred_check
      _
    $region50: #{detr_forward.2} parent=5 // pred_check_branch
      %278 = sbr.rel (%p275) target = $region52
    $region51: #{detr_forward.2} parent=5 // pred_region
      %s279 = ssub.s32 %s14, 1
      %s280 = smul.u32 32, %s19
      %p281 = scmp.lt.s32.totalorder %s280, 63
      %s282 = scalar_select %p281, %s280, 63
      %s283 = smul.addr %s282, 8
      %s284 = scalar_lea.vmem %s0, %s283
      %p285 = pneg %p40
      %p286 = pneg %p37
      %s287 = smul.u32 32, %s19
      %p288 = scmp.lt.s32.totalorder %s287, 63
      %s289 = scalar_select %p288, %s287, 63
      %s290 = smul.addr %s289, 8
      %s291 = scalar_lea.vmem %s1, %s290
      %p292 = pneg %p66
      %p293 = pneg %p63
      %p294 = pneg %p87
      %p295 = pneg %p84
      %p296 = pneg %p108
      %p297 = pneg %p105
      %p298 = pneg %p129
      %p299 = pneg %p126
      %p300 = pneg %p150
      %p301 = pneg %p147
      %p302 = pneg %p171
      %p303 = pneg %p168
      %p304 = pneg %p192
      %p305 = pneg %p189
      %p306 = pneg %p218
      %p307 = pneg %p215
      %s308 = smul.u32 32, %s19
      %p309 = scmp.lt.s32.totalorder %s308, 63
      %s310 = scalar_select %p309, %s308, 63
      %s311 = smul.addr %s310, 2
      %s312 = smul.addr %s311, 8
      %s313 = scalar_lea.vmem %s8, %s312
      %s314 = smul.u32 32, %s19
      %p315 = scmp.lt.s32.totalorder %s314, 63
      %s316 = scalar_select %p315, %s314, 63
      %s317 = smul.addr %s316, 8
      %s318 = scalar_lea.vmem %s0, %s317
      %s319 = smul.u32 32, %s19
      %s320 = smul.u32 32, %s19
      %p321 = scmp.lt.s32.totalorder %s320, 63
      %s322 = scalar_select %p321, %s320, 63
      %s323 = smul.addr %s322, 8
      %s324 = scalar_lea.vmem %s1, %s323
      %s325 = smul.u32 32, %s19
      %s326 = smul.u32 32, %s19
      %p327 = scmp.lt.s32.totalorder %s326, 63
      %s328 = scalar_select %p327, %s326, 63
      %s329 = smul.addr %s328, 2
      %s330 = smul.addr %s329, 8
      %s331 = scalar_lea.vmem %s8, %s330
      %s332 = smul.u32 32, %s19
      %v334 = vld [vmem:[%s318] sm:$0xff]
      %v335 = vld [vmem:[%s318 + $0x8] sm:$0xff]
      %v336 = vld [vmem:[%s318 + $0x10] sm:$0xff]
      %v337 = vld [vmem:[%s318 + $0x18] sm:$0xff]
      %v338 = vld [vmem:[%s318 + $0x20] sm:$0xff]
      %v339 = vld [vmem:[%s318 + $0x28] sm:$0xff]
      %v340 = vld [vmem:[%s318 + $0x30] sm:$0xff]
      %v341 = vld [vmem:[%s318 + $0x38] sm:$0xff]
      %v342 = vld [vmem:[%s318 + $0x40] sm:$0xff]
      %v343 = vld [vmem:[%s318 + $0x48] sm:$0xff]
      %v344 = vld [vmem:[%s318 + $0x50] sm:$0xff]
      %v345 = vld [vmem:[%s318 + $0x58] sm:$0xff]
      %v346 = vld [vmem:[%s318 + $0x60] sm:$0xff]
      %v347 = vld [vmem:[%s318 + $0x68] sm:$0xff]
      %v348 = vld [vmem:[%s318 + $0x70] sm:$0xff]
      %v349 = vld [vmem:[%s318 + $0x78] sm:$0xff]
      %v350 = vld [vmem:[%s318 + $0x80] sm:$0xff]
      %v351 = vld [vmem:[%s318 + $0x88] sm:$0xff]
      %v352 = vld [vmem:[%s318 + $0x90] sm:$0xff]
      %v353 = vld [vmem:[%s318 + $0x98] sm:$0xff]
      %v354 = vld [vmem:[%s318 + $0xa0] sm:$0xff]
      %v355 = vld [vmem:[%s318 + $0xa8] sm:$0xff]
      %v356 = vld [vmem:[%s318 + $0xb0] sm:$0xff]
      %v357 = vld [vmem:[%s318 + $0xb8] sm:$0xff]
      %v358 = vld [vmem:[%s318 + $0xc0] sm:$0xff]
      %v359 = vld [vmem:[%s318 + $0xc8] sm:$0xff]
      %v360 = vld [vmem:[%s318 + $0xd0] sm:$0xff]
      %v361 = vld [vmem:[%s318 + $0xd8] sm:$0xff]
      %v362 = vld [vmem:[%s318 + $0xe0] sm:$0xff]
      %v363 = vld [vmem:[%s318 + $0xe8] sm:$0xff]
      %v364 = vld [vmem:[%s318 + $0xf0] sm:$0xff]
      %v365 = vld [vmem:[%s318 + $0xf8] sm:$0xff]
      %v366 = vpack.c.bf16 %v335, %v334
      %v367 = vpack.c.bf16 %v337, %v336
      %v368 = vpack.c.bf16 %v339, %v338
      %v369 = vpack.c.bf16 %v341, %v340
      %v370 = vpack.c.bf16 %v343, %v342
      %v371 = vpack.c.bf16 %v345, %v344
      %v372 = vpack.c.bf16 %v347, %v346
      %v373 = vpack.c.bf16 %v349, %v348
      %v374 = vpack.c.bf16 %v351, %v350
      %v375 = vpack.c.bf16 %v353, %v352
      %v376 = vpack.c.bf16 %v355, %v354
      %v377 = vpack.c.bf16 %v357, %v356
      %v378 = vpack.c.bf16 %v359, %v358
      %v379 = vpack.c.bf16 %v361, %v360
      %v380 = vpack.c.bf16 %v363, %v362
      %v381 = vpack.c.bf16 %v365, %v364
      %v382 = vld [vmem:[%s2] sm:$0xff]
      %v383 = vpack.c.bf16 %v382, %v382
      %v384 = vld [vmem:[%s3] sm:$0x1]
      %v386 = vlaneseq
      %v387 = vshrl.u32 %v386, 7
      %v388 = vsub.s32 0, %v387
      %v389 = vrot.slane %v384, %v388
      %vm391 = vcmask 64512
      %v393 = vsel %vm391, %v366, 0
      %v396 = vsel %vm391, %v367, 0
      %v399 = vsel %vm391, %v368, 0
      %v402 = vsel %vm391, %v369, 0
      %v405 = vsel %vm391, %v370, 0
      %v408 = vsel %vm391, %v371, 0
      %v411 = vsel %vm391, %v372, 0
      %v414 = vsel %vm391, %v373, 0
      %v417 = vsel %vm391, %v374, 0
      %v420 = vsel %vm391, %v375, 0
      %v423 = vsel %vm391, %v376, 0
      %v426 = vsel %vm391, %v377, 0
      %v429 = vsel %vm391, %v378, 0
      %v432 = vsel %vm391, %v379, 0
      %v435 = vsel %vm391, %v380, 0
      %v438 = vsel %vm391, %v381, 0
      %vm440 = vcmask 1043456
      %v442 = vsel %vm440, %v383, 0
      %444 = vmatprep.subr.bf16.mxu0 0
      %445 = vmatpush1.bf16.msra.mxu0 %v442
      %446 = vmatprep.subr.bf16.mxu0 0
      %447 = vmatpush1.bf16.msra.mxu0 0
      %448 = vmatprep.subr.bf16.mxu0 0
      %449 = vmatpush1.bf16.msra.mxu0 0
      %450 = vmatprep.subr.bf16.mxu0 0
      %451 = vmatpush1.bf16.msra.mxu0 0
      %452 = vmatprep.subr.bf16.mxu0 0
      %453 = vmatpush1.bf16.msra.mxu0 0
      %454 = vmatprep.subr.bf16.mxu0 0
      %455 = vmatpush1.bf16.msra.mxu0 0
      %456 = vmatprep.subr.bf16.mxu0 0
      %457 = vmatpush1.bf16.msra.mxu0 0
      %458 = vmatprep.subr.bf16.mxu0 0
      %459 = vmatpush1.bf16.msra.mxu0 0
      %460 = vmatprep.subr.bf16.mxu0 0
      %461 = vmatpush1.bf16.msra.mxu0 0
      %462 = vmatprep.subr.bf16.mxu0 0
      %463 = vmatpush1.bf16.msra.mxu0 0
      %464 = vmatprep.subr.bf16.mxu0 0
      %465 = vmatpush1.bf16.msra.mxu0 0
      %466 = vmatprep.subr.bf16.mxu0 0
      %467 = vmatpush1.bf16.msra.mxu0 0
      %468 = vmatprep.subr.bf16.mxu0 0
      %469 = vmatpush1.bf16.msra.mxu0 0
      %470 = vmatprep.subr.bf16.mxu0 0
      %471 = vmatpush1.bf16.msra.mxu0 0
      %472 = vmatprep.subr.bf16.mxu0 0
      %473 = vmatpush1.bf16.msra.mxu0 0
      %474 = vmatprep.subr.bf16.mxu0 0
      %475 = vmatpush1.bf16.msra.mxu0 0
      %476 = vmatprep.mubr.bf16.mxu0 0
      %477 = vmatmul.mubr.bf16.gmra.mrb[0].mxu0 %v393
      %v478 = vpop.f32.mrb[0].mxu0
      %v479 = vadd.f32 %v389, %v478
      %v480 = vpop.f32.mrb[0].mxu0
      %v481 = vpop.f32.mrb[0].mxu0
      %v482 = vadd.f32 %v389, %v481
      %v483 = vpop.f32.mrb[0].mxu0
      %484 = vmatprep.mubr.bf16.mxu0 0
      %485 = vmatmul.mubr.bf16.gmra.mrb[0].mxu0 %v396
      %v486 = vpop.f32.mrb[0].mxu0
      %v487 = vadd.f32 %v389, %v486
      %v488 = vpop.f32.mrb[0].mxu0
      %v489 = vpop.f32.mrb[0].mxu0
      %v490 = vadd.f32 %v389, %v489
      %v491 = vpop.f32.mrb[0].mxu0
      %492 = vmatprep.mubr.bf16.mxu0 0
      %493 = vmatmul.mubr.bf16.gmra.mrb[0].mxu0 %v399
      %v494 = vpop.f32.mrb[0].mxu0
      %v495 = vadd.f32 %v389, %v494
      %v496 = vpop.f32.mrb[0].mxu0
      %v497 = vpop.f32.mrb[0].mxu0
      %v498 = vadd.f32 %v389, %v497
      %v499 = vpop.f32.mrb[0].mxu0
      %500 = vmatprep.mubr.bf16.mxu0 0
      %501 = vmatmul.mubr.bf16.gmra.mrb[0].mxu0 %v402
      %v502 = vpop.f32.mrb[0].mxu0
      %v503 = vadd.f32 %v389, %v502
      %v504 = vpop.f32.mrb[0].mxu0
      %v505 = vpop.f32.mrb[0].mxu0
      %v506 = vadd.f32 %v389, %v505
      %v507 = vpop.f32.mrb[0].mxu0
      %508 = vmatprep.mubr.bf16.mxu0 0
      %509 = vmatmul.mubr.bf16.gmra.mrb[0].mxu0 %v405
      %v510 = vpop.f32.mrb[0].mxu0
      %v511 = vadd.f32 %v389, %v510
      %v512 = vpop.f32.mrb[0].mxu0
      %v513 = vpop.f32.mrb[0].mxu0
      %v514 = vadd.f32 %v389, %v513
      %v515 = vpop.f32.mrb[0].mxu0
      %516 = vmatprep.mubr.bf16.mxu0 0
      %517 = vmatmul.mubr.bf16.gmra.mrb[0].mxu0 %v408
      %v518 = vpop.f32.mrb[0].mxu0
      %v519 = vadd.f32 %v389, %v518
      %v520 = vpop.f32.mrb[0].mxu0
      %v521 = vpop.f32.mrb[0].mxu0
      %v522 = vadd.f32 %v389, %v521
      %v523 = vpop.f32.mrb[0].mxu0
      %524 = vmatprep.mubr.bf16.mxu0 0
      %525 = vmatmul.mubr.bf16.gmra.mrb[0].mxu0 %v411
      %v526 = vpop.f32.mrb[0].mxu0
      %v527 = vadd.f32 %v389, %v526
      %v528 = vpop.f32.mrb[0].mxu0
      %v529 = vpop.f32.mrb[0].mxu0
      %v530 = vadd.f32 %v389, %v529
      %v531 = vpop.f32.mrb[0].mxu0
      %532 = vmatprep.mubr.bf16.mxu0 0
      %533 = vmatmul.mubr.bf16.gmra.mrb[0].mxu0 %v414
      %v534 = vpop.f32.mrb[0].mxu0
      %v535 = vadd.f32 %v389, %v534
      %v536 = vpop.f32.mrb[0].mxu0
      %v537 = vpop.f32.mrb[0].mxu0
      %v538 = vadd.f32 %v389, %v537
      %v539 = vpop.f32.mrb[0].mxu0
      %540 = vmatprep.mubr.bf16.mxu0 0
      %541 = vmatmul.mubr.bf16.gmra.mrb[0].mxu0 %v417
      %v542 = vpop.f32.mrb[0].mxu0
      %v543 = vadd.f32 %v389, %v542
      %v544 = vpop.f32.mrb[0].mxu0
      %v545 = vpop.f32.mrb[0].mxu0
      %v546 = vadd.f32 %v389, %v545
      %v547 = vpop.f32.mrb[0].mxu0
      %548 = vmatprep.mubr.bf16.mxu0 0
      %549 = vmatmul.mubr.bf16.gmra.mrb[0].mxu0 %v420
      %v550 = vpop.f32.mrb[0].mxu0
      %v551 = vadd.f32 %v389, %v550
      %v552 = vpop.f32.mrb[0].mxu0
      %v553 = vpop.f32.mrb[0].mxu0
      %v554 = vadd.f32 %v389, %v553
      %v555 = vpop.f32.mrb[0].mxu0
      %556 = vmatprep.mubr.bf16.mxu0 0
      %557 = vmatmul.mubr.bf16.gmra.mrb[0].mxu0 %v423
      %v558 = vpop.f32.mrb[0].mxu0
      %v559 = vadd.f32 %v389, %v558
      %v560 = vpop.f32.mrb[0].mxu0
      %v561 = vpop.f32.mrb[0].mxu0
      %v562 = vadd.f32 %v389, %v561
      %v563 = vpop.f32.mrb[0].mxu0
      %564 = vmatprep.mubr.bf16.mxu0 0
      %565 = vmatmul.mubr.bf16.gmra.mrb[0].mxu0 %v426
      %v566 = vpop.f32.mrb[0].mxu0
      %v567 = vadd.f32 %v389, %v566
      %v568 = vpop.f32.mrb[0].mxu0
      %v569 = vpop.f32.mrb[0].mxu0
      %v570 = vadd.f32 %v389, %v569
      %v571 = vpop.f32.mrb[0].mxu0
      %572 = vmatprep.mubr.bf16.mxu0 0
      %573 = vmatmul.mubr.bf16.gmra.mrb[0].mxu0 %v429
      %v574 = vpop.f32.mrb[0].mxu0
      %v575 = vadd.f32 %v389, %v574
      %v576 = vpop.f32.mrb[0].mxu0
      %v577 = vpop.f32.mrb[0].mxu0
      %v578 = vadd.f32 %v389, %v577
      %v579 = vpop.f32.mrb[0].mxu0
      %580 = vmatprep.mubr.bf16.mxu0 0
      %581 = vmatmul.mubr.bf16.gmra.mrb[0].mxu0 %v432
      %v582 = vpop.f32.mrb[0].mxu0
      %v583 = vadd.f32 %v389, %v582
      %v584 = vpop.f32.mrb[0].mxu0
      %v585 = vpop.f32.mrb[0].mxu0
      %v586 = vadd.f32 %v389, %v585
      %v587 = vpop.f32.mrb[0].mxu0
      %588 = vmatprep.mubr.bf16.mxu0 0
      %589 = vmatmul.mubr.bf16.gmra.mrb[0].mxu0 %v435
      %v590 = vpop.f32.mrb[0].mxu0
      %v591 = vadd.f32 %v389, %v590
      %v592 = vpop.f32.mrb[0].mxu0
      %v593 = vpop.f32.mrb[0].mxu0
      %v594 = vadd.f32 %v389, %v593
      %v595 = vpop.f32.mrb[0].mxu0
      %596 = vmatprep.mubr.bf16.mxu0 0
      %597 = vmatmul.mubr.bf16.gmra.mrb[0].mxu0 %v438
      %v598 = vpop.f32.mrb[0].mxu0
      %v599 = vadd.f32 %v389, %v598
      %v600 = vpop.f32.mrb[0].mxu0
      %v601 = vpop.f32.mrb[0].mxu0
      %v602 = vadd.f32 %v389, %v601
      %v603 = vpop.f32.mrb[0].mxu0
      %604 = vdwg.mxu0
      %v605 = vmax.f32 %v479, 0.0
      %v606 = vmax.f32 %v482, 0.0
      %v607 = vmax.f32 %v487, 0.0
      %v608 = vmax.f32 %v490, 0.0
      %v609 = vmax.f32 %v495, 0.0
      %v610 = vmax.f32 %v498, 0.0
      %v611 = vmax.f32 %v503, 0.0
      %v612 = vmax.f32 %v506, 0.0
      %v613 = vmax.f32 %v511, 0.0
      %v614 = vmax.f32 %v514, 0.0
      %v615 = vmax.f32 %v519, 0.0
      %v616 = vmax.f32 %v522, 0.0
      %v617 = vmax.f32 %v527, 0.0
      %v618 = vmax.f32 %v530, 0.0
      %v619 = vmax.f32 %v535, 0.0
      %v620 = vmax.f32 %v538, 0.0
      %v621 = vmax.f32 %v543, 0.0
      %v622 = vmax.f32 %v546, 0.0
      %v623 = vmax.f32 %v551, 0.0
      %v624 = vmax.f32 %v554, 0.0
      %v625 = vmax.f32 %v559, 0.0
      %v626 = vmax.f32 %v562, 0.0
      %v627 = vmax.f32 %v567, 0.0
      %v628 = vmax.f32 %v570, 0.0
      %v629 = vmax.f32 %v575, 0.0
      %v630 = vmax.f32 %v578, 0.0
      %v631 = vmax.f32 %v583, 0.0
      %v632 = vmax.f32 %v586, 0.0
      %v633 = vmax.f32 %v591, 0.0
      %v634 = vmax.f32 %v594, 0.0
      %v635 = vmax.f32 %v599, 0.0
      %v636 = vmax.f32 %v602, 0.0
      %v637 = vpack.c.bf16 %v606, %v605
      %v638 = vpack.c.bf16 %v608, %v607
      %v639 = vpack.c.bf16 %v610, %v609
      %v640 = vpack.c.bf16 %v612, %v611
      %v641 = vpack.c.bf16 %v614, %v613
      %v642 = vpack.c.bf16 %v616, %v615
      %v643 = vpack.c.bf16 %v618, %v617
      %v644 = vpack.c.bf16 %v620, %v619
      %v645 = vpack.c.bf16 %v622, %v621
      %v646 = vpack.c.bf16 %v624, %v623
      %v647 = vpack.c.bf16 %v626, %v625
      %v648 = vpack.c.bf16 %v628, %v627
      %v649 = vpack.c.bf16 %v630, %v629
      %v650 = vpack.c.bf16 %v632, %v631
      %v651 = vpack.c.bf16 %v634, %v633
      %v652 = vpack.c.bf16 %v636, %v635
      %v653 = vld [vmem:[%s4] sm:$0xff]
      %v654 = vpack.c.bf16 %v653, %v653
      %v655 = vld [vmem:[%s5] sm:$0x1]
      %v657 = vlaneseq
      %v658 = vshrl.u32 %v657, 7
      %v659 = vsub.s32 0, %v658
      %v660 = vrot.slane %v655, %v659
      %v663 = vsel %vm391, %v637, 0
      %v666 = vsel %vm391, %v638, 0
      %v669 = vsel %vm391, %v639, 0
      %v672 = vsel %vm391, %v640, 0
      %v675 = vsel %vm391, %v641, 0
      %v678 = vsel %vm391, %v642, 0
      %v681 = vsel %vm391, %v643, 0
      %v684 = vsel %vm391, %v644, 0
      %v687 = vsel %vm391, %v645, 0
      %v690 = vsel %vm391, %v646, 0
      %v693 = vsel %vm391, %v647, 0
      %v696 = vsel %vm391, %v648, 0
      %v699 = vsel %vm391, %v649, 0
      %v702 = vsel %vm391, %v650, 0
      %v705 = vsel %vm391, %v651, 0
      %v708 = vsel %vm391, %v652, 0
      %v711 = vsel %vm440, %v654, 0
      %713 = vmatprep.subr.bf16.mxu0 0
      %714 = vmatpush1.bf16.msra.mxu0 %v711
      %715 = vmatprep.subr.bf16.mxu0 0
      %716 = vmatpush1.bf16.msra.mxu0 0
      %717 = vmatprep.subr.bf16.mxu0 0
      %718 = vmatpush1.bf16.msra.mxu0 0
      %719 = vmatprep.subr.bf16.mxu0 0
      %720 = vmatpush1.bf16.msra.mxu0 0
      %721 = vmatprep.subr.bf16.mxu0 0
      %722 = vmatpush1.bf16.msra.mxu0 0
      %723 = vmatprep.subr.bf16.mxu0 0
      %724 = vmatpush1.bf16.msra.mxu0 0
      %725 = vmatprep.subr.bf16.mxu0 0
      %726 = vmatpush1.bf16.msra.mxu0 0
      %727 = vmatprep.subr.bf16.mxu0 0
      %728 = vmatpush1.bf16.msra.mxu0 0
      %729 = vmatprep.subr.bf16.mxu0 0
      %730 = vmatpush1.bf16.msra.mxu0 0
      %731 = vmatprep.subr.bf16.mxu0 0
      %732 = vmatpush1.bf16.msra.mxu0 0
      %733 = vmatprep.subr.bf16.mxu0 0
      %734 = vmatpush1.bf16.msra.mxu0 0
      %735 = vmatprep.subr.bf16.mxu0 0
      %736 = vmatpush1.bf16.msra.mxu0 0
      %737 = vmatprep.subr.bf16.mxu0 0
      %738 = vmatpush1.bf16.msra.mxu0 0
      %739 = vmatprep.subr.bf16.mxu0 0
      %740 = vmatpush1.bf16.msra.mxu0 0
      %741 = vmatprep.subr.bf16.mxu0 0
      %742 = vmatpush1.bf16.msra.mxu0 0
      %743 = vmatprep.subr.bf16.mxu0 0
      %744 = vmatpush1.bf16.msra.mxu0 0
      %745 = vmatprep.mubr.bf16.mxu0 0
      %746 = vmatmul.mubr.bf16.gmra.mrb[0].mxu0 %v663
      %v747 = vpop.f32.mrb[0].mxu0
      %v748 = vadd.f32 %v660, %v747
      %v749 = vpop.f32.mrb[0].mxu0
      %v750 = vpop.f32.mrb[0].mxu0
      %v751 = vadd.f32 %v660, %v750
      %v752 = vpop.f32.mrb[0].mxu0
      %753 = vmatprep.mubr.bf16.mxu0 0
      %754 = vmatmul.mubr.bf16.gmra.mrb[0].mxu0 %v666
      %v755 = vpop.f32.mrb[0].mxu0
      %v756 = vadd.f32 %v660, %v755
      %v757 = vpop.f32.mrb[0].mxu0
      %v758 = vpop.f32.mrb[0].mxu0
      %v759 = vadd.f32 %v660, %v758
      %v760 = vpop.f32.mrb[0].mxu0
      %761 = vmatprep.mubr.bf16.mxu0 0
      %762 = vmatmul.mubr.bf16.gmra.mrb[0].mxu0 %v669
      %v763 = vpop.f32.mrb[0].mxu0
      %v764 = vadd.f32 %v660, %v763
      %v765 = vpop.f32.mrb[0].mxu0
      %v766 = vpop.f32.mrb[0].mxu0
      %v767 = vadd.f32 %v660, %v766
      %v768 = vpop.f32.mrb[0].mxu0
      %769 = vmatprep.mubr.bf16.mxu0 0
      %770 = vmatmul.mubr.bf16.gmra.mrb[0].mxu0 %v672
      %v771 = vpop.f32.mrb[0].mxu0
      %v772 = vadd.f32 %v660, %v771
      %v773 = vpop.f32.mrb[0].mxu0
      %v774 = vpop.f32.mrb[0].mxu0
      %v775 = vadd.f32 %v660, %v774
      %v776 = vpop.f32.mrb[0].mxu0
      %777 = vmatprep.mubr.bf16.mxu0 0
      %778 = vmatmul.mubr.bf16.gmra.mrb[0].mxu0 %v675
      %v779 = vpop.f32.mrb[0].mxu0
      %v780 = vadd.f32 %v660, %v779
      %v781 = vpop.f32.mrb[0].mxu0
      %v782 = vpop.f32.mrb[0].mxu0
      %v783 = vadd.f32 %v660, %v782
      %v784 = vpop.f32.mrb[0].mxu0
      %785 = vmatprep.mubr.bf16.mxu0 0
      %786 = vmatmul.mubr.bf16.gmra.mrb[0].mxu0 %v678
      %v787 = vpop.f32.mrb[0].mxu0
      %v788 = vadd.f32 %v660, %v787
      %v789 = vpop.f32.mrb[0].mxu0
      %v790 = vpop.f32.mrb[0].mxu0
      %v791 = vadd.f32 %v660, %v790
      %v792 = vpop.f32.mrb[0].mxu0
      %793 = vmatprep.mubr.bf16.mxu0 0
      %794 = vmatmul.mubr.bf16.gmra.mrb[0].mxu0 %v681
      %v795 = vpop.f32.mrb[0].mxu0
      %v796 = vadd.f32 %v660, %v795
      %v797 = vpop.f32.mrb[0].mxu0
      %v798 = vpop.f32.mrb[0].mxu0
      %v799 = vadd.f32 %v660, %v798
      %v800 = vpop.f32.mrb[0].mxu0
      %801 = vmatprep.mubr.bf16.mxu0 0
      %802 = vmatmul.mubr.bf16.gmra.mrb[0].mxu0 %v684
      %v803 = vpop.f32.mrb[0].mxu0
      %v804 = vadd.f32 %v660, %v803
      %v805 = vpop.f32.mrb[0].mxu0
      %v806 = vpop.f32.mrb[0].mxu0
      %v807 = vadd.f32 %v660, %v806
      %v808 = vpop.f32.mrb[0].mxu0
      %809 = vmatprep.mubr.bf16.mxu0 0
      %810 = vmatmul.mubr.bf16.gmra.mrb[0].mxu0 %v687
      %v811 = vpop.f32.mrb[0].mxu0
      %v812 = vadd.f32 %v660, %v811
      %v813 = vpop.f32.mrb[0].mxu0
      %v814 = vpop.f32.mrb[0].mxu0
      %v815 = vadd.f32 %v660, %v814
      %v816 = vpop.f32.mrb[0].mxu0
      %817 = vmatprep.mubr.bf16.mxu0 0
      %818 = vmatmul.mubr.bf16.gmra.mrb[0].mxu0 %v690
      %v819 = vpop.f32.mrb[0].mxu0
      %v820 = vadd.f32 %v660, %v819
      %v821 = vpop.f32.mrb[0].mxu0
      %v822 = vpop.f32.mrb[0].mxu0
      %v823 = vadd.f32 %v660, %v822
      %v824 = vpop.f32.mrb[0].mxu0
      %825 = vmatprep.mubr.bf16.mxu0 0
      %826 = vmatmul.mubr.bf16.gmra.mrb[0].mxu0 %v693
      %v827 = vpop.f32.mrb[0].mxu0
      %v828 = vadd.f32 %v660, %v827
      %v829 = vpop.f32.mrb[0].mxu0
      %v830 = vpop.f32.mrb[0].mxu0
      %v831 = vadd.f32 %v660, %v830
      %v832 = vpop.f32.mrb[0].mxu0
      %833 = vmatprep.mubr.bf16.mxu0 0
      %834 = vmatmul.mubr.bf16.gmra.mrb[0].mxu0 %v696
      %v835 = vpop.f32.mrb[0].mxu0
      %v836 = vadd.f32 %v660, %v835
      %v837 = vpop.f32.mrb[0].mxu0
      %v838 = vpop.f32.mrb[0].mxu0
      %v839 = vadd.f32 %v660, %v838
      %v840 = vpop.f32.mrb[0].mxu0
      %841 = vmatprep.mubr.bf16.mxu0 0
      %842 = vmatmul.mubr.bf16.gmra.mrb[0].mxu0 %v699
      %v843 = vpop.f32.mrb[0].mxu0
      %v844 = vadd.f32 %v660, %v843
      %v845 = vpop.f32.mrb[0].mxu0
      %v846 = vpop.f32.mrb[0].mxu0
      %v847 = vadd.f32 %v660, %v846
      %v848 = vpop.f32.mrb[0].mxu0
      %849 = vmatprep.mubr.bf16.mxu0 0
      %850 = vmatmul.mubr.bf16.gmra.mrb[0].mxu0 %v702
      %v851 = vpop.f32.mrb[0].mxu0
      %v852 = vadd.f32 %v660, %v851
      %v853 = vpop.f32.mrb[0].mxu0
      %v854 = vpop.f32.mrb[0].mxu0
      %v855 = vadd.f32 %v660, %v854
      %v856 = vpop.f32.mrb[0].mxu0
      %857 = vmatprep.mubr.bf16.mxu0 0
      %858 = vmatmul.mubr.bf16.gmra.mrb[0].mxu0 %v705
      %v859 = vpop.f32.mrb[0].mxu0
      %v860 = vadd.f32 %v660, %v859
      %v861 = vpop.f32.mrb[0].mxu0
      %v862 = vpop.f32.mrb[0].mxu0
      %v863 = vadd.f32 %v660, %v862
      %v864 = vpop.f32.mrb[0].mxu0
      %865 = vmatprep.mubr.bf16.mxu0 0
      %866 = vmatmul.mubr.bf16.gmra.mrb[0].mxu0 %v708
      %v867 = vpop.f32.mrb[0].mxu0
      %v868 = vadd.f32 %v660, %v867
      %v869 = vpop.f32.mrb[0].mxu0
      %v870 = vpop.f32.mrb[0].mxu0
      %v871 = vadd.f32 %v660, %v870
      %v872 = vpop.f32.mrb[0].mxu0
      %873 = vdwg.mxu0
      %v874 = vld [vmem:[%s324] sm:$0xff]
      %v875 = vld [vmem:[%s324 + $0x8] sm:$0xff]
      %v876 = vld [vmem:[%s324 + $0x10] sm:$0xff]
      %v877 = vld [vmem:[%s324 + $0x18] sm:$0xff]
      %v878 = vld [vmem:[%s324 + $0x20] sm:$0xff]
      %v879 = vld [vmem:[%s324 + $0x28] sm:$0xff]
      %v880 = vld [vmem:[%s324 + $0x30] sm:$0xff]
      %v881 = vld [vmem:[%s324 + $0x38] sm:$0xff]
      %v882 = vld [vmem:[%s324 + $0x40] sm:$0xff]
      %v883 = vld [vmem:[%s324 + $0x48] sm:$0xff]
      %v884 = vld [vmem:[%s324 + $0x50] sm:$0xff]
      %v885 = vld [vmem:[%s324 + $0x58] sm:$0xff]
      %v886 = vld [vmem:[%s324 + $0x60] sm:$0xff]
      %v887 = vld [vmem:[%s324 + $0x68] sm:$0xff]
      %v888 = vld [vmem:[%s324 + $0x70] sm:$0xff]
      %v889 = vld [vmem:[%s324 + $0x78] sm:$0xff]
      %v890 = vld [vmem:[%s324 + $0x80] sm:$0xff]
      %v891 = vld [vmem:[%s324 + $0x88] sm:$0xff]
      %v892 = vld [vmem:[%s324 + $0x90] sm:$0xff]
      %v893 = vld [vmem:[%s324 + $0x98] sm:$0xff]
      %v894 = vld [vmem:[%s324 + $0xa0] sm:$0xff]
      %v895 = vld [vmem:[%s324 + $0xa8] sm:$0xff]
      %v896 = vld [vmem:[%s324 + $0xb0] sm:$0xff]
      %v897 = vld [vmem:[%s324 + $0xb8] sm:$0xff]
      %v898 = vld [vmem:[%s324 + $0xc0] sm:$0xff]
      %v899 = vld [vmem:[%s324 + $0xc8] sm:$0xff]
      %v900 = vld [vmem:[%s324 + $0xd0] sm:$0xff]
      %v901 = vld [vmem:[%s324 + $0xd8] sm:$0xff]
      %v902 = vld [vmem:[%s324 + $0xe0] sm:$0xff]
      %v903 = vld [vmem:[%s324 + $0xe8] sm:$0xff]
      %v904 = vld [vmem:[%s324 + $0xf0] sm:$0xff]
      %v905 = vld [vmem:[%s324 + $0xf8] sm:$0xff]
      %v906 = vadd.f32 %v748, %v874
      %v907 = vadd.f32 %v751, %v875
      %v908 = vadd.f32 %v756, %v876
      %v909 = vadd.f32 %v759, %v877
      %v910 = vadd.f32 %v764, %v878
      %v911 = vadd.f32 %v767, %v879
      %v912 = vadd.f32 %v772, %v880
      %v913 = vadd.f32 %v775, %v881
      %v914 = vadd.f32 %v780, %v882
      %v915 = vadd.f32 %v783, %v883
      %v916 = vadd.f32 %v788, %v884
      %v917 = vadd.f32 %v791, %v885
      %v918 = vadd.f32 %v796, %v886
      %v919 = vadd.f32 %v799, %v887
      %v920 = vadd.f32 %v804, %v888
      %v921 = vadd.f32 %v807, %v889
      %v922 = vadd.f32 %v812, %v890
      %v923 = vadd.f32 %v815, %v891
      %v924 = vadd.f32 %v820, %v892
      %v925 = vadd.f32 %v823, %v893
      %v926 = vadd.f32 %v828, %v894
      %v927 = vadd.f32 %v831, %v895
      %v928 = vadd.f32 %v836, %v896
      %v929 = vadd.f32 %v839, %v897
      %v930 = vadd.f32 %v844, %v898
      %v931 = vadd.f32 %v847, %v899
      %v932 = vadd.f32 %v852, %v900
      %v933 = vadd.f32 %v855, %v901
      %v934 = vadd.f32 %v860, %v902
      %v935 = vadd.f32 %v863, %v903
      %v936 = vadd.f32 %v868, %v904
      %v937 = vadd.f32 %v871, %v905
      %v938 = vpack.c.bf16 %v907, %v906
      %v939 = vpack.c.bf16 %v909, %v908
      %v940 = vpack.c.bf16 %v911, %v910
      %v941 = vpack.c.bf16 %v913, %v912
      %v942 = vpack.c.bf16 %v915, %v914
      %v943 = vpack.c.bf16 %v917, %v916
      %v944 = vpack.c.bf16 %v919, %v918
      %v945 = vpack.c.bf16 %v921, %v920
      %v946 = vpack.c.bf16 %v923, %v922
      %v947 = vpack.c.bf16 %v925, %v924
      %v948 = vpack.c.bf16 %v927, %v926
      %v949 = vpack.c.bf16 %v929, %v928
      %v950 = vpack.c.bf16 %v931, %v930
      %v951 = vpack.c.bf16 %v933, %v932
      %v952 = vpack.c.bf16 %v935, %v934
      %v953 = vpack.c.bf16 %v937, %v936
      %v954 = vld [vmem:[%s6] sm:$0xff]
      %v955 = vld [vmem:[%s6 + $0x8] sm:$0xff]
      %v956 = vld [vmem:[%s6 + $0x10] sm:$0xff]
      %v957 = vld [vmem:[%s6 + $0x18] sm:$0xff]
      %v958 = vld [vmem:[%s6 + $0x20] sm:$0xff]
      %v959 = vld [vmem:[%s6 + $0x28] sm:$0xff]
      %v960 = vld [vmem:[%s6 + $0x30] sm:$0xff]
      %v961 = vld [vmem:[%s6 + $0x38] sm:$0xff]
      %v962 = vpack.c.bf16 %v956, %v954
      %v963 = vpack.c.bf16 %v957, %v955
      %v964 = vpack.c.bf16 %v960, %v958
      %v965 = vpack.c.bf16 %v961, %v959
      %v966 = vld [vmem:[%s7] sm:$0x3]
      %v968 = vlaneseq
      %v969 = vshrl.u32 %v968, 7
      %v970 = vsub.s32 0, %v969
      %v971 = vrot.slane %v966, %v970
      %v972 = vlaneseq
      %v973 = vshrl.u32 %v972, 7
      %v974 = vsub.s32 1, %v973
      %v975 = vrot.slane %v966, %v974
      %vm978 = vcmask 261120
      %v980 = vsel %vm978, %v938, 0
      %v983 = vsel %vm978, %v939, 0
      %v986 = vsel %vm978, %v940, 0
      %v989 = vsel %vm978, %v941, 0
      %v992 = vsel %vm978, %v942, 0
      %v995 = vsel %vm978, %v943, 0
      %v998 = vsel %vm978, %v944, 0
      %v1001 = vsel %vm978, %v945, 0
      %v1004 = vsel %vm978, %v946, 0
      %v1007 = vsel %vm978, %v947, 0
      %v1010 = vsel %vm978, %v948, 0
      %v1013 = vsel %vm978, %v949, 0
      %v1016 = vsel %vm978, %v950, 0
      %v1019 = vsel %vm978, %v951, 0
      %v1022 = vsel %vm978, %v952, 0
      %v1025 = vsel %vm978, %v953, 0
      %1027 = vmatprep.subr.bf16.mxu0 %v963
      %1028 = vmatpush1.bf16.msra.mxu0 %v962
      %1029 = vmatprep.subr.bf16.mxu0 %v965
      %1030 = vmatpush1.bf16.msra.mxu0 %v964
      %1031 = vmatprep.subr.bf16.mxu0 0
      %1032 = vmatpush1.bf16.msra.mxu0 0
      %1033 = vmatprep.subr.bf16.mxu0 0
      %1034 = vmatpush1.bf16.msra.mxu0 0
      %1035 = vmatprep.subr.bf16.mxu0 0
      %1036 = vmatpush1.bf16.msra.mxu0 0
      %1037 = vmatprep.subr.bf16.mxu0 0
      %1038 = vmatpush1.bf16.msra.mxu0 0
      %1039 = vmatprep.subr.bf16.mxu0 0
      %1040 = vmatpush1.bf16.msra.mxu0 0
      %1041 = vmatprep.subr.bf16.mxu0 0
      %1042 = vmatpush1.bf16.msra.mxu0 0
      %1043 = vmatprep.subr.bf16.mxu0 0
      %1044 = vmatpush1.bf16.msra.mxu0 0
      %1045 = vmatprep.subr.bf16.mxu0 0
      %1046 = vmatpush1.bf16.msra.mxu0 0
      %1047 = vmatprep.subr.bf16.mxu0 0
      %1048 = vmatpush1.bf16.msra.mxu0 0
      %1049 = vmatprep.subr.bf16.mxu0 0
      %1050 = vmatpush1.bf16.msra.mxu0 0
      %1051 = vmatprep.subr.bf16.mxu0 0
      %1052 = vmatpush1.bf16.msra.mxu0 0
      %1053 = vmatprep.subr.bf16.mxu0 0
      %1054 = vmatpush1.bf16.msra.mxu0 0
      %1055 = vmatprep.subr.bf16.mxu0 0
      %1056 = vmatpush1.bf16.msra.mxu0 0
      %1057 = vmatprep.subr.bf16.mxu0 0
      %1058 = vmatpush1.bf16.msra.mxu0 0
      %1059 = vmatprep.mubr.bf16.mxu0 0
      %1060 = vmatmul.mubr.bf16.gmra.mrb[0].mxu0 %v980
      %v1061 = vpop.f32.mrb[0].mxu0
      %v1062 = vadd.f32 %v971, %v1061
      %v1063 = vpop.f32.mrb[0].mxu0
      %v1064 = vadd.f32 %v975, %v1063
      %v1065 = vpop.f32.mrb[0].mxu0
      %v1066 = vadd.f32 %v971, %v1065
      %v1067 = vpop.f32.mrb[0].mxu0
      %v1068 = vadd.f32 %v975, %v1067
      %1069 = vmatprep.mubr.bf16.mxu0 0
      %1070 = vmatmul.mubr.bf16.gmra.mrb[0].mxu0 %v983
      %v1071 = vpop.f32.mrb[0].mxu0
      %v1072 = vadd.f32 %v971, %v1071
      %v1073 = vpop.f32.mrb[0].mxu0
      %v1074 = vadd.f32 %v975, %v1073
      %v1075 = vpop.f32.mrb[0].mxu0
      %v1076 = vadd.f32 %v971, %v1075
      %v1077 = vpop.f32.mrb[0].mxu0
      %v1078 = vadd.f32 %v975, %v1077
      %1079 = vmatprep.mubr.bf16.mxu0 0
      %1080 = vmatmul.mubr.bf16.gmra.mrb[0].mxu0 %v986
      %v1081 = vpop.f32.mrb[0].mxu0
      %v1082 = vadd.f32 %v971, %v1081
      %v1083 = vpop.f32.mrb[0].mxu0
      %v1084 = vadd.f32 %v975, %v1083
      %v1085 = vpop.f32.mrb[0].mxu0
      %v1086 = vadd.f32 %v971, %v1085
      %v1087 = vpop.f32.mrb[0].mxu0
      %v1088 = vadd.f32 %v975, %v1087
      %1089 = vmatprep.mubr.bf16.mxu0 0
      %1090 = vmatmul.mubr.bf16.gmra.mrb[0].mxu0 %v989
      %v1091 = vpop.f32.mrb[0].mxu0
      %v1092 = vadd.f32 %v971, %v1091
      %v1093 = vpop.f32.mrb[0].mxu0
      %v1094 = vadd.f32 %v975, %v1093
      %v1095 = vpop.f32.mrb[0].mxu0
      %v1096 = vadd.f32 %v971, %v1095
      %v1097 = vpop.f32.mrb[0].mxu0
      %v1098 = vadd.f32 %v975, %v1097
      %1099 = vmatprep.mubr.bf16.mxu0 0
      %1100 = vmatmul.mubr.bf16.gmra.mrb[0].mxu0 %v992
      %v1101 = vpop.f32.mrb[0].mxu0
      %v1102 = vadd.f32 %v971, %v1101
      %v1103 = vpop.f32.mrb[0].mxu0
      %v1104 = vadd.f32 %v975, %v1103
      %v1105 = vpop.f32.mrb[0].mxu0
      %v1106 = vadd.f32 %v971, %v1105
      %v1107 = vpop.f32.mrb[0].mxu0
      %v1108 = vadd.f32 %v975, %v1107
      %1109 = vmatprep.mubr.bf16.mxu0 0
      %1110 = vmatmul.mubr.bf16.gmra.mrb[0].mxu0 %v995
      %v1111 = vpop.f32.mrb[0].mxu0
      %v1112 = vadd.f32 %v971, %v1111
      %v1113 = vpop.f32.mrb[0].mxu0
      %v1114 = vadd.f32 %v975, %v1113
      %v1115 = vpop.f32.mrb[0].mxu0
      %v1116 = vadd.f32 %v971, %v1115
      %v1117 = vpop.f32.mrb[0].mxu0
      %v1118 = vadd.f32 %v975, %v1117
      %1119 = vmatprep.mubr.bf16.mxu0 0
      %1120 = vmatmul.mubr.bf16.gmra.mrb[0].mxu0 %v998
      %v1121 = vpop.f32.mrb[0].mxu0
      %v1122 = vadd.f32 %v971, %v1121
      %v1123 = vpop.f32.mrb[0].mxu0
      %v1124 = vadd.f32 %v975, %v1123
      %v1125 = vpop.f32.mrb[0].mxu0
      %v1126 = vadd.f32 %v971, %v1125
      %v1127 = vpop.f32.mrb[0].mxu0
      %v1128 = vadd.f32 %v975, %v1127
      %1129 = vmatprep.mubr.bf16.mxu0 0
      %1130 = vmatmul.mubr.bf16.gmra.mrb[0].mxu0 %v1001
      %v1131 = vpop.f32.mrb[0].mxu0
      %v1132 = vadd.f32 %v971, %v1131
      %v1133 = vpop.f32.mrb[0].mxu0
      %v1134 = vadd.f32 %v975, %v1133
      %v1135 = vpop.f32.mrb[0].mxu0
      %v1136 = vadd.f32 %v971, %v1135
      %v1137 = vpop.f32.mrb[0].mxu0
      %v1138 = vadd.f32 %v975, %v1137
      %1139 = vmatprep.mubr.bf16.mxu0 0
      %1140 = vmatmul.mubr.bf16.gmra.mrb[0].mxu0 %v1004
      %v1141 = vpop.f32.mrb[0].mxu0
      %v1142 = vadd.f32 %v971, %v1141
      %v1143 = vpop.f32.mrb[0].mxu0
      %v1144 = vadd.f32 %v975, %v1143
      %v1145 = vpop.f32.mrb[0].mxu0
      %v1146 = vadd.f32 %v971, %v1145
      %v1147 = vpop.f32.mrb[0].mxu0
      %v1148 = vadd.f32 %v975, %v1147
      %1149 = vmatprep.mubr.bf16.mxu0 0
      %1150 = vmatmul.mubr.bf16.gmra.mrb[0].mxu0 %v1007
      %v1151 = vpop.f32.mrb[0].mxu0
      %v1152 = vadd.f32 %v971, %v1151
      %v1153 = vpop.f32.mrb[0].mxu0
      %v1154 = vadd.f32 %v975, %v1153
      %v1155 = vpop.f32.mrb[0].mxu0
      %v1156 = vadd.f32 %v971, %v1155
      %v1157 = vpop.f32.mrb[0].mxu0
      %v1158 = vadd.f32 %v975, %v1157
      %1159 = vmatprep.mubr.bf16.mxu0 0
      %1160 = vmatmul.mubr.bf16.gmra.mrb[0].mxu0 %v1010
      %v1161 = vpop.f32.mrb[0].mxu0
      %v1162 = vadd.f32 %v971, %v1161
      %v1163 = vpop.f32.mrb[0].mxu0
      %v1164 = vadd.f32 %v975, %v1163
      %v1165 = vpop.f32.mrb[0].mxu0
      %v1166 = vadd.f32 %v971, %v1165
      %v1167 = vpop.f32.mrb[0].mxu0
      %v1168 = vadd.f32 %v975, %v1167
      %1169 = vmatprep.mubr.bf16.mxu0 0
      %1170 = vmatmul.mubr.bf16.gmra.mrb[0].mxu0 %v1013
      %v1171 = vpop.f32.mrb[0].mxu0
      %v1172 = vadd.f32 %v971, %v1171
      %v1173 = vpop.f32.mrb[0].mxu0
      %v1174 = vadd.f32 %v975, %v1173
      %v1175 = vpop.f32.mrb[0].mxu0
      %v1176 = vadd.f32 %v971, %v1175
      %v1177 = vpop.f32.mrb[0].mxu0
      %v1178 = vadd.f32 %v975, %v1177
      %1179 = vmatprep.mubr.bf16.mxu0 0
      %1180 = vmatmul.mubr.bf16.gmra.mrb[0].mxu0 %v1016
      %v1181 = vpop.f32.mrb[0].mxu0
      %v1182 = vadd.f32 %v971, %v1181
      %v1183 = vpop.f32.mrb[0].mxu0
      %v1184 = vadd.f32 %v975, %v1183
      %v1185 = vpop.f32.mrb[0].mxu0
      %v1186 = vadd.f32 %v971, %v1185
      %v1187 = vpop.f32.mrb[0].mxu0
      %v1188 = vadd.f32 %v975, %v1187
      %1189 = vmatprep.mubr.bf16.mxu0 0
      %1190 = vmatmul.mubr.bf16.gmra.mrb[0].mxu0 %v1019
      %v1191 = vpop.f32.mrb[0].mxu0
      %v1192 = vadd.f32 %v971, %v1191
      %v1193 = vpop.f32.mrb[0].mxu0
      %v1194 = vadd.f32 %v975, %v1193
      %v1195 = vpop.f32.mrb[0].mxu0
      %v1196 = vadd.f32 %v971, %v1195
      %v1197 = vpop.f32.mrb[0].mxu0
      %v1198 = vadd.f32 %v975, %v1197
      %1199 = vmatprep.mubr.bf16.mxu0 0
      %1200 = vmatmul.mubr.bf16.gmra.mrb[0].mxu0 %v1022
      %v1201 = vpop.f32.mrb[0].mxu0
      %v1202 = vadd.f32 %v971, %v1201
      %v1203 = vpop.f32.mrb[0].mxu0
      %v1204 = vadd.f32 %v975, %v1203
      %v1205 = vpop.f32.mrb[0].mxu0
      %v1206 = vadd.f32 %v971, %v1205
      %v1207 = vpop.f32.mrb[0].mxu0
      %v1208 = vadd.f32 %v975, %v1207
      %1209 = vmatprep.mubr.bf16.mxu0 0
      %1210 = vmatmul.mubr.bf16.gmra.mrb[0].mxu0 %v1025
      %v1211 = vpop.f32.mrb[0].mxu0
      %v1212 = vadd.f32 %v971, %v1211
      %v1213 = vpop.f32.mrb[0].mxu0
      %v1214 = vadd.f32 %v975, %v1213
      %v1215 = vpop.f32.mrb[0].mxu0
      %v1216 = vadd.f32 %v971, %v1215
      %v1217 = vpop.f32.mrb[0].mxu0
      %v1218 = vadd.f32 %v975, %v1217
      %1219 = vdwg.mxu0
      %1220 = vst [vmem:[%s331] sm:$0xff] %v1062
      %vm1221 = vcmask 523264
      %1222 = vst.msk [vmem:[%s331 + $0x8] sm:$0xff] %vm1221, %v1064
      %1223 = vst [vmem:[%s331 + $0x10] sm:$0xff] %v1066
      %1224 = vst.msk [vmem:[%s331 + $0x18] sm:$0xff] %vm1221, %v1068
      %1225 = vst [vmem:[%s331 + $0x20] sm:$0xff] %v1072
      %1226 = vst.msk [vmem:[%s331 + $0x28] sm:$0xff] %vm1221, %v1074
      %1227 = vst [vmem:[%s331 + $0x30] sm:$0xff] %v1076
      %1228 = vst.msk [vmem:[%s331 + $0x38] sm:$0xff] %vm1221, %v1078
      %1229 = vst [vmem:[%s331 + $0x40] sm:$0xff] %v1082
      %1230 = vst.msk [vmem:[%s331 + $0x48] sm:$0xff] %vm1221, %v1084
      %1231 = vst [vmem:[%s331 + $0x50] sm:$0xff] %v1086
      %1232 = vst.msk [vmem:[%s331 + $0x58] sm:$0xff] %vm1221, %v1088
      %1233 = vst [vmem:[%s331 + $0x60] sm:$0xff] %v1092
      %1234 = vst.msk [vmem:[%s331 + $0x68] sm:$0xff] %vm1221, %v1094
      %1235 = vst [vmem:[%s331 + $0x70] sm:$0xff] %v1096
      %1236 = vst.msk [vmem:[%s331 + $0x78] sm:$0xff] %vm1221, %v1098
      %1237 = vst [vmem:[%s331 + $0x80] sm:$0xff] %v1102
      %1238 = vst.msk [vmem:[%s331 + $0x88] sm:$0xff] %vm1221, %v1104
      %1239 = vst [vmem:[%s331 + $0x90] sm:$0xff] %v1106
      %1240 = vst.msk [vmem:[%s331 + $0x98] sm:$0xff] %vm1221, %v1108
      %1241 = vst [vmem:[%s331 + $0xa0] sm:$0xff] %v1112
      %1242 = vst.msk [vmem:[%s331 + $0xa8] sm:$0xff] %vm1221, %v1114
      %1243 = vst [vmem:[%s331 + $0xb0] sm:$0xff] %v1116
      %1244 = vst.msk [vmem:[%s331 + $0xb8] sm:$0xff] %vm1221, %v1118
      %1245 = vst [vmem:[%s331 + $0xc0] sm:$0xff] %v1122
      %1246 = vst.msk [vmem:[%s331 + $0xc8] sm:$0xff] %vm1221, %v1124
      %1247 = vst [vmem:[%s331 + $0xd0] sm:$0xff] %v1126
      %1248 = vst.msk [vmem:[%s331 + $0xd8] sm:$0xff] %vm1221, %v1128
      %1249 = vst [vmem:[%s331 + $0xe0] sm:$0xff] %v1132
      %1250 = vst.msk [vmem:[%s331 + $0xe8] sm:$0xff] %vm1221, %v1134
      %1251 = vst [vmem:[%s331 + $0xf0] sm:$0xff] %v1136
      %1252 = vst.msk [vmem:[%s331 + $0xf8] sm:$0xff] %vm1221, %v1138
      %1253 = vst [vmem:[%s331 + $0x100] sm:$0xff] %v1142
      %1254 = vst.msk [vmem:[%s331 + $0x108] sm:$0xff] %vm1221, %v1144
      %1255 = vst [vmem:[%s331 + $0x110] sm:$0xff] %v1146
      %1256 = vst.msk [vmem:[%s331 + $0x118] sm:$0xff] %vm1221, %v1148
      %1257 = vst [vmem:[%s331 + $0x120] sm:$0xff] %v1152
      %1258 = vst.msk [vmem:[%s331 + $0x128] sm:$0xff] %vm1221, %v1154
      %1259 = vst [vmem:[%s331 + $0x130] sm:$0xff] %v1156
      %1260 = vst.msk [vmem:[%s331 + $0x138] sm:$0xff] %vm1221, %v1158
      %1261 = vst [vmem:[%s331 + $0x140] sm:$0xff] %v1162
      %1262 = vst.msk [vmem:[%s331 + $0x148] sm:$0xff] %vm1221, %v1164
      %1263 = vst [vmem:[%s331 + $0x150] sm:$0xff] %v1166
      %1264 = vst.msk [vmem:[%s331 + $0x158] sm:$0xff] %vm1221, %v1168
      %1265 = vst [vmem:[%s331 + $0x160] sm:$0xff] %v1172
      %1266 = vst.msk [vmem:[%s331 + $0x168] sm:$0xff] %vm1221, %v1174
      %1267 = vst [vmem:[%s331 + $0x170] sm:$0xff] %v1176
      %1268 = vst.msk [vmem:[%s331 + $0x178] sm:$0xff] %vm1221, %v1178
      %1269 = vst [vmem:[%s331 + $0x180] sm:$0xff] %v1182
      %1270 = vst.msk [vmem:[%s331 + $0x188] sm:$0xff] %vm1221, %v1184
      %1271 = vst [vmem:[%s331 + $0x190] sm:$0xff] %v1186
      %1272 = vst.msk [vmem:[%s331 + $0x198] sm:$0xff] %vm1221, %v1188
      %1273 = vst [vmem:[%s331 + $0x1a0] sm:$0xff] %v1192
      %1274 = vst.msk [vmem:[%s331 + $0x1a8] sm:$0xff] %vm1221, %v1194
      %1275 = vst [vmem:[%s331 + $0x1b0] sm:$0xff] %v1196
      %1276 = vst.msk [vmem:[%s331 + $0x1b8] sm:$0xff] %vm1221, %v1198
      %1277 = vst [vmem:[%s331 + $0x1c0] sm:$0xff] %v1202
      %1278 = vst.msk [vmem:[%s331 + $0x1c8] sm:$0xff] %vm1221, %v1204
      %1279 = vst [vmem:[%s331 + $0x1d0] sm:$0xff] %v1206
      %1280 = vst.msk [vmem:[%s331 + $0x1d8] sm:$0xff] %vm1221, %v1208
      %1281 = vst [vmem:[%s331 + $0x1e0] sm:$0xff] %v1212
      %1282 = vst.msk [vmem:[%s331 + $0x1e8] sm:$0xff] %vm1221, %v1214
      %1283 = vst [vmem:[%s331 + $0x1f0] sm:$0xff] %v1216
      %1284 = vst.msk [vmem:[%s331 + $0x1f8] sm:$0xff] %vm1221, %v1218
      %s1285 = smul.u32 32, %s19
      %p1286 = scmp.lt.s32.totalorder %s1285, 63
      %s1287 = scalar_select %p1286, %s1285, 63
      %s1288 = smul.addr %s1287, 2
      %s1289 = smul.addr %s1288, 8
      %s1290 = scalar_lea.vmem %s8, %s1289
      // Predicated region
      $region53: #{detr_forward.2} parent=51 // pred_check
        %p1291 = pneg %p215
      $region54: #{detr_forward.2} parent=51 // pred_check_branch
        %1293 = sbr.rel (%p1291) target = $region56
      $region55: #{detr_forward.2} parent=51 // pred_region
        %s1294 = smul.u32 32, %s19
      $region56: #{detr_forward.2} parent=51 // pred_fallthru
        _
    $region52: #{detr_forward.2} parent=5 // pred_fallthru
      _
    %p1295 = scmp.le.s32.totalorder 2, %s14
    // Predicated region
    $region57: #{detr_forward.2} parent=5 // pred_check
      %p1296 = pneg %p1295
    $region58: #{detr_forward.2} parent=5 // pred_check_branch
      %1298 = sbr.rel (%p1296) target = $region60
    $region59: #{detr_forward.2} parent=5 // pred_region
      %s1299 = ssub.s32 %s14, 2
      // Predicated region
      $region61: #{detr_forward.2} parent=59 // pred_check
        %p1300 = pneg %p221
      $region62: #{detr_forward.2} parent=59 // pred_check_branch
        %1302 = sbr.rel (%p1300) target = $region64
      $region63: #{detr_forward.2} parent=59 // pred_region
        %s1303 = smul.u32 32, %s20
        %p1304 = scmp.lt.s32.totalorder %s1303, 63
        %s1305 = scalar_select %p1304, %s1303, 63
        %s1306 = smul.addr %s1305, 2
        %s1307 = smul.addr %s1306, 8
        %s1308 = scalar_lea.vmem %s8, %s1307
      $region64: #{detr_forward.2} parent=59 // pred_fallthru
        _
    $region60: #{detr_forward.2} parent=5 // pred_fallthru
      _
  $region6: #{detr_forward.2} parent=0 // loop_footer
    %s18 = sadd.s32 1, %s14
  $region7: #{detr_forward.2} parent=0 // loop_footer_branch
    %13 = sbr.rel target = $region3
  $region8: #{detr_forward.2} parent=0 // loop_exit
    _

// kernel: detr_forward.3
$region0: #{detr_forward.3}
  #allocation0 [shape = 'u32[]', space=smem, size = 0x4, offset = 0x4, fixed_abs, tag = 'smem constant byte address 0x4 - core index']
  #allocation1 [shape = 'u32[144,128]{1,0:T(1,128)}', space=vmem, size = 0x12000, scoped, tag = 'internal scratch']
  %s0 = inlined_call_operand.vmem [shape: f32[16,8], index: 0, kind: input, shape index: {}]
  %s1 = inlined_call_operand.vmem [shape: f32[2,256,192], index: 1, kind: input, shape index: {}]
  %s2 = inlined_call_operand.vmem [shape: f32[8,16], index: 2, kind: input, shape index: {}]
  %s3 = inlined_call_operand.vmem [shape: f32[1,16], index: 3, kind: input, shape index: {}]
  %s4 = inlined_call_operand.vmem [shape: f32[16,16], index: 4, kind: input, shape index: {}]
  %s5 = inlined_call_operand.vmem [shape: f32[1,16], index: 5, kind: input, shape index: {}]
  %s6 = inlined_call_operand.vmem [shape: f32[16,32], index: 6, kind: input, shape index: {}]
  %s7 = inlined_call_operand.vmem [shape: f32[1,32], index: 7, kind: input, shape index: {}]
  %s8 = inlined_call_operand.vmem [shape: f32[3,32,32], index: 8, kind: input, shape index: {}]
  %s9 = inlined_call_operand.vmem [shape: f32[3,1,32], index: 9, kind: input, shape index: {}]
  %s10 = inlined_call_operand.vmem [shape: f32[3,32,32], index: 10, kind: input, shape index: {}]
  %s11 = inlined_call_operand.vmem [shape: f32[3,1,32], index: 11, kind: input, shape index: {}]
  %s12 = inlined_call_operand.vmem [shape: f32[32,32], index: 12, kind: input, shape index: {}]
  %s13 = inlined_call_operand.vmem [shape: f32[1,32], index: 13, kind: input, shape index: {}]
  %s14 = inlined_call_operand.vmem [shape: f32[32,32], index: 14, kind: input, shape index: {}]
  %s15 = inlined_call_operand.vmem [shape: f32[1,32], index: 15, kind: input, shape index: {}]
  %s16 = inlined_call_operand.vmem [shape: f32[32,128], index: 16, kind: input, shape index: {}]
  %s17 = inlined_call_operand.vmem [shape: f32[32,128], index: 17, kind: input, shape index: {}]
  %s18 = inlined_call_operand.vmem [shape: f32[1,128], index: 18, kind: input, shape index: {}]
  %s19 = inlined_call_operand.vmem [shape: f32[16,128], index: 19, kind: output, shape index: {}]
  %s20 = sld [smem:[#allocation0]]
  $region86: #{detr_forward.3} parent=0
    _
  %s22 = ssub.s32 1, %s20
  %s23 = scalar_select 0, %s22, %s20
  // Predicated region
  $region2: #{detr_forward.3} parent=0 // pred_check
    _
  $region3: #{detr_forward.3} parent=0 // pred_check_branch
    %25 = sbr.rel (0) target = $region5
  $region4: #{detr_forward.3} parent=0 // pred_region
    _
  $region5: #{detr_forward.3} parent=0 // pred_fallthru
    _
  // Predicated region
  $region6: #{detr_forward.3} parent=0 // pred_check
    _
  $region7: #{detr_forward.3} parent=0 // pred_check_branch
    %27 = sbr.rel (0) target = $region9
  $region8: #{detr_forward.3} parent=0 // pred_region
    _
  $region9: #{detr_forward.3} parent=0 // pred_fallthru
    _
  // Predicated region
  $region10: #{detr_forward.3} parent=0 // pred_check
    _
  $region11: #{detr_forward.3} parent=0 // pred_check_branch
    %29 = sbr.rel (0) target = $region13
  $region12: #{detr_forward.3} parent=0 // pred_region
    _
  $region13: #{detr_forward.3} parent=0 // pred_fallthru
    _
  // Predicated region
  $region14: #{detr_forward.3} parent=0 // pred_check
    _
  $region15: #{detr_forward.3} parent=0 // pred_check_branch
    %31 = sbr.rel (0) target = $region17
  $region16: #{detr_forward.3} parent=0 // pred_region
    _
  $region17: #{detr_forward.3} parent=0 // pred_fallthru
    _
  // Predicated region
  $region18: #{detr_forward.3} parent=0 // pred_check
    _
  $region19: #{detr_forward.3} parent=0 // pred_check_branch
    %33 = sbr.rel (0) target = $region21
  $region20: #{detr_forward.3} parent=0 // pred_region
    _
  $region21: #{detr_forward.3} parent=0 // pred_fallthru
    _
  // Predicated region
  $region22: #{detr_forward.3} parent=0 // pred_check
    _
  $region23: #{detr_forward.3} parent=0 // pred_check_branch
    %35 = sbr.rel (0) target = $region25
  $region24: #{detr_forward.3} parent=0 // pred_region
    _
  $region25: #{detr_forward.3} parent=0 // pred_fallthru
    _
  // Predicated region
  $region26: #{detr_forward.3} parent=0 // pred_check
    _
  $region27: #{detr_forward.3} parent=0 // pred_check_branch
    %37 = sbr.rel (0) target = $region29
  $region28: #{detr_forward.3} parent=0 // pred_region
    _
  $region29: #{detr_forward.3} parent=0 // pred_fallthru
    _
  // Predicated region
  $region30: #{detr_forward.3} parent=0 // pred_check
    _
  $region31: #{detr_forward.3} parent=0 // pred_check_branch
    %39 = sbr.rel (0) target = $region33
  $region32: #{detr_forward.3} parent=0 // pred_region
    _
  $region33: #{detr_forward.3} parent=0 // pred_fallthru
    _
  // Predicated region
  $region34: #{detr_forward.3} parent=0 // pred_check
    _
  $region35: #{detr_forward.3} parent=0 // pred_check_branch
    %41 = sbr.rel (0) target = $region37
  $region36: #{detr_forward.3} parent=0 // pred_region
    _
  $region37: #{detr_forward.3} parent=0 // pred_fallthru
    _
  // Predicated region
  $region38: #{detr_forward.3} parent=0 // pred_check
    _
  $region39: #{detr_forward.3} parent=0 // pred_check_branch
    %43 = sbr.rel (0) target = $region41
  $region40: #{detr_forward.3} parent=0 // pred_region
    _
  $region41: #{detr_forward.3} parent=0 // pred_fallthru
    _
  // Predicated region
  $region42: #{detr_forward.3} parent=0 // pred_check
    _
  $region43: #{detr_forward.3} parent=0 // pred_check_branch
    %45 = sbr.rel (0) target = $region45
  $region44: #{detr_forward.3} parent=0 // pred_region
    _
  $region45: #{detr_forward.3} parent=0 // pred_fallthru
    _
  // Predicated region
  $region46: #{detr_forward.3} parent=0 // pred_check
    _
  $region47: #{detr_forward.3} parent=0 // pred_check_branch
    %47 = sbr.rel (0) target = $region49
  $region48: #{detr_forward.3} parent=0 // pred_region
    _
  $region49: #{detr_forward.3} parent=0 // pred_fallthru
    _
  // Predicated region
  $region50: #{detr_forward.3} parent=0 // pred_check
    _
  $region51: #{detr_forward.3} parent=0 // pred_check_branch
    %49 = sbr.rel (0) target = $region53
  $region52: #{detr_forward.3} parent=0 // pred_region
    _
  $region53: #{detr_forward.3} parent=0 // pred_fallthru
    _
  // Predicated region
  $region54: #{detr_forward.3} parent=0 // pred_check
    _
  $region55: #{detr_forward.3} parent=0 // pred_check_branch
    %51 = sbr.rel (0) target = $region57
  $region56: #{detr_forward.3} parent=0 // pred_region
    _
  $region57: #{detr_forward.3} parent=0 // pred_fallthru
    _
  // Predicated region
  $region58: #{detr_forward.3} parent=0 // pred_check
    _
  $region59: #{detr_forward.3} parent=0 // pred_check_branch
    %53 = sbr.rel (0) target = $region61
  $region60: #{detr_forward.3} parent=0 // pred_region
    _
  $region61: #{detr_forward.3} parent=0 // pred_fallthru
    _
  // Predicated region
  $region62: #{detr_forward.3} parent=0 // pred_check
    _
  $region63: #{detr_forward.3} parent=0 // pred_check_branch
    %55 = sbr.rel (0) target = $region65
  $region64: #{detr_forward.3} parent=0 // pred_region
    _
  $region65: #{detr_forward.3} parent=0 // pred_fallthru
    _
  // Predicated region
  $region66: #{detr_forward.3} parent=0 // pred_check
    _
  $region67: #{detr_forward.3} parent=0 // pred_check_branch
    %57 = sbr.rel (0) target = $region69
  $region68: #{detr_forward.3} parent=0 // pred_region
    _
  $region69: #{detr_forward.3} parent=0 // pred_fallthru
    _
  // Predicated region
  $region70: #{detr_forward.3} parent=0 // pred_check
    _
  $region71: #{detr_forward.3} parent=0 // pred_check_branch
    %59 = sbr.rel (0) target = $region73
  $region72: #{detr_forward.3} parent=0 // pred_region
    _
  $region73: #{detr_forward.3} parent=0 // pred_fallthru
    _
  // Predicated region
  $region74: #{detr_forward.3} parent=0 // pred_check
    _
  $region75: #{detr_forward.3} parent=0 // pred_check_branch
    %61 = sbr.rel (0) target = $region77
  $region76: #{detr_forward.3} parent=0 // pred_region
    _
  $region77: #{detr_forward.3} parent=0 // pred_fallthru
    _
  %v62 = vld [vmem:[%s0] sm:$0xff]
  %v63 = vld [vmem:[%s0 + $0x8] sm:$0xff]
  %v64 = vld [vmem:[%s2] sm:$0xff]
  %v65 = vld [vmem:[%s3] sm:$0x1]
  %v67 = vlaneseq
  %v68 = vshrl.u32 %v67, 7
  %v69 = vsub.s32 0, %v68
  %v70 = vrot.slane %v65, %v69
  %vm72 = vcmask 64512
  %v74 = vsel %vm72, %v62, 0
  %v77 = vsel %vm72, %v63, 0
  %79 = vmatprep.subr.mxu0 0.0
  %80 = vmatpush1.msra.mxu0 %v64
  %81 = vmatprep.subr.mxu0 0.0
  %82 = vmatpush1.msra.mxu0 0.0
  %83 = vmatprep.subr.mxu0 0.0
  %84 = vmatpush1.msra.mxu0 0.0
  %85 = vmatprep.subr.mxu0 0.0
  %86 = vmatpush1.msra.mxu0 0.0
  %87 = vmatprep.subr.mxu0 0.0
  %88 = vmatpush1.msra.mxu0 0.0
  %89 = vmatprep.subr.mxu0 0.0
  %90 = vmatpush1.msra.mxu0 0.0
  %91 = vmatprep.subr.mxu0 0.0
  %92 = vmatpush1.msra.mxu0 0.0
  %93 = vmatprep.subr.mxu0 0.0
  %94 = vmatpush1.msra.mxu0 0.0
  %95 = vmatprep.subr.mxu0 0.0
  %96 = vmatpush1.msra.mxu0 0.0
  %97 = vmatprep.subr.mxu0 0.0
  %98 = vmatpush1.msra.mxu0 0.0
  %99 = vmatprep.subr.mxu0 0.0
  %100 = vmatpush1.msra.mxu0 0.0
  %101 = vmatprep.subr.mxu0 0.0
  %102 = vmatpush1.msra.mxu0 0.0
  %103 = vmatprep.subr.mxu0 0.0
  %104 = vmatpush1.msra.mxu0 0.0
  %105 = vmatprep.subr.mxu0 0.0
  %106 = vmatpush1.msra.mxu0 0.0
  %107 = vmatprep.subr.mxu0 0.0
  %108 = vmatpush1.msra.mxu0 0.0
  %109 = vmatprep.subr.mxu0 0.0
  %110 = vmatpush1.msra.mxu0 0.0
  %111 = vmatprep.subr.mxu0 0.0
  %112 = vmatpush1.msra.mxu0 0.0
  %113 = vmatprep.subr.mxu0 0.0
  %114 = vmatpush1.msra.mxu0 0.0
  %115 = vmatprep.subr.mxu0 0.0
  %116 = vmatpush1.msra.mxu0 0.0
  %117 = vmatprep.subr.mxu0 0.0
  %118 = vmatpush1.msra.mxu0 0.0
  %119 = vmatprep.subr.mxu0 0.0
  %120 = vmatpush1.msra.mxu0 0.0
  %121 = vmatprep.subr.mxu0 0.0
  %122 = vmatpush1.msra.mxu0 0.0
  %123 = vmatprep.subr.mxu0 0.0
  %124 = vmatpush1.msra.mxu0 0.0
  %125 = vmatprep.subr.mxu0 0.0
  %126 = vmatpush1.msra.mxu0 0.0
  %127 = vmatprep.subr.mxu0 0.0
  %128 = vmatpush1.msra.mxu0 0.0
  %129 = vmatprep.subr.mxu0 0.0
  %130 = vmatpush1.msra.mxu0 0.0
  %131 = vmatprep.subr.mxu0 0.0
  %132 = vmatpush1.msra.mxu0 0.0
  %133 = vmatprep.subr.mxu0 0.0
  %134 = vmatpush1.msra.mxu0 0.0
  %135 = vmatprep.subr.mxu0 0.0
  %136 = vmatpush1.msra.mxu0 0.0
  %137 = vmatprep.subr.mxu0 0.0
  %138 = vmatpush1.msra.mxu0 0.0
  %139 = vmatprep.subr.mxu0 0.0
  %140 = vmatpush1.msra.mxu0 0.0
  %141 = vmatprep.subr.mxu0 0.0
  %142 = vmatpush1.msra.mxu0 0.0
  %143 = vmatprep.mubr.f32.mxu0 0.0
  %144 = vmatmul.mubr.f32.gmra.mrb[0].mxu0 %v74
  %v145 = vpop.f32.mrb[0].mxu0
  %v146 = vadd.f32 %v70, %v145
  %v147 = vpop.f32.mrb[0].mxu0
  %148 = vmatprep.mubr.f32.mxu0 0.0
  %149 = vmatmul.mubr.f32.gmra.mrb[0].mxu0 %v77
  %v150 = vpop.f32.mrb[0].mxu0
  %v151 = vadd.f32 %v70, %v150
  %v152 = vpop.f32.mrb[0].mxu0
  %153 = vdwg.mxu0
  %v154 = vmax.f32 %v146, 0.0
  %v155 = vmax.f32 %v151, 0.0
  %v156 = vld [vmem:[%s4] sm:$0xff]
  %v157 = vld [vmem:[%s4 + $0x8] sm:$0xff]
  %v158 = vld [vmem:[%s5] sm:$0x1]
  %v160 = vlaneseq
  %v161 = vshrl.u32 %v160, 7
  %v162 = vsub.s32 0, %v161
  %v163 = vrot.slane %v158, %v162
  %vm165 = vcmask 130048
  %v167 = vsel %vm165, %v154, 0
  %v170 = vsel %vm165, %v155, 0
  %172 = vmatprep.subr.mxu0 0.0
  %173 = vmatpush1.msra.mxu0 %v156
  %174 = vmatprep.subr.mxu0 0.0
  %175 = vmatpush1.msra.mxu0 %v157
  %176 = vmatprep.subr.mxu0 0.0
  %177 = vmatpush1.msra.mxu0 0.0
  %178 = vmatprep.subr.mxu0 0.0
  %179 = vmatpush1.msra.mxu0 0.0
  %180 = vmatprep.subr.mxu0 0.0
  %181 = vmatpush1.msra.mxu0 0.0
  %182 = vmatprep.subr.mxu0 0.0
  %183 = vmatpush1.msra.mxu0 0.0
  %184 = vmatprep.subr.mxu0 0.0
  %185 = vmatpush1.msra.mxu0 0.0
  %186 = vmatprep.subr.mxu0 0.0
  %187 = vmatpush1.msra.mxu0 0.0
  %188 = vmatprep.subr.mxu0 0.0
  %189 = vmatpush1.msra.mxu0 0.0
  %190 = vmatprep.subr.mxu0 0.0
  %191 = vmatpush1.msra.mxu0 0.0
  %192 = vmatprep.subr.mxu0 0.0
  %193 = vmatpush1.msra.mxu0 0.0
  %194 = vmatprep.subr.mxu0 0.0
  %195 = vmatpush1.msra.mxu0 0.0
  %196 = vmatprep.subr.mxu0 0.0
  %197 = vmatpush1.msra.mxu0 0.0
  %198 = vmatprep.subr.mxu0 0.0
  %199 = vmatpush1.msra.mxu0 0.0
  %200 = vmatprep.subr.mxu0 0.0
  %201 = vmatpush1.msra.mxu0 0.0
  %202 = vmatprep.subr.mxu0 0.0
  %203 = vmatpush1.msra.mxu0 0.0
  %204 = vmatprep.subr.mxu0 0.0
  %205 = vmatpush1.msra.mxu0 0.0
  %206 = vmatprep.subr.mxu0 0.0
  %207 = vmatpush1.msra.mxu0 0.0
  %208 = vmatprep.subr.mxu0 0.0
  %209 = vmatpush1.msra.mxu0 0.0
  %210 = vmatprep.subr.mxu0 0.0
  %211 = vmatpush1.msra.mxu0 0.0
  %212 = vmatprep.subr.mxu0 0.0
  %213 = vmatpush1.msra.mxu0 0.0
  %214 = vmatprep.subr.mxu0 0.0
  %215 = vmatpush1.msra.mxu0 0.0
  %216 = vmatprep.subr.mxu0 0.0
  %217 = vmatpush1.msra.mxu0 0.0
  %218 = vmatprep.subr.mxu0 0.0
  %219 = vmatpush1.msra.mxu0 0.0
  %220 = vmatprep.subr.mxu0 0.0
  %221 = vmatpush1.msra.mxu0 0.0
  %222 = vmatprep.subr.mxu0 0.0
  %223 = vmatpush1.msra.mxu0 0.0
  %224 = vmatprep.subr.mxu0 0.0
  %225 = vmatpush1.msra.mxu0 0.0
  %226 = vmatprep.subr.mxu0 0.0
  %227 = vmatpush1.msra.mxu0 0.0
  %228 = vmatprep.subr.mxu0 0.0
  %229 = vmatpush1.msra.mxu0 0.0
  %230 = vmatprep.subr.mxu0 0.0
  %231 = vmatpush1.msra.mxu0 0.0
  %232 = vmatprep.subr.mxu0 0.0
  %233 = vmatpush1.msra.mxu0 0.0
  %234 = vmatprep.subr.mxu0 0.0
  %235 = vmatpush1.msra.mxu0 0.0
  %236 = vmatprep.mubr.f32.mxu0 0.0
  %237 = vmatmul.mubr.f32.gmra.mrb[0].mxu0 %v167
  %v238 = vpop.f32.mrb[0].mxu0
  %v239 = vadd.f32 %v163, %v238
  %v240 = vpop.f32.mrb[0].mxu0
  %241 = vmatprep.mubr.f32.mxu0 0.0
  %242 = vmatmul.mubr.f32.gmra.mrb[0].mxu0 %v170
  %v243 = vpop.f32.mrb[0].mxu0
  %v244 = vadd.f32 %v163, %v243
  %v245 = vpop.f32.mrb[0].mxu0
  %246 = vdwg.mxu0
  %v247 = vmax.f32 %v239, 0.0
  %v248 = vmax.f32 %v244, 0.0
  %v249 = vld [vmem:[%s6] sm:$0xff]
  %v250 = vld [vmem:[%s6 + $0x8] sm:$0xff]
  %v251 = vld [vmem:[%s7] sm:$0x1]
  %v253 = vlaneseq
  %v254 = vshrl.u32 %v253, 7
  %v255 = vsub.s32 0, %v254
  %v256 = vrot.slane %v251, %v255
  %v259 = vsel %vm165, %v247, 0
  %v262 = vsel %vm165, %v248, 0
  %264 = vmatprep.subr.mxu0 0.0
  %265 = vmatpush1.msra.mxu0 %v249
  %266 = vmatprep.subr.mxu0 0.0
  %267 = vmatpush1.msra.mxu0 %v250
  %268 = vmatprep.subr.mxu0 0.0
  %269 = vmatpush1.msra.mxu0 0.0
  %270 = vmatprep.subr.mxu0 0.0
  %271 = vmatpush1.msra.mxu0 0.0
  %272 = vmatprep.subr.mxu0 0.0
  %273 = vmatpush1.msra.mxu0 0.0
  %274 = vmatprep.subr.mxu0 0.0
  %275 = vmatpush1.msra.mxu0 0.0
  %276 = vmatprep.subr.mxu0 0.0
  %277 = vmatpush1.msra.mxu0 0.0
  %278 = vmatprep.subr.mxu0 0.0
  %279 = vmatpush1.msra.mxu0 0.0
  %280 = vmatprep.subr.mxu0 0.0
  %281 = vmatpush1.msra.mxu0 0.0
  %282 = vmatprep.subr.mxu0 0.0
  %283 = vmatpush1.msra.mxu0 0.0
  %284 = vmatprep.subr.mxu0 0.0
  %285 = vmatpush1.msra.mxu0 0.0
  %286 = vmatprep.subr.mxu0 0.0
  %287 = vmatpush1.msra.mxu0 0.0
  %288 = vmatprep.subr.mxu0 0.0
  %289 = vmatpush1.msra.mxu0 0.0
  %290 = vmatprep.subr.mxu0 0.0
  %291 = vmatpush1.msra.mxu0 0.0
  %292 = vmatprep.subr.mxu0 0.0
  %293 = vmatpush1.msra.mxu0 0.0
  %294 = vmatprep.subr.mxu0 0.0
  %295 = vmatpush1.msra.mxu0 0.0
  %296 = vmatprep.subr.mxu0 0.0
  %297 = vmatpush1.msra.mxu0 0.0
  %298 = vmatprep.subr.mxu0 0.0
  %299 = vmatpush1.msra.mxu0 0.0
  %300 = vmatprep.subr.mxu0 0.0
  %301 = vmatpush1.msra.mxu0 0.0
  %302 = vmatprep.subr.mxu0 0.0
  %303 = vmatpush1.msra.mxu0 0.0
  %304 = vmatprep.subr.mxu0 0.0
  %305 = vmatpush1.msra.mxu0 0.0
  %306 = vmatprep.subr.mxu0 0.0
  %307 = vmatpush1.msra.mxu0 0.0
  %308 = vmatprep.subr.mxu0 0.0
  %309 = vmatpush1.msra.mxu0 0.0
  %310 = vmatprep.subr.mxu0 0.0
  %311 = vmatpush1.msra.mxu0 0.0
  %312 = vmatprep.subr.mxu0 0.0
  %313 = vmatpush1.msra.mxu0 0.0
  %314 = vmatprep.subr.mxu0 0.0
  %315 = vmatpush1.msra.mxu0 0.0
  %316 = vmatprep.subr.mxu0 0.0
  %317 = vmatpush1.msra.mxu0 0.0
  %318 = vmatprep.subr.mxu0 0.0
  %319 = vmatpush1.msra.mxu0 0.0
  %320 = vmatprep.subr.mxu0 0.0
  %321 = vmatpush1.msra.mxu0 0.0
  %322 = vmatprep.subr.mxu0 0.0
  %323 = vmatpush1.msra.mxu0 0.0
  %324 = vmatprep.subr.mxu0 0.0
  %325 = vmatpush1.msra.mxu0 0.0
  %326 = vmatprep.subr.mxu0 0.0
  %327 = vmatpush1.msra.mxu0 0.0
  %328 = vmatprep.mubr.f32.mxu0 0.0
  %329 = vmatmul.mubr.f32.gmra.mrb[0].mxu0 %v259
  %v330 = vpop.f32.mrb[0].mxu0
  %v331 = vadd.f32 %v256, %v330
  %v332 = vpop.f32.mrb[0].mxu0
  %333 = vmatprep.mubr.f32.mxu0 0.0
  %334 = vmatmul.mubr.f32.gmra.mrb[0].mxu0 %v262
  %v335 = vpop.f32.mrb[0].mxu0
  %v336 = vadd.f32 %v256, %v335
  %v337 = vpop.f32.mrb[0].mxu0
  %338 = vdwg.mxu0
  %v339 = vld [vmem:[%s1] sm:$0xff]
  %v340 = vld [vmem:[%s1 + $0x8] sm:$0xff]
  %v341 = vld [vmem:[%s1 + $0x10] sm:$0xff]
  %v342 = vld [vmem:[%s1 + $0x18] sm:$0xff]
  %v343 = vld [vmem:[%s1 + $0x20] sm:$0xff]
  %v344 = vld [vmem:[%s1 + $0x28] sm:$0xff]
  %v345 = vld [vmem:[%s1 + $0x30] sm:$0xff]
  %v346 = vld [vmem:[%s1 + $0x38] sm:$0xff]
  %v347 = vld [vmem:[%s1 + $0x40] sm:$0xff]
  %v348 = vld [vmem:[%s1 + $0x48] sm:$0xff]
  %v349 = vld [vmem:[%s1 + $0x50] sm:$0xff]
  %v350 = vld [vmem:[%s1 + $0x58] sm:$0xff]
  %v351 = vld [vmem:[%s1 + $0x60] sm:$0xff]
  %v352 = vld [vmem:[%s1 + $0x68] sm:$0xff]
  %v353 = vld [vmem:[%s1 + $0x70] sm:$0xff]
  %v354 = vld [vmem:[%s1 + $0x78] sm:$0xff]
  %v355 = vld [vmem:[%s1 + $0x80] sm:$0xff]
  %v356 = vld [vmem:[%s1 + $0x88] sm:$0xff]
  %v357 = vld [vmem:[%s1 + $0x90] sm:$0xff]
  %v358 = vld [vmem:[%s1 + $0x98] sm:$0xff]
  %v359 = vld [vmem:[%s1 + $0xa0] sm:$0xff]
  %v360 = vld [vmem:[%s1 + $0xa8] sm:$0xff]
  %v361 = vld [vmem:[%s1 + $0xb0] sm:$0xff]
  %v362 = vld [vmem:[%s1 + $0xb8] sm:$0xff]
  %v363 = vld [vmem:[%s1 + $0xc0] sm:$0xff]
  %v364 = vld [vmem:[%s1 + $0xc8] sm:$0xff]
  %v365 = vld [vmem:[%s1 + $0xd0] sm:$0xff]
  %v366 = vld [vmem:[%s1 + $0xd8] sm:$0xff]
  %v367 = vld [vmem:[%s1 + $0xe0] sm:$0xff]
  %v368 = vld [vmem:[%s1 + $0xe8] sm:$0xff]
  %v369 = vld [vmem:[%s1 + $0xf0] sm:$0xff]
  %v370 = vld [vmem:[%s1 + $0xf8] sm:$0xff]
  %v371 = vld [vmem:[%s1 + $0x100] sm:$0xff]
  %v372 = vld [vmem:[%s1 + $0x108] sm:$0xff]
  %v373 = vld [vmem:[%s1 + $0x110] sm:$0xff]
  %v374 = vld [vmem:[%s1 + $0x118] sm:$0xff]
  %v375 = vld [vmem:[%s1 + $0x120] sm:$0xff]
  %v376 = vld [vmem:[%s1 + $0x128] sm:$0xff]
  %v377 = vld [vmem:[%s1 + $0x130] sm:$0xff]
  %v378 = vld [vmem:[%s1 + $0x138] sm:$0xff]
  %v379 = vld [vmem:[%s1 + $0x140] sm:$0xff]
  %v380 = vld [vmem:[%s1 + $0x148] sm:$0xff]
  %v381 = vld [vmem:[%s1 + $0x150] sm:$0xff]
  %v382 = vld [vmem:[%s1 + $0x158] sm:$0xff]
  %v383 = vld [vmem:[%s1 + $0x160] sm:$0xff]
  %v384 = vld [vmem:[%s1 + $0x168] sm:$0xff]
  %v385 = vld [vmem:[%s1 + $0x170] sm:$0xff]
  %v386 = vld [vmem:[%s1 + $0x178] sm:$0xff]
  %v387 = vld [vmem:[%s1 + $0x180] sm:$0xff]
  %v388 = vld [vmem:[%s1 + $0x188] sm:$0xff]
  %v389 = vld [vmem:[%s1 + $0x190] sm:$0xff]
  %v390 = vld [vmem:[%s1 + $0x198] sm:$0xff]
  %v391 = vld [vmem:[%s1 + $0x1a0] sm:$0xff]
  %v392 = vld [vmem:[%s1 + $0x1a8] sm:$0xff]
  %v393 = vld [vmem:[%s1 + $0x1b0] sm:$0xff]
  %v394 = vld [vmem:[%s1 + $0x1b8] sm:$0xff]
  %v395 = vld [vmem:[%s1 + $0x1c0] sm:$0xff]
  %v396 = vld [vmem:[%s1 + $0x1c8] sm:$0xff]
  %v397 = vld [vmem:[%s1 + $0x1d0] sm:$0xff]
  %v398 = vld [vmem:[%s1 + $0x1d8] sm:$0xff]
  %v399 = vld [vmem:[%s1 + $0x1e0] sm:$0xff]
  %v400 = vld [vmem:[%s1 + $0x1e8] sm:$0xff]
  %v401 = vld [vmem:[%s1 + $0x1f0] sm:$0xff]
  %v402 = vld [vmem:[%s1 + $0x1f8] sm:$0xff]
  %v403 = vld [vmem:[%s1 + $0x200] sm:$0xff]
  %v404 = vld [vmem:[%s1 + $0x208] sm:$0xff]
  %v405 = vld [vmem:[%s1 + $0x210] sm:$0xff]
  %v406 = vld [vmem:[%s1 + $0x218] sm:$0xff]
  %v407 = vld [vmem:[%s1 + $0x220] sm:$0xff]
  %v408 = vld [vmem:[%s1 + $0x228] sm:$0xff]
  %v409 = vld [vmem:[%s1 + $0x230] sm:$0xff]
  %v410 = vld [vmem:[%s1 + $0x238] sm:$0xff]
  %v411 = vld [vmem:[%s1 + $0x240] sm:$0xff]
  %v412 = vld [vmem:[%s1 + $0x248] sm:$0xff]
  %v413 = vld [vmem:[%s1 + $0x250] sm:$0xff]
  %v414 = vld [vmem:[%s1 + $0x258] sm:$0xff]
  %v415 = vld [vmem:[%s1 + $0x260] sm:$0xff]
  %v416 = vld [vmem:[%s1 + $0x268] sm:$0xff]
  %v417 = vld [vmem:[%s1 + $0x270] sm:$0xff]
  %v418 = vld [vmem:[%s1 + $0x278] sm:$0xff]
  %v419 = vld [vmem:[%s1 + $0x280] sm:$0xff]
  %v420 = vld [vmem:[%s1 + $0x288] sm:$0xff]
  %v421 = vld [vmem:[%s1 + $0x290] sm:$0xff]
  %v422 = vld [vmem:[%s1 + $0x298] sm:$0xff]
  %v423 = vld [vmem:[%s1 + $0x2a0] sm:$0xff]
  %v424 = vld [vmem:[%s1 + $0x2a8] sm:$0xff]
  %v425 = vld [vmem:[%s1 + $0x2b0] sm:$0xff]
  %v426 = vld [vmem:[%s1 + $0x2b8] sm:$0xff]
  %v427 = vld [vmem:[%s1 + $0x2c0] sm:$0xff]
  %v428 = vld [vmem:[%s1 + $0x2c8] sm:$0xff]
  %v429 = vld [vmem:[%s1 + $0x2d0] sm:$0xff]
  %v430 = vld [vmem:[%s1 + $0x2d8] sm:$0xff]
  %v431 = vld [vmem:[%s1 + $0x2e0] sm:$0xff]
  %v432 = vld [vmem:[%s1 + $0x2e8] sm:$0xff]
  %v433 = vld [vmem:[%s1 + $0x2f0] sm:$0xff]
  %v434 = vld [vmem:[%s1 + $0x2f8] sm:$0xff]
  %v435 = vld [vmem:[%s1 + $0x300] sm:$0xff]
  %v436 = vld [vmem:[%s1 + $0x308] sm:$0xff]
  %v437 = vld [vmem:[%s1 + $0x310] sm:$0xff]
  %v438 = vld [vmem:[%s1 + $0x318] sm:$0xff]
  %v439 = vld [vmem:[%s1 + $0x320] sm:$0xff]
  %v440 = vld [vmem:[%s1 + $0x328] sm:$0xff]
  %v441 = vld [vmem:[%s1 + $0x330] sm:$0xff]
  %v442 = vld [vmem:[%s1 + $0x338] sm:$0xff]
  %v443 = vld [vmem:[%s1 + $0x340] sm:$0xff]
  %v444 = vld [vmem:[%s1 + $0x348] sm:$0xff]
  %v445 = vld [vmem:[%s1 + $0x350] sm:$0xff]
  %v446 = vld [vmem:[%s1 + $0x358] sm:$0xff]
  %v447 = vld [vmem:[%s1 + $0x360] sm:$0xff]
  %v448 = vld [vmem:[%s1 + $0x368] sm:$0xff]
  %v449 = vld [vmem:[%s1 + $0x370] sm:$0xff]
  %v450 = vld [vmem:[%s1 + $0x378] sm:$0xff]
  %v451 = vld [vmem:[%s1 + $0x380] sm:$0xff]
  %v452 = vld [vmem:[%s1 + $0x388] sm:$0xff]
  %v453 = vld [vmem:[%s1 + $0x390] sm:$0xff]
  %v454 = vld [vmem:[%s1 + $0x398] sm:$0xff]
  %v455 = vld [vmem:[%s1 + $0x3a0] sm:$0xff]
  %v456 = vld [vmem:[%s1 + $0x3a8] sm:$0xff]
  %v457 = vld [vmem:[%s1 + $0x3b0] sm:$0xff]
  %v458 = vld [vmem:[%s1 + $0x3b8] sm:$0xff]
  %v459 = vld [vmem:[%s1 + $0x3c0] sm:$0xff]
  %v460 = vld [vmem:[%s1 + $0x3c8] sm:$0xff]
  %v461 = vld [vmem:[%s1 + $0x3d0] sm:$0xff]
  %v462 = vld [vmem:[%s1 + $0x3d8] sm:$0xff]
  %v463 = vld [vmem:[%s1 + $0x3e0] sm:$0xff]
  %v464 = vld [vmem:[%s1 + $0x3e8] sm:$0xff]
  %v465 = vld [vmem:[%s1 + $0x3f0] sm:$0xff]
  %v466 = vld [vmem:[%s1 + $0x3f8] sm:$0xff]
  %v467 = vld [vmem:[%s8] sm:$0xff]
  %v468 = vld [vmem:[%s8 + $0x8] sm:$0xff]
  %v469 = vld [vmem:[%s8 + $0x10] sm:$0xff]
  %v470 = vld [vmem:[%s8 + $0x18] sm:$0xff]
  %v471 = vld [vmem:[%s9] sm:$0x1]
  %v473 = vlaneseq
  %v474 = vshrl.u32 %v473, 7
  %v475 = vsub.s32 0, %v474
  %v476 = vrot.slane %v471, %v475
  %vm478 = vcmask 261120
  %v480 = vsel %vm478, %v331, 0
  %v483 = vsel %vm478, %v336, 0
  %485 = vmatprep.subr.mxu0 0.0
  %486 = vmatpush1.msra.mxu0 %v467
  %487 = vmatprep.subr.mxu0 0.0
  %488 = vmatpush1.msra.mxu0 %v468
  %489 = vmatprep.subr.mxu0 0.0
  %490 = vmatpush1.msra.mxu0 %v469
  %491 = vmatprep.subr.mxu0 0.0
  %492 = vmatpush1.msra.mxu0 %v470
  %493 = vmatprep.subr.mxu0 0.0
  %494 = vmatpush1.msra.mxu0 0.0
  %495 = vmatprep.subr.mxu0 0.0
  %496 = vmatpush1.msra.mxu0 0.0
  %497 = vmatprep.subr.mxu0 0.0
  %498 = vmatpush1.msra.mxu0 0.0
  %499 = vmatprep.subr.mxu0 0.0
  %500 = vmatpush1.msra.mxu0 0.0
  %501 = vmatprep.subr.mxu0 0.0
  %502 = vmatpush1.msra.mxu0 0.0
  %503 = vmatprep.subr.mxu0 0.0
  %504 = vmatpush1.msra.mxu0 0.0
  %505 = vmatprep.subr.mxu0 0.0
  %506 = vmatpush1.msra.mxu0 0.0
  %507 = vmatprep.subr.mxu0 0.0
  %508 = vmatpush1.msra.mxu0 0.0
  %509 = vmatprep.subr.mxu0 0.0
  %510 = vmatpush1.msra.mxu0 0.0
  %511 = vmatprep.subr.mxu0 0.0
  %512 = vmatpush1.msra.mxu0 0.0
  %513 = vmatprep.subr.mxu0 0.0
  %514 = vmatpush1.msra.mxu0 0.0
  %515 = vmatprep.subr.mxu0 0.0
  %516 = vmatpush1.msra.mxu0 0.0
  %517 = vmatprep.subr.mxu0 0.0
  %518 = vmatpush1.msra.mxu0 0.0
  %519 = vmatprep.subr.mxu0 0.0
  %520 = vmatpush1.msra.mxu0 0.0
  %521 = vmatprep.subr.mxu0 0.0
  %522 = vmatpush1.msra.mxu0 0.0
  %523 = vmatprep.subr.mxu0 0.0
  %524 = vmatpush1.msra.mxu0 0.0
  %525 = vmatprep.subr.mxu0 0.0
  %526 = vmatpush1.msra.mxu0 0.0
  %527 = vmatprep.subr.mxu0 0.0
  %528 = vmatpush1.msra.mxu0 0.0
  %529 = vmatprep.subr.mxu0 0.0
  %530 = vmatpush1.msra.mxu0 0.0
  %531 = vmatprep.subr.mxu0 0.0
  %532 = vmatpush1.msra.mxu0 0.0
  %533 = vmatprep.subr.mxu0 0.0
  %534 = vmatpush1.msra.mxu0 0.0
  %535 = vmatprep.subr.mxu0 0.0
  %536 = vmatpush1.msra.mxu0 0.0
  %537 = vmatprep.subr.mxu0 0.0
  %538 = vmatpush1.msra.mxu0 0.0
  %539 = vmatprep.subr.mxu0 0.0
  %540 = vmatpush1.msra.mxu0 0.0
  %541 = vmatprep.subr.mxu0 0.0
  %542 = vmatpush1.msra.mxu0 0.0
  %543 = vmatprep.subr.mxu0 0.0
  %544 = vmatpush1.msra.mxu0 0.0
  %545 = vmatprep.subr.mxu0 0.0
  %546 = vmatpush1.msra.mxu0 0.0
  %547 = vmatprep.subr.mxu0 0.0
  %548 = vmatpush1.msra.mxu0 0.0
  %549 = vmatprep.mubr.f32.mxu0 0.0
  %550 = vmatmul.mubr.f32.gmra.mrb[0].mxu0 %v480
  %v551 = vpop.f32.mrb[0].mxu0
  %v552 = vadd.f32 %v476, %v551
  %v553 = vpop.f32.mrb[0].mxu0
  %554 = vmatprep.mubr.f32.mxu0 0.0
  %555 = vmatmul.mubr.f32.gmra.mrb[0].mxu0 %v483
  %v556 = vpop.f32.mrb[0].mxu0
  %v557 = vadd.f32 %v476, %v556
  %v558 = vpop.f32.mrb[0].mxu0
  %559 = vdwg.mxu0
  %v561 = vsel %vm478, %v552, 0
  %v564 = vsel %vm478, %v339, 0
  %v567 = vsel %vm478, %v341, 0
  %v570 = vsel %vm478, %v343, 0
  %v573 = vsel %vm478, %v345, 0
  %v576 = vsel %vm478, %v347, 0
  %v579 = vsel %vm478, %v349, 0
  %v582 = vsel %vm478, %v351, 0
  %v585 = vsel %vm478, %v353, 0
  %v588 = vsel %vm478, %v355, 0
  %v591 = vsel %vm478, %v357, 0
  %v594 = vsel %vm478, %v359, 0
  %v597 = vsel %vm478, %v361, 0
  %v600 = vsel %vm478, %v363, 0
  %v603 = vsel %vm478, %v365, 0
  %v606 = vsel %vm478, %v367, 0
  %v609 = vsel %vm478, %v369, 0
  %v612 = vsel %vm478, %v371, 0
  %v615 = vsel %vm478, %v373, 0
  %v618 = vsel %vm478, %v375, 0
  %v621 = vsel %vm478, %v377, 0
  %v624 = vsel %vm478, %v379, 0
  %v627 = vsel %vm478, %v381, 0
  %v630 = vsel %vm478, %v383, 0
  %v633 = vsel %vm478, %v385, 0
  %v636 = vsel %vm478, %v387, 0
  %v639 = vsel %vm478, %v389, 0
  %v642 = vsel %vm478, %v391, 0
  %v645 = vsel %vm478, %v393, 0
  %v648 = vsel %vm478, %v395, 0
  %v651 = vsel %vm478, %v397, 0
  %v654 = vsel %vm478, %v399, 0
  %v657 = vsel %vm478, %v401, 0
  %659 = vmatprep.subr.mxu0 0.0
  %660 = vmatpush1.xpose.msra.mxu0 %v564
  %661 = vmatprep.subr.mxu0 0.0
  %662 = vmatpush1.xpose.msra.mxu0 %v567
  %663 = vmatprep.subr.mxu0 0.0
  %664 = vmatpush1.xpose.msra.mxu0 %v570
  %665 = vmatprep.subr.mxu0 0.0
  %666 = vmatpush1.xpose.msra.mxu0 %v573
  %667 = vmatprep.subr.mxu0 0.0
  %668 = vmatpush1.xpose.msra.mxu0 %v576
  %669 = vmatprep.subr.mxu0 0.0
  %670 = vmatpush1.xpose.msra.mxu0 %v579
  %671 = vmatprep.subr.mxu0 0.0
  %672 = vmatpush1.xpose.msra.mxu0 %v582
  %673 = vmatprep.subr.mxu0 0.0
  %674 = vmatpush1.xpose.msra.mxu0 %v585
  %675 = vmatprep.subr.mxu0 0.0
  %676 = vmatpush1.xpose.msra.mxu0 %v588
  %677 = vmatprep.subr.mxu0 0.0
  %678 = vmatpush1.xpose.msra.mxu0 %v591
  %679 = vmatprep.subr.mxu0 0.0
  %680 = vmatpush1.xpose.msra.mxu0 %v594
  %681 = vmatprep.subr.mxu0 0.0
  %682 = vmatpush1.xpose.msra.mxu0 %v597
  %683 = vmatprep.subr.mxu0 0.0
  %684 = vmatpush1.xpose.msra.mxu0 %v600
  %685 = vmatprep.subr.mxu0 0.0
  %686 = vmatpush1.xpose.msra.mxu0 %v603
  %687 = vmatprep.subr.mxu0 0.0
  %688 = vmatpush1.xpose.msra.mxu0 %v606
  %689 = vmatprep.subr.mxu0 0.0
  %690 = vmatpush1.xpose.msra.mxu0 %v609
  %691 = vmatprep.subr.mxu0 0.0
  %692 = vmatpush1.xpose.msra.mxu0 %v612
  %693 = vmatprep.subr.mxu0 0.0
  %694 = vmatpush1.xpose.msra.mxu0 %v615
  %695 = vmatprep.subr.mxu0 0.0
  %696 = vmatpush1.xpose.msra.mxu0 %v618
  %697 = vmatprep.subr.mxu0 0.0
  %698 = vmatpush1.xpose.msra.mxu0 %v621
  %699 = vmatprep.subr.mxu0 0.0
  %700 = vmatpush1.xpose.msra.mxu0 %v624
  %701 = vmatprep.subr.mxu0 0.0
  %702 = vmatpush1.xpose.msra.mxu0 %v627
  %703 = vmatprep.subr.mxu0 0.0
  %704 = vmatpush1.xpose.msra.mxu0 %v630
  %705 = vmatprep.subr.mxu0 0.0
  %706 = vmatpush1.xpose.msra.mxu0 %v633
  %707 = vmatprep.subr.mxu0 0.0
  %708 = vmatpush1.xpose.msra.mxu0 %v636
  %709 = vmatprep.subr.mxu0 0.0
  %710 = vmatpush1.xpose.msra.mxu0 %v639
  %711 = vmatprep.subr.mxu0 0.0
  %712 = vmatpush1.xpose.msra.mxu0 %v642
  %713 = vmatprep.subr.mxu0 0.0
  %714 = vmatpush1.xpose.msra.mxu0 %v645
  %715 = vmatprep.subr.mxu0 0.0
  %716 = vmatpush1.xpose.msra.mxu0 %v648
  %717 = vmatprep.subr.mxu0 0.0
  %718 = vmatpush1.xpose.msra.mxu0 %v651
  %719 = vmatprep.subr.mxu0 0.0
  %720 = vmatpush1.xpose.msra.mxu0 %v654
  %721 = vmatprep.subr.mxu0 0.0
  %722 = vmatpush1.xpose.msra.mxu0 %v657
  %723 = vmatprep.mubr.f32.mxu0 0.0
  %724 = vmatmul.mubr.f32.gmra.mrb[0].mxu0 %v561
  %v725 = vpop.f32.mrb[0].mxu0
  %v726 = vadd.f32 0.0, %v725
  %v727 = vpop.f32.mrb[0].mxu0
  %v728 = vadd.f32 0.0, %v727
  %729 = vdwg.mxu0
  %v731 = vsel %vm478, %v557, 0
  %v734 = vsel %vm478, %v403, 0
  %v737 = vsel %vm478, %v405, 0
  %v740 = vsel %vm478, %v407, 0
  %v743 = vsel %vm478, %v409, 0
  %v746 = vsel %vm478, %v411, 0
  %v749 = vsel %vm478, %v413, 0
  %v752 = vsel %vm478, %v415, 0
  %v755 = vsel %vm478, %v417, 0
  %v758 = vsel %vm478, %v419, 0
  %v761 = vsel %vm478, %v421, 0
  %v764 = vsel %vm478, %v423, 0
  %v767 = vsel %vm478, %v425, 0
  %v770 = vsel %vm478, %v427, 0
  %v773 = vsel %vm478, %v429, 0
  %v776 = vsel %vm478, %v431, 0
  %v779 = vsel %vm478, %v433, 0
  %v782 = vsel %vm478, %v435, 0
  %v785 = vsel %vm478, %v437, 0
  %v788 = vsel %vm478, %v439, 0
  %v791 = vsel %vm478, %v441, 0
  %v794 = vsel %vm478, %v443, 0
  %v797 = vsel %vm478, %v445, 0
  %v800 = vsel %vm478, %v447, 0
  %v803 = vsel %vm478, %v449, 0
  %v806 = vsel %vm478, %v451, 0
  %v809 = vsel %vm478, %v453, 0
  %v812 = vsel %vm478, %v455, 0
  %v815 = vsel %vm478, %v457, 0
  %v818 = vsel %vm478, %v459, 0
  %v821 = vsel %vm478, %v461, 0
  %v824 = vsel %vm478, %v463, 0
  %v827 = vsel %vm478, %v465, 0
  %829 = vmatprep.subr.mxu0 0.0
  %830 = vmatpush1.xpose.msra.mxu0 %v734
  %831 = vmatprep.subr.mxu0 0.0
  %832 = vmatpush1.xpose.msra.mxu0 %v737
  %833 = vmatprep.subr.mxu0 0.0
  %834 = vmatpush1.xpose.msra.mxu0 %v740
  %835 = vmatprep.subr.mxu0 0.0
  %836 = vmatpush1.xpose.msra.mxu0 %v743
  %837 = vmatprep.subr.mxu0 0.0
  %838 = vmatpush1.xpose.msra.mxu0 %v746
  %839 = vmatprep.subr.mxu0 0.0
  %840 = vmatpush1.xpose.msra.mxu0 %v749
  %841 = vmatprep.subr.mxu0 0.0
  %842 = vmatpush1.xpose.msra.mxu0 %v752
  %843 = vmatprep.subr.mxu0 0.0
  %844 = vmatpush1.xpose.msra.mxu0 %v755
  %845 = vmatprep.subr.mxu0 0.0
  %846 = vmatpush1.xpose.msra.mxu0 %v758
  %847 = vmatprep.subr.mxu0 0.0
  %848 = vmatpush1.xpose.msra.mxu0 %v761
  %849 = vmatprep.subr.mxu0 0.0
  %850 = vmatpush1.xpose.msra.mxu0 %v764
  %851 = vmatprep.subr.mxu0 0.0
  %852 = vmatpush1.xpose.msra.mxu0 %v767
  %853 = vmatprep.subr.mxu0 0.0
  %854 = vmatpush1.xpose.msra.mxu0 %v770
  %855 = vmatprep.subr.mxu0 0.0
  %856 = vmatpush1.xpose.msra.mxu0 %v773
  %857 = vmatprep.subr.mxu0 0.0
  %858 = vmatpush1.xpose.msra.mxu0 %v776
  %859 = vmatprep.subr.mxu0 0.0
  %860 = vmatpush1.xpose.msra.mxu0 %v779
  %861 = vmatprep.subr.mxu0 0.0
  %862 = vmatpush1.xpose.msra.mxu0 %v782
  %863 = vmatprep.subr.mxu0 0.0
  %864 = vmatpush1.xpose.msra.mxu0 %v785
  %865 = vmatprep.subr.mxu0 0.0
  %866 = vmatpush1.xpose.msra.mxu0 %v788
  %867 = vmatprep.subr.mxu0 0.0
  %868 = vmatpush1.xpose.msra.mxu0 %v791
  %869 = vmatprep.subr.mxu0 0.0
  %870 = vmatpush1.xpose.msra.mxu0 %v794
  %871 = vmatprep.subr.mxu0 0.0
  %872 = vmatpush1.xpose.msra.mxu0 %v797
  %873 = vmatprep.subr.mxu0 0.0
  %874 = vmatpush1.xpose.msra.mxu0 %v800
  %875 = vmatprep.subr.mxu0 0.0
  %876 = vmatpush1.xpose.msra.mxu0 %v803
  %877 = vmatprep.subr.mxu0 0.0
  %878 = vmatpush1.xpose.msra.mxu0 %v806
  %879 = vmatprep.subr.mxu0 0.0
  %880 = vmatpush1.xpose.msra.mxu0 %v809
  %881 = vmatprep.subr.mxu0 0.0
  %882 = vmatpush1.xpose.msra.mxu0 %v812
  %883 = vmatprep.subr.mxu0 0.0
  %884 = vmatpush1.xpose.msra.mxu0 %v815
  %885 = vmatprep.subr.mxu0 0.0
  %886 = vmatpush1.xpose.msra.mxu0 %v818
  %887 = vmatprep.subr.mxu0 0.0
  %888 = vmatpush1.xpose.msra.mxu0 %v821
  %889 = vmatprep.subr.mxu0 0.0
  %890 = vmatpush1.xpose.msra.mxu0 %v824
  %891 = vmatprep.subr.mxu0 0.0
  %892 = vmatpush1.xpose.msra.mxu0 %v827
  %893 = vmatprep.mubr.f32.mxu0 0.0
  %894 = vmatmul.mubr.f32.gmra.mrb[0].mxu0 %v731
  %v895 = vpop.f32.mrb[0].mxu0
  %v896 = vadd.f32 0.0, %v895
  %v897 = vpop.f32.mrb[0].mxu0
  %v898 = vadd.f32 0.0, %v897
  %899 = vdwg.mxu0
  %v900 = vmax.f32 %v726, %v728
  %901 = vmax.xlane.f32.xlu0 %v900
  %v902 = vpop.xlane.xlu0 %901
  %v903 = vmax.f32 %v896, %v898
  %904 = vmax.xlane.f32.xlu0 %v903
  %v905 = vpop.xlane.xlu0 %904
  %v906 = vsub.f32 %v726, %v902
  %v907 = vsub.f32 %v728, %v902
  %v908 = vsub.f32 %v896, %v905
  %v909 = vsub.f32 %v898, %v905
  %v910 = vmul.f32 %v906, 1.442695
  %v911 = vpow.pop %v910
  %v912 = vmul.f32 %v907, 1.442695
  %v913 = vpow.pop %v912
  %v914 = vmul.f32 %v908, 1.442695
  %v915 = vpow.pop %v914
  %v916 = vmul.f32 %v909, 1.442695
  %v917 = vpow.pop %v916
  %v918 = vadd.f32 %v911, %v913
  %919 = vadd.xlane.f32.xlu0 %v918
  %v920 = vpop.xlane.xlu0 %919
  %v921 = vadd.f32 %v915, %v917
  %922 = vadd.xlane.f32.xlu0 %v921
  %v923 = vpop.xlane.xlu0 %922
  %v924 = vrcp.pop %v920
  %v925 = vrcp.pop %v923
  %v926 = vmul.f32 %v911, %v924
  %v927 = vmul.f32 %v913, %v924
  %v928 = vmul.f32 %v915, %v925
  %v929 = vmul.f32 %v917, %v925
  %930 = vrot.lane.b32.xlu0 %v339, 96
  %v931 = vpop.permute.xlu0 %930
  %932 = vrot.lane.b32.xlu0 %v341, 96
  %v933 = vpop.permute.xlu0 %932
  %934 = vrot.lane.b32.xlu0 %v343, 96
  %v935 = vpop.permute.xlu0 %934
  %936 = vrot.lane.b32.xlu0 %v345, 96
  %v937 = vpop.permute.xlu0 %936
  %938 = vrot.lane.b32.xlu0 %v347, 96
  %v939 = vpop.permute.xlu0 %938
  %940 = vrot.lane.b32.xlu0 %v349, 96
  %v941 = vpop.permute.xlu0 %940
  %942 = vrot.lane.b32.xlu0 %v351, 96
  %v943 = vpop.permute.xlu0 %942
  %944 = vrot.lane.b32.xlu0 %v353, 96
  %v945 = vpop.permute.xlu0 %944
  %946 = vrot.lane.b32.xlu0 %v355, 96
  %v947 = vpop.permute.xlu0 %946
  %948 = vrot.lane.b32.xlu0 %v357, 96
  %v949 = vpop.permute.xlu0 %948
  %950 = vrot.lane.b32.xlu0 %v359, 96
  %v951 = vpop.permute.xlu0 %950
  %952 = vrot.lane.b32.xlu0 %v361, 96
  %v953 = vpop.permute.xlu0 %952
  %954 = vrot.lane.b32.xlu0 %v363, 96
  %v955 = vpop.permute.xlu0 %954
  %956 = vrot.lane.b32.xlu0 %v365, 96
  %v957 = vpop.permute.xlu0 %956
  %958 = vrot.lane.b32.xlu0 %v367, 96
  %v959 = vpop.permute.xlu0 %958
  %960 = vrot.lane.b32.xlu0 %v369, 96
  %v961 = vpop.permute.xlu0 %960
  %962 = vrot.lane.b32.xlu0 %v371, 96
  %v963 = vpop.permute.xlu0 %962
  %964 = vrot.lane.b32.xlu0 %v373, 96
  %v965 = vpop.permute.xlu0 %964
  %966 = vrot.lane.b32.xlu0 %v375, 96
  %v967 = vpop.permute.xlu0 %966
  %968 = vrot.lane.b32.xlu0 %v377, 96
  %v969 = vpop.permute.xlu0 %968
  %970 = vrot.lane.b32.xlu0 %v379, 96
  %v971 = vpop.permute.xlu0 %970
  %972 = vrot.lane.b32.xlu0 %v381, 96
  %v973 = vpop.permute.xlu0 %972
  %974 = vrot.lane.b32.xlu0 %v383, 96
  %v975 = vpop.permute.xlu0 %974
  %976 = vrot.lane.b32.xlu0 %v385, 96
  %v977 = vpop.permute.xlu0 %976
  %978 = vrot.lane.b32.xlu0 %v387, 96
  %v979 = vpop.permute.xlu0 %978
  %980 = vrot.lane.b32.xlu0 %v389, 96
  %v981 = vpop.permute.xlu0 %980
  %982 = vrot.lane.b32.xlu0 %v391, 96
  %v983 = vpop.permute.xlu0 %982
  %984 = vrot.lane.b32.xlu0 %v393, 96
  %v985 = vpop.permute.xlu0 %984
  %986 = vrot.lane.b32.xlu0 %v395, 96
  %v987 = vpop.permute.xlu0 %986
  %988 = vrot.lane.b32.xlu0 %v397, 96
  %v989 = vpop.permute.xlu0 %988
  %990 = vrot.lane.b32.xlu0 %v399, 96
  %v991 = vpop.permute.xlu0 %990
  %992 = vrot.lane.b32.xlu0 %v401, 96
  %v993 = vpop.permute.xlu0 %992
  %1026 = vmatprep.subr.mxu0 0.0
  %1027 = vmatpush1.msra.mxu0 %v931
  %1028 = vmatprep.subr.mxu0 0.0
  %1029 = vmatpush1.msra.mxu0 %v933
  %1030 = vmatprep.subr.mxu0 0.0
  %1031 = vmatpush1.msra.mxu0 %v935
  %1032 = vmatprep.subr.mxu0 0.0
  %1033 = vmatpush1.msra.mxu0 %v937
  %1034 = vmatprep.subr.mxu0 0.0
  %1035 = vmatpush1.msra.mxu0 %v939
  %1036 = vmatprep.subr.mxu0 0.0
  %1037 = vmatpush1.msra.mxu0 %v941
  %1038 = vmatprep.subr.mxu0 0.0
  %1039 = vmatpush1.msra.mxu0 %v943
  %1040 = vmatprep.subr.mxu0 0.0
  %1041 = vmatpush1.msra.mxu0 %v945
  %1042 = vmatprep.subr.mxu0 0.0
  %1043 = vmatpush1.msra.mxu0 %v947
  %1044 = vmatprep.subr.mxu0 0.0
  %1045 = vmatpush1.msra.mxu0 %v949
  %1046 = vmatprep.subr.mxu0 0.0
  %1047 = vmatpush1.msra.mxu0 %v951
  %1048 = vmatprep.subr.mxu0 0.0
  %1049 = vmatpush1.msra.mxu0 %v953
  %1050 = vmatprep.subr.mxu0 0.0
  %1051 = vmatpush1.msra.mxu0 %v955
  %1052 = vmatprep.subr.mxu0 0.0
  %1053 = vmatpush1.msra.mxu0 %v957
  %1054 = vmatprep.subr.mxu0 0.0
  %1055 = vmatpush1.msra.mxu0 %v959
  %1056 = vmatprep.subr.mxu0 0.0
  %1057 = vmatpush1.msra.mxu0 %v961
  %1058 = vmatprep.subr.mxu0 0.0
  %1059 = vmatpush1.msra.mxu0 %v963
  %1060 = vmatprep.subr.mxu0 0.0
  %1061 = vmatpush1.msra.mxu0 %v965
  %1062 = vmatprep.subr.mxu0 0.0
  %1063 = vmatpush1.msra.mxu0 %v967
  %1064 = vmatprep.subr.mxu0 0.0
  %1065 = vmatpush1.msra.mxu0 %v969
  %1066 = vmatprep.subr.mxu0 0.0
  %1067 = vmatpush1.msra.mxu0 %v971
  %1068 = vmatprep.subr.mxu0 0.0
  %1069 = vmatpush1.msra.mxu0 %v973
  %1070 = vmatprep.subr.mxu0 0.0
  %1071 = vmatpush1.msra.mxu0 %v975
  %1072 = vmatprep.subr.mxu0 0.0
  %1073 = vmatpush1.msra.mxu0 %v977
  %1074 = vmatprep.subr.mxu0 0.0
  %1075 = vmatpush1.msra.mxu0 %v979
  %1076 = vmatprep.subr.mxu0 0.0
  %1077 = vmatpush1.msra.mxu0 %v981
  %1078 = vmatprep.subr.mxu0 0.0
  %1079 = vmatpush1.msra.mxu0 %v983
  %1080 = vmatprep.subr.mxu0 0.0
  %1081 = vmatpush1.msra.mxu0 %v985
  %1082 = vmatprep.subr.mxu0 0.0
  %1083 = vmatpush1.msra.mxu0 %v987
  %1084 = vmatprep.subr.mxu0 0.0
  %1085 = vmatpush1.msra.mxu0 %v989
  %1086 = vmatprep.subr.mxu0 0.0
  %1087 = vmatpush1.msra.mxu0 %v991
  %1088 = vmatprep.subr.mxu0 0.0
  %1089 = vmatpush1.msra.mxu0 %v993
  %1090 = vmatprep.mubr.f32.mxu0 %v927
  %1091 = vmatmul.mubr.f32.gmra.mrb[0].mxu0 %v926
  %v1092 = vpop.f32.mrb[0].mxu0
  %v1093 = vadd.f32 0.0, %v1092
  %v1094 = vpop.f32.mrb[0].mxu0
  %1095 = vdwg.mxu0
  %1096 = vrot.lane.b32.xlu0 %v403, 96
  %v1097 = vpop.permute.xlu0 %1096
  %1098 = vrot.lane.b32.xlu0 %v405, 96
  %v1099 = vpop.permute.xlu0 %1098
  %1100 = vrot.lane.b32.xlu0 %v407, 96
  %v1101 = vpop.permute.xlu0 %1100
  %1102 = vrot.lane.b32.xlu0 %v409, 96
  %v1103 = vpop.permute.xlu0 %1102
  %1104 = vrot.lane.b32.xlu0 %v411, 96
  %v1105 = vpop.permute.xlu0 %1104
  %1106 = vrot.lane.b32.xlu0 %v413, 96
  %v1107 = vpop.permute.xlu0 %1106
  %1108 = vrot.lane.b32.xlu0 %v415, 96
  %v1109 = vpop.permute.xlu0 %1108
  %1110 = vrot.lane.b32.xlu0 %v417, 96
  %v1111 = vpop.permute.xlu0 %1110
  %1112 = vrot.lane.b32.xlu0 %v419, 96
  %v1113 = vpop.permute.xlu0 %1112
  %1114 = vrot.lane.b32.xlu0 %v421, 96
  %v1115 = vpop.permute.xlu0 %1114
  %1116 = vrot.lane.b32.xlu0 %v423, 96
  %v1117 = vpop.permute.xlu0 %1116
  %1118 = vrot.lane.b32.xlu0 %v425, 96
  %v1119 = vpop.permute.xlu0 %1118
  %1120 = vrot.lane.b32.xlu0 %v427, 96
  %v1121 = vpop.permute.xlu0 %1120
  %1122 = vrot.lane.b32.xlu0 %v429, 96
  %v1123 = vpop.permute.xlu0 %1122
  %1124 = vrot.lane.b32.xlu0 %v431, 96
  %v1125 = vpop.permute.xlu0 %1124
  %1126 = vrot.lane.b32.xlu0 %v433, 96
  %v1127 = vpop.permute.xlu0 %1126
  %1128 = vrot.lane.b32.xlu0 %v435, 96
  %v1129 = vpop.permute.xlu0 %1128
  %1130 = vrot.lane.b32.xlu0 %v437, 96
  %v1131 = vpop.permute.xlu0 %1130
  %1132 = vrot.lane.b32.xlu0 %v439, 96
  %v1133 = vpop.permute.xlu0 %1132
  %1134 = vrot.lane.b32.xlu0 %v441, 96
  %v1135 = vpop.permute.xlu0 %1134
  %1136 = vrot.lane.b32.xlu0 %v443, 96
  %v1137 = vpop.permute.xlu0 %1136
  %1138 = vrot.lane.b32.xlu0 %v445, 96
  %v1139 = vpop.permute.xlu0 %1138
  %1140 = vrot.lane.b32.xlu0 %v447, 96
  %v1141 = vpop.permute.xlu0 %1140
  %1142 = vrot.lane.b32.xlu0 %v449, 96
  %v1143 = vpop.permute.xlu0 %1142
  %1144 = vrot.lane.b32.xlu0 %v451, 96
  %v1145 = vpop.permute.xlu0 %1144
  %1146 = vrot.lane.b32.xlu0 %v453, 96
  %v1147 = vpop.permute.xlu0 %1146
  %1148 = vrot.lane.b32.xlu0 %v455, 96
  %v1149 = vpop.permute.xlu0 %1148
  %1150 = vrot.lane.b32.xlu0 %v457, 96
  %v1151 = vpop.permute.xlu0 %1150
  %1152 = vrot.lane.b32.xlu0 %v459, 96
  %v1153 = vpop.permute.xlu0 %1152
  %1154 = vrot.lane.b32.xlu0 %v461, 96
  %v1155 = vpop.permute.xlu0 %1154
  %1156 = vrot.lane.b32.xlu0 %v463, 96
  %v1157 = vpop.permute.xlu0 %1156
  %1158 = vrot.lane.b32.xlu0 %v465, 96
  %v1159 = vpop.permute.xlu0 %1158
  %1192 = vmatprep.subr.mxu0 0.0
  %1193 = vmatpush1.msra.mxu0 %v1097
  %1194 = vmatprep.subr.mxu0 0.0
  %1195 = vmatpush1.msra.mxu0 %v1099
  %1196 = vmatprep.subr.mxu0 0.0
  %1197 = vmatpush1.msra.mxu0 %v1101
  %1198 = vmatprep.subr.mxu0 0.0
  %1199 = vmatpush1.msra.mxu0 %v1103
  %1200 = vmatprep.subr.mxu0 0.0
  %1201 = vmatpush1.msra.mxu0 %v1105
  %1202 = vmatprep.subr.mxu0 0.0
  %1203 = vmatpush1.msra.mxu0 %v1107
  %1204 = vmatprep.subr.mxu0 0.0
  %1205 = vmatpush1.msra.mxu0 %v1109
  %1206 = vmatprep.subr.mxu0 0.0
  %1207 = vmatpush1.msra.mxu0 %v1111
  %1208 = vmatprep.subr.mxu0 0.0
  %1209 = vmatpush1.msra.mxu0 %v1113
  %1210 = vmatprep.subr.mxu0 0.0
  %1211 = vmatpush1.msra.mxu0 %v1115
  %1212 = vmatprep.subr.mxu0 0.0
  %1213 = vmatpush1.msra.mxu0 %v1117
  %1214 = vmatprep.subr.mxu0 0.0
  %1215 = vmatpush1.msra.mxu0 %v1119
  %1216 = vmatprep.subr.mxu0 0.0
  %1217 = vmatpush1.msra.mxu0 %v1121
  %1218 = vmatprep.subr.mxu0 0.0
  %1219 = vmatpush1.msra.mxu0 %v1123
  %1220 = vmatprep.subr.mxu0 0.0
  %1221 = vmatpush1.msra.mxu0 %v1125
  %1222 = vmatprep.subr.mxu0 0.0
  %1223 = vmatpush1.msra.mxu0 %v1127
  %1224 = vmatprep.subr.mxu0 0.0
  %1225 = vmatpush1.msra.mxu0 %v1129
  %1226 = vmatprep.subr.mxu0 0.0
  %1227 = vmatpush1.msra.mxu0 %v1131
  %1228 = vmatprep.subr.mxu0 0.0
  %1229 = vmatpush1.msra.mxu0 %v1133
  %1230 = vmatprep.subr.mxu0 0.0
  %1231 = vmatpush1.msra.mxu0 %v1135
  %1232 = vmatprep.subr.mxu0 0.0
  %1233 = vmatpush1.msra.mxu0 %v1137
  %1234 = vmatprep.subr.mxu0 0.0
  %1235 = vmatpush1.msra.mxu0 %v1139
  %1236 = vmatprep.subr.mxu0 0.0
  %1237 = vmatpush1.msra.mxu0 %v1141
  %1238 = vmatprep.subr.mxu0 0.0
  %1239 = vmatpush1.msra.mxu0 %v1143
  %1240 = vmatprep.subr.mxu0 0.0
  %1241 = vmatpush1.msra.mxu0 %v1145
  %1242 = vmatprep.subr.mxu0 0.0
  %1243 = vmatpush1.msra.mxu0 %v1147
  %1244 = vmatprep.subr.mxu0 0.0
  %1245 = vmatpush1.msra.mxu0 %v1149
  %1246 = vmatprep.subr.mxu0 0.0
  %1247 = vmatpush1.msra.mxu0 %v1151
  %1248 = vmatprep.subr.mxu0 0.0
  %1249 = vmatpush1.msra.mxu0 %v1153
  %1250 = vmatprep.subr.mxu0 0.0
  %1251 = vmatpush1.msra.mxu0 %v1155
  %1252 = vmatprep.subr.mxu0 0.0
  %1253 = vmatpush1.msra.mxu0 %v1157
  %1254 = vmatprep.subr.mxu0 0.0
  %1255 = vmatpush1.msra.mxu0 %v1159
  %1256 = vmatprep.mubr.f32.mxu0 %v929
  %1257 = vmatmul.mubr.f32.gmra.mrb[0].mxu0 %v928
  %v1258 = vpop.f32.mrb[0].mxu0
  %v1259 = vadd.f32 0.0, %v1258
  %v1260 = vpop.f32.mrb[0].mxu0
  %1261 = vdwg.mxu0
  %v1262 = vld [vmem:[%s10] sm:$0xff]
  %v1263 = vld [vmem:[%s10 + $0x8] sm:$0xff]
  %v1264 = vld [vmem:[%s10 + $0x10] sm:$0xff]
  %v1265 = vld [vmem:[%s10 + $0x18] sm:$0xff]
  %v1266 = vld [vmem:[%s11] sm:$0x1]
  %v1268 = vlaneseq
  %v1269 = vshrl.u32 %v1268, 7
  %v1270 = vsub.s32 0, %v1269
  %v1271 = vrot.slane %v1266, %v1270
  %v1274 = vsel %vm478, %v1093, 0
  %v1277 = vsel %vm478, %v1259, 0
  %1279 = vmatprep.subr.mxu0 0.0
  %1280 = vmatpush1.msra.mxu0 %v1262
  %1281 = vmatprep.subr.mxu0 0.0
  %1282 = vmatpush1.msra.mxu0 %v1263
  %1283 = vmatprep.subr.mxu0 0.0
  %1284 = vmatpush1.msra.mxu0 %v1264
  %1285 = vmatprep.subr.mxu0 0.0
  %1286 = vmatpush1.msra.mxu0 %v1265
  %1287 = vmatprep.subr.mxu0 0.0
  %1288 = vmatpush1.msra.mxu0 0.0
  %1289 = vmatprep.subr.mxu0 0.0
  %1290 = vmatpush1.msra.mxu0 0.0
  %1291 = vmatprep.subr.mxu0 0.0
  %1292 = vmatpush1.msra.mxu0 0.0
  %1293 = vmatprep.subr.mxu0 0.0
  %1294 = vmatpush1.msra.mxu0 0.0
  %1295 = vmatprep.subr.mxu0 0.0
  %1296 = vmatpush1.msra.mxu0 0.0
  %1297 = vmatprep.subr.mxu0 0.0
  %1298 = vmatpush1.msra.mxu0 0.0
  %1299 = vmatprep.subr.mxu0 0.0
  %1300 = vmatpush1.msra.mxu0 0.0
  %1301 = vmatprep.subr.mxu0 0.0
  %1302 = vmatpush1.msra.mxu0 0.0
  %1303 = vmatprep.subr.mxu0 0.0
  %1304 = vmatpush1.msra.mxu0 0.0
  %1305 = vmatprep.subr.mxu0 0.0
  %1306 = vmatpush1.msra.mxu0 0.0
  %1307 = vmatprep.subr.mxu0 0.0
  %1308 = vmatpush1.msra.mxu0 0.0
  %1309 = vmatprep.subr.mxu0 0.0
  %1310 = vmatpush1.msra.mxu0 0.0
  %1311 = vmatprep.subr.mxu0 0.0
  %1312 = vmatpush1.msra.mxu0 0.0
  %1313 = vmatprep.subr.mxu0 0.0
  %1314 = vmatpush1.msra.mxu0 0.0
  %1315 = vmatprep.subr.mxu0 0.0
  %1316 = vmatpush1.msra.mxu0 0.0
  %1317 = vmatprep.subr.mxu0 0.0
  %1318 = vmatpush1.msra.mxu0 0.0
  %1319 = vmatprep.subr.mxu0 0.0
  %1320 = vmatpush1.msra.mxu0 0.0
  %1321 = vmatprep.subr.mxu0 0.0
  %1322 = vmatpush1.msra.mxu0 0.0
  %1323 = vmatprep.subr.mxu0 0.0
  %1324 = vmatpush1.msra.mxu0 0.0
  %1325 = vmatprep.subr.mxu0 0.0
  %1326 = vmatpush1.msra.mxu0 0.0
  %1327 = vmatprep.subr.mxu0 0.0
  %1328 = vmatpush1.msra.mxu0 0.0
  %1329 = vmatprep.subr.mxu0 0.0
  %1330 = vmatpush1.msra.mxu0 0.0
  %1331 = vmatprep.subr.mxu0 0.0
  %1332 = vmatpush1.msra.mxu0 0.0
  %1333 = vmatprep.subr.mxu0 0.0
  %1334 = vmatpush1.msra.mxu0 0.0
  %1335 = vmatprep.subr.mxu0 0.0
  %1336 = vmatpush1.msra.mxu0 0.0
  %1337 = vmatprep.subr.mxu0 0.0
  %1338 = vmatpush1.msra.mxu0 0.0
  %1339 = vmatprep.subr.mxu0 0.0
  %1340 = vmatpush1.msra.mxu0 0.0
  %1341 = vmatprep.subr.mxu0 0.0
  %1342 = vmatpush1.msra.mxu0 0.0
  %1343 = vmatprep.mubr.f32.mxu0 0.0
  %1344 = vmatmul.mubr.f32.gmra.mrb[0].mxu0 %v1274
  %v1345 = vpop.f32.mrb[0].mxu0
  %v1346 = vadd.f32 %v1271, %v1345
  %v1347 = vpop.f32.mrb[0].mxu0
  %1348 = vmatprep.mubr.f32.mxu0 0.0
  %1349 = vmatmul.mubr.f32.gmra.mrb[0].mxu0 %v1277
  %v1350 = vpop.f32.mrb[0].mxu0
  %v1351 = vadd.f32 %v1271, %v1350
  %v1352 = vpop.f32.mrb[0].mxu0
  %1353 = vdwg.mxu0
  %v1354 = vadd.f32 %v331, %v1346
  %v1355 = vadd.f32 %v336, %v1351
  %s1356 = scalar_lea.vmem %s8, 32
  %v1357 = vld [vmem:[%s1356] sm:$0xff]
  %v1358 = vld [vmem:[%s1356 + $0x8] sm:$0xff]
  %v1359 = vld [vmem:[%s1356 + $0x10] sm:$0xff]
  %v1360 = vld [vmem:[%s1356 + $0x18] sm:$0xff]
  %s1361 = scalar_lea.vmem %s9, 1
  %v1362 = vld [vmem:[%s1361] sm:$0x1]
  %v1364 = vlaneseq
  %v1365 = vshrl.u32 %v1364, 7
  %v1366 = vsub.s32 0, %v1365
  %v1367 = vrot.slane %v1362, %v1366
  %v1370 = vsel %vm478, %v1354, 0
  %v1373 = vsel %vm478, %v1355, 0
  %1375 = vmatprep.subr.mxu0 0.0
  %1376 = vmatpush1.msra.mxu0 %v1357
  %1377 = vmatprep.subr.mxu0 0.0
  %1378 = vmatpush1.msra.mxu0 %v1358
  %1379 = vmatprep.subr.mxu0 0.0
  %1380 = vmatpush1.msra.mxu0 %v1359
  %1381 = vmatprep.subr.mxu0 0.0
  %1382 = vmatpush1.msra.mxu0 %v1360
  %1383 = vmatprep.subr.mxu0 0.0
  %1384 = vmatpush1.msra.mxu0 0.0
  %1385 = vmatprep.subr.mxu0 0.0
  %1386 = vmatpush1.msra.mxu0 0.0
  %1387 = vmatprep.subr.mxu0 0.0
  %1388 = vmatpush1.msra.mxu0 0.0
  %1389 = vmatprep.subr.mxu0 0.0
  %1390 = vmatpush1.msra.mxu0 0.0
  %1391 = vmatprep.subr.mxu0 0.0
  %1392 = vmatpush1.msra.mxu0 0.0
  %1393 = vmatprep.subr.mxu0 0.0
  %1394 = vmatpush1.msra.mxu0 0.0
  %1395 = vmatprep.subr.mxu0 0.0
  %1396 = vmatpush1.msra.mxu0 0.0
  %1397 = vmatprep.subr.mxu0 0.0
  %1398 = vmatpush1.msra.mxu0 0.0
  %1399 = vmatprep.subr.mxu0 0.0
  %1400 = vmatpush1.msra.mxu0 0.0
  %1401 = vmatprep.subr.mxu0 0.0
  %1402 = vmatpush1.msra.mxu0 0.0
  %1403 = vmatprep.subr.mxu0 0.0
  %1404 = vmatpush1.msra.mxu0 0.0
  %1405 = vmatprep.subr.mxu0 0.0
  %1406 = vmatpush1.msra.mxu0 0.0
  %1407 = vmatprep.subr.mxu0 0.0
  %1408 = vmatpush1.msra.mxu0 0.0
  %1409 = vmatprep.subr.mxu0 0.0
  %1410 = vmatpush1.msra.mxu0 0.0
  %1411 = vmatprep.subr.mxu0 0.0
  %1412 = vmatpush1.msra.mxu0 0.0
  %1413 = vmatprep.subr.mxu0 0.0
  %1414 = vmatpush1.msra.mxu0 0.0
  %1415 = vmatprep.subr.mxu0 0.0
  %1416 = vmatpush1.msra.mxu0 0.0
  %1417 = vmatprep.subr.mxu0 0.0
  %1418 = vmatpush1.msra.mxu0 0.0
  %1419 = vmatprep.subr.mxu0 0.0
  %1420 = vmatpush1.msra.mxu0 0.0
  %1421 = vmatprep.subr.mxu0 0.0
  %1422 = vmatpush1.msra.mxu0 0.0
  %1423 = vmatprep.subr.mxu0 0.0
  %1424 = vmatpush1.msra.mxu0 0.0
  %1425 = vmatprep.subr.mxu0 0.0
  %1426 = vmatpush1.msra.mxu0 0.0
  %1427 = vmatprep.subr.mxu0 0.0
  %1428 = vmatpush1.msra.mxu0 0.0
  %1429 = vmatprep.subr.mxu0 0.0
  %1430 = vmatpush1.msra.mxu0 0.0
  %1431 = vmatprep.subr.mxu0 0.0
  %1432 = vmatpush1.msra.mxu0 0.0
  %1433 = vmatprep.subr.mxu0 0.0
  %1434 = vmatpush1.msra.mxu0 0.0
  %1435 = vmatprep.subr.mxu0 0.0
  %1436 = vmatpush1.msra.mxu0 0.0
  %1437 = vmatprep.subr.mxu0 0.0
  %1438 = vmatpush1.msra.mxu0 0.0
  %1439 = vmatprep.mubr.f32.mxu0 0.0
  %1440 = vmatmul.mubr.f32.gmra.mrb[0].mxu0 %v1370
  %v1441 = vpop.f32.mrb[0].mxu0
  %v1442 = vadd.f32 %v1367, %v1441
  %v1443 = vpop.f32.mrb[0].mxu0
  %1444 = vmatprep.mubr.f32.mxu0 0.0
  %1445 = vmatmul.mubr.f32.gmra.mrb[0].mxu0 %v1373
  %v1446 = vpop.f32.mrb[0].mxu0
  %v1447 = vadd.f32 %v1367, %v1446
  %v1448 = vpop.f32.mrb[0].mxu0
  %1449 = vdwg.mxu0
  %1450 = vrot.lane.b32.xlu0 %v339, 64
  %v1451 = vpop.permute.xlu0 %1450
  %1452 = vrot.lane.b32.xlu0 %v341, 64
  %v1453 = vpop.permute.xlu0 %1452
  %1454 = vrot.lane.b32.xlu0 %v343, 64
  %v1455 = vpop.permute.xlu0 %1454
  %1456 = vrot.lane.b32.xlu0 %v345, 64
  %v1457 = vpop.permute.xlu0 %1456
  %1458 = vrot.lane.b32.xlu0 %v347, 64
  %v1459 = vpop.permute.xlu0 %1458
  %1460 = vrot.lane.b32.xlu0 %v349, 64
  %v1461 = vpop.permute.xlu0 %1460
  %1462 = vrot.lane.b32.xlu0 %v351, 64
  %v1463 = vpop.permute.xlu0 %1462
  %1464 = vrot.lane.b32.xlu0 %v353, 64
  %v1465 = vpop.permute.xlu0 %1464
  %1466 = vrot.lane.b32.xlu0 %v355, 64
  %v1467 = vpop.permute.xlu0 %1466
  %1468 = vrot.lane.b32.xlu0 %v357, 64
  %v1469 = vpop.permute.xlu0 %1468
  %1470 = vrot.lane.b32.xlu0 %v359, 64
  %v1471 = vpop.permute.xlu0 %1470
  %1472 = vrot.lane.b32.xlu0 %v361, 64
  %v1473 = vpop.permute.xlu0 %1472
  %1474 = vrot.lane.b32.xlu0 %v363, 64
  %v1475 = vpop.permute.xlu0 %1474
  %1476 = vrot.lane.b32.xlu0 %v365, 64
  %v1477 = vpop.permute.xlu0 %1476
  %1478 = vrot.lane.b32.xlu0 %v367, 64
  %v1479 = vpop.permute.xlu0 %1478
  %1480 = vrot.lane.b32.xlu0 %v369, 64
  %v1481 = vpop.permute.xlu0 %1480
  %1482 = vrot.lane.b32.xlu0 %v371, 64
  %v1483 = vpop.permute.xlu0 %1482
  %1484 = vrot.lane.b32.xlu0 %v373, 64
  %v1485 = vpop.permute.xlu0 %1484
  %1486 = vrot.lane.b32.xlu0 %v375, 64
  %v1487 = vpop.permute.xlu0 %1486
  %1488 = vrot.lane.b32.xlu0 %v377, 64
  %v1489 = vpop.permute.xlu0 %1488
  %1490 = vrot.lane.b32.xlu0 %v379, 64
  %v1491 = vpop.permute.xlu0 %1490
  %1492 = vrot.lane.b32.xlu0 %v381, 64
  %v1493 = vpop.permute.xlu0 %1492
  %1494 = vrot.lane.b32.xlu0 %v383, 64
  %v1495 = vpop.permute.xlu0 %1494
  %1496 = vrot.lane.b32.xlu0 %v385, 64
  %v1497 = vpop.permute.xlu0 %1496
  %1498 = vrot.lane.b32.xlu0 %v387, 64
  %v1499 = vpop.permute.xlu0 %1498
  %1500 = vrot.lane.b32.xlu0 %v389, 64
  %v1501 = vpop.permute.xlu0 %1500
  %1502 = vrot.lane.b32.xlu0 %v391, 64
  %v1503 = vpop.permute.xlu0 %1502
  %1504 = vrot.lane.b32.xlu0 %v393, 64
  %v1505 = vpop.permute.xlu0 %1504
  %1506 = vrot.lane.b32.xlu0 %v395, 64
  %v1507 = vpop.permute.xlu0 %1506
  %1508 = vrot.lane.b32.xlu0 %v397, 64
  %v1509 = vpop.permute.xlu0 %1508
  %1510 = vrot.lane.b32.xlu0 %v399, 64
  %v1511 = vpop.permute.xlu0 %1510
  %1512 = vrot.lane.b32.xlu0 %v401, 64
  %v1513 = vpop.permute.xlu0 %1512
  %v1515 = vsel %vm478, %v1442, 0
  %v1517 = vsel %vm478, %v1451, 0
  %v1519 = vsel %vm478, %v1453, 0
  %v1521 = vsel %vm478, %v1455, 0
  %v1523 = vsel %vm478, %v1457, 0
  %v1525 = vsel %vm478, %v1459, 0
  %v1527 = vsel %vm478, %v1461, 0
  %v1529 = vsel %vm478, %v1463, 0
  %v1531 = vsel %vm478, %v1465, 0
  %v1533 = vsel %vm478, %v1467, 0
  %v1535 = vsel %vm478, %v1469, 0
  %v1537 = vsel %vm478, %v1471, 0
  %v1539 = vsel %vm478, %v1473, 0
  %v1541 = vsel %vm478, %v1475, 0
  %v1543 = vsel %vm478, %v1477, 0
  %v1545 = vsel %vm478, %v1479, 0
  %v1547 = vsel %vm478, %v1481, 0
  %v1549 = vsel %vm478, %v1483, 0
  %v1551 = vsel %vm478, %v1485, 0
  %v1553 = vsel %vm478, %v1487, 0
  %v1555 = vsel %vm478, %v1489, 0
  %v1557 = vsel %vm478, %v1491, 0
  %v1559 = vsel %vm478, %v1493, 0
  %v1561 = vsel %vm478, %v1495, 0
  %v1563 = vsel %vm478, %v1497, 0
  %v1565 = vsel %vm478, %v1499, 0
  %v1567 = vsel %vm478, %v1501, 0
  %v1569 = vsel %vm478, %v1503, 0
  %v1571 = vsel %vm478, %v1505, 0
  %v1573 = vsel %vm478, %v1507, 0
  %v1575 = vsel %vm478, %v1509, 0
  %v1577 = vsel %vm478, %v1511, 0
  %v1579 = vsel %vm478, %v1513, 0
  %1581 = vmatprep.subr.mxu0 0.0
  %1582 = vmatpush1.xpose.msra.mxu0 %v1517
  %1583 = vmatprep.subr.mxu0 0.0
  %1584 = vmatpush1.xpose.msra.mxu0 %v1519
  %1585 = vmatprep.subr.mxu0 0.0
  %1586 = vmatpush1.xpose.msra.mxu0 %v1521
  %1587 = vmatprep.subr.mxu0 0.0
  %1588 = vmatpush1.xpose.msra.mxu0 %v1523
  %1589 = vmatprep.subr.mxu0 0.0
  %1590 = vmatpush1.xpose.msra.mxu0 %v1525
  %1591 = vmatprep.subr.mxu0 0.0
  %1592 = vmatpush1.xpose.msra.mxu0 %v1527
  %1593 = vmatprep.subr.mxu0 0.0
  %1594 = vmatpush1.xpose.msra.mxu0 %v1529
  %1595 = vmatprep.subr.mxu0 0.0
  %1596 = vmatpush1.xpose.msra.mxu0 %v1531
  %1597 = vmatprep.subr.mxu0 0.0
  %1598 = vmatpush1.xpose.msra.mxu0 %v1533
  %1599 = vmatprep.subr.mxu0 0.0
  %1600 = vmatpush1.xpose.msra.mxu0 %v1535
  %1601 = vmatprep.subr.mxu0 0.0
  %1602 = vmatpush1.xpose.msra.mxu0 %v1537
  %1603 = vmatprep.subr.mxu0 0.0
  %1604 = vmatpush1.xpose.msra.mxu0 %v1539
  %1605 = vmatprep.subr.mxu0 0.0
  %1606 = vmatpush1.xpose.msra.mxu0 %v1541
  %1607 = vmatprep.subr.mxu0 0.0
  %1608 = vmatpush1.xpose.msra.mxu0 %v1543
  %1609 = vmatprep.subr.mxu0 0.0
  %1610 = vmatpush1.xpose.msra.mxu0 %v1545
  %1611 = vmatprep.subr.mxu0 0.0
  %1612 = vmatpush1.xpose.msra.mxu0 %v1547
  %1613 = vmatprep.subr.mxu0 0.0
  %1614 = vmatpush1.xpose.msra.mxu0 %v1549
  %1615 = vmatprep.subr.mxu0 0.0
  %1616 = vmatpush1.xpose.msra.mxu0 %v1551
  %1617 = vmatprep.subr.mxu0 0.0
  %1618 = vmatpush1.xpose.msra.mxu0 %v1553
  %1619 = vmatprep.subr.mxu0 0.0
  %1620 = vmatpush1.xpose.msra.mxu0 %v1555
  %1621 = vmatprep.subr.mxu0 0.0
  %1622 = vmatpush1.xpose.msra.mxu0 %v1557
  %1623 = vmatprep.subr.mxu0 0.0
  %1624 = vmatpush1.xpose.msra.mxu0 %v1559
  %1625 = vmatprep.subr.mxu0 0.0
  %1626 = vmatpush1.xpose.msra.mxu0 %v1561
  %1627 = vmatprep.subr.mxu0 0.0
  %1628 = vmatpush1.xpose.msra.mxu0 %v1563
  %1629 = vmatprep.subr.mxu0 0.0
  %1630 = vmatpush1.xpose.msra.mxu0 %v1565
  %1631 = vmatprep.subr.mxu0 0.0
  %1632 = vmatpush1.xpose.msra.mxu0 %v1567
  %1633 = vmatprep.subr.mxu0 0.0
  %1634 = vmatpush1.xpose.msra.mxu0 %v1569
  %1635 = vmatprep.subr.mxu0 0.0
  %1636 = vmatpush1.xpose.msra.mxu0 %v1571
  %1637 = vmatprep.subr.mxu0 0.0
  %1638 = vmatpush1.xpose.msra.mxu0 %v1573
  %1639 = vmatprep.subr.mxu0 0.0
  %1640 = vmatpush1.xpose.msra.mxu0 %v1575
  %1641 = vmatprep.subr.mxu0 0.0
  %1642 = vmatpush1.xpose.msra.mxu0 %v1577
  %1643 = vmatprep.subr.mxu0 0.0
  %1644 = vmatpush1.xpose.msra.mxu0 %v1579
  %1645 = vmatprep.mubr.f32.mxu0 0.0
  %1646 = vmatmul.mubr.f32.gmra.mrb[0].mxu0 %v1515
  %v1647 = vpop.f32.mrb[0].mxu0
  %v1648 = vadd.f32 0.0, %v1647
  %v1649 = vpop.f32.mrb[0].mxu0
  %v1650 = vadd.f32 0.0, %v1649
  %1651 = vdwg.mxu0
  %1652 = vrot.lane.b32.xlu0 %v403, 64
  %v1653 = vpop.permute.xlu0 %1652
  %1654 = vrot.lane.b32.xlu0 %v405, 64
  %v1655 = vpop.permute.xlu0 %1654
  %1656 = vrot.lane.b32.xlu0 %v407, 64
  %v1657 = vpop.permute.xlu0 %1656
  %1658 = vrot.lane.b32.xlu0 %v409, 64
  %v1659 = vpop.permute.xlu0 %1658
  %1660 = vrot.lane.b32.xlu0 %v411, 64
  %v1661 = vpop.permute.xlu0 %1660
  %1662 = vrot.lane.b32.xlu0 %v413, 64
  %v1663 = vpop.permute.xlu0 %1662
  %1664 = vrot.lane.b32.xlu0 %v415, 64
  %v1665 = vpop.permute.xlu0 %1664
  %1666 = vrot.lane.b32.xlu0 %v417, 64
  %v1667 = vpop.permute.xlu0 %1666
  %1668 = vrot.lane.b32.xlu0 %v419, 64
  %v1669 = vpop.permute.xlu0 %1668
  %1670 = vrot.lane.b32.xlu0 %v421, 64
  %v1671 = vpop.permute.xlu0 %1670
  %1672 = vrot.lane.b32.xlu0 %v423, 64
  %v1673 = vpop.permute.xlu0 %1672
  %1674 = vrot.lane.b32.xlu0 %v425, 64
  %v1675 = vpop.permute.xlu0 %1674
  %1676 = vrot.lane.b32.xlu0 %v427, 64
  %v1677 = vpop.permute.xlu0 %1676
  %1678 = vrot.lane.b32.xlu0 %v429, 64
  %v1679 = vpop.permute.xlu0 %1678
  %1680 = vrot.lane.b32.xlu0 %v431, 64
  %v1681 = vpop.permute.xlu0 %1680
  %1682 = vrot.lane.b32.xlu0 %v433, 64
  %v1683 = vpop.permute.xlu0 %1682
  %1684 = vrot.lane.b32.xlu0 %v435, 64
  %v1685 = vpop.permute.xlu0 %1684
  %1686 = vrot.lane.b32.xlu0 %v437, 64
  %v1687 = vpop.permute.xlu0 %1686
  %1688 = vrot.lane.b32.xlu0 %v439, 64
  %v1689 = vpop.permute.xlu0 %1688
  %1690 = vrot.lane.b32.xlu0 %v441, 64
  %v1691 = vpop.permute.xlu0 %1690
  %1692 = vrot.lane.b32.xlu0 %v443, 64
  %v1693 = vpop.permute.xlu0 %1692
  %1694 = vrot.lane.b32.xlu0 %v445, 64
  %v1695 = vpop.permute.xlu0 %1694
  %1696 = vrot.lane.b32.xlu0 %v447, 64
  %v1697 = vpop.permute.xlu0 %1696
  %1698 = vrot.lane.b32.xlu0 %v449, 64
  %v1699 = vpop.permute.xlu0 %1698
  %1700 = vrot.lane.b32.xlu0 %v451, 64
  %v1701 = vpop.permute.xlu0 %1700
  %1702 = vrot.lane.b32.xlu0 %v453, 64
  %v1703 = vpop.permute.xlu0 %1702
  %1704 = vrot.lane.b32.xlu0 %v455, 64
  %v1705 = vpop.permute.xlu0 %1704
  %1706 = vrot.lane.b32.xlu0 %v457, 64
  %v1707 = vpop.permute.xlu0 %1706
  %1708 = vrot.lane.b32.xlu0 %v459, 64
  %v1709 = vpop.permute.xlu0 %1708
  %1710 = vrot.lane.b32.xlu0 %v461, 64
  %v1711 = vpop.permute.xlu0 %1710
  %1712 = vrot.lane.b32.xlu0 %v463, 64
  %v1713 = vpop.permute.xlu0 %1712
  %1714 = vrot.lane.b32.xlu0 %v465, 64
  %v1715 = vpop.permute.xlu0 %1714
  %v1717 = vsel %vm478, %v1447, 0
  %v1719 = vsel %vm478, %v1653, 0
  %v1721 = vsel %vm478, %v1655, 0
  %v1723 = vsel %vm478, %v1657, 0
  %v1725 = vsel %vm478, %v1659, 0
  %v1727 = vsel %vm478, %v1661, 0
  %v1729 = vsel %vm478, %v1663, 0
  %v1731 = vsel %vm478, %v1665, 0
  %v1733 = vsel %vm478, %v1667, 0
  %v1735 = vsel %vm478, %v1669, 0
  %v1737 = vsel %vm478, %v1671, 0
  %v1739 = vsel %vm478, %v1673, 0
  %v1741 = vsel %vm478, %v1675, 0
  %v1743 = vsel %vm478, %v1677, 0
  %v1745 = vsel %vm478, %v1679, 0
  %v1747 = vsel %vm478, %v1681, 0
  %v1749 = vsel %vm478, %v1683, 0
  %v1751 = vsel %vm478, %v1685, 0
  %v1753 = vsel %vm478, %v1687, 0
  %v1755 = vsel %vm478, %v1689, 0
  %v1757 = vsel %vm478, %v1691, 0
  %v1759 = vsel %vm478, %v1693, 0
  %v1761 = vsel %vm478, %v1695, 0
  %v1763 = vsel %vm478, %v1697, 0
  %v1765 = vsel %vm478, %v1699, 0
  %v1767 = vsel %vm478, %v1701, 0
  %v1769 = vsel %vm478, %v1703, 0
  %v1771 = vsel %vm478, %v1705, 0
  %v1773 = vsel %vm478, %v1707, 0
  %v1775 = vsel %vm478, %v1709, 0
  %v1777 = vsel %vm478, %v1711, 0
  %v1779 = vsel %vm478, %v1713, 0
  %v1781 = vsel %vm478, %v1715, 0
  %1783 = vmatprep.subr.mxu0 0.0
  %1784 = vmatpush1.xpose.msra.mxu0 %v1719
  %1785 = vmatprep.subr.mxu0 0.0
  %1786 = vmatpush1.xpose.msra.mxu0 %v1721
  %1787 = vmatprep.subr.mxu0 0.0
  %1788 = vmatpush1.xpose.msra.mxu0 %v1723
  %1789 = vmatprep.subr.mxu0 0.0
  %1790 = vmatpush1.xpose.msra.mxu0 %v1725
  %1791 = vmatprep.subr.mxu0 0.0
  %1792 = vmatpush1.xpose.msra.mxu0 %v1727
  %1793 = vmatprep.subr.mxu0 0.0
  %1794 = vmatpush1.xpose.msra.mxu0 %v1729
  %1795 = vmatprep.subr.mxu0 0.0
  %1796 = vmatpush1.xpose.msra.mxu0 %v1731
  %1797 = vmatprep.subr.mxu0 0.0
  %1798 = vmatpush1.xpose.msra.mxu0 %v1733
  %1799 = vmatprep.subr.mxu0 0.0
  %1800 = vmatpush1.xpose.msra.mxu0 %v1735
  %1801 = vmatprep.subr.mxu0 0.0
  %1802 = vmatpush1.xpose.msra.mxu0 %v1737
  %1803 = vmatprep.subr.mxu0 0.0
  %1804 = vmatpush1.xpose.msra.mxu0 %v1739
  %1805 = vmatprep.subr.mxu0 0.0
  %1806 = vmatpush1.xpose.msra.mxu0 %v1741
  %1807 = vmatprep.subr.mxu0 0.0
  %1808 = vmatpush1.xpose.msra.mxu0 %v1743
  %1809 = vmatprep.subr.mxu0 0.0
  %1810 = vmatpush1.xpose.msra.mxu0 %v1745
  %1811 = vmatprep.subr.mxu0 0.0
  %1812 = vmatpush1.xpose.msra.mxu0 %v1747
  %1813 = vmatprep.subr.mxu0 0.0
  %1814 = vmatpush1.xpose.msra.mxu0 %v1749
  %1815 = vmatprep.subr.mxu0 0.0
  %1816 = vmatpush1.xpose.msra.mxu0 %v1751
  %1817 = vmatprep.subr.mxu0 0.0
  %1818 = vmatpush1.xpose.msra.mxu0 %v1753
  %1819 = vmatprep.subr.mxu0 0.0
  %1820 = vmatpush1.xpose.msra.mxu0 %v1755
  %1821 = vmatprep.subr.mxu0 0.0
  %1822 = vmatpush1.xpose.msra.mxu0 %v1757
  %1823 = vmatprep.subr.mxu0 0.0
  %1824 = vmatpush1.xpose.msra.mxu0 %v1759
  %1825 = vmatprep.subr.mxu0 0.0
  %1826 = vmatpush1.xpose.msra.mxu0 %v1761
  %1827 = vmatprep.subr.mxu0 0.0
  %1828 = vmatpush1.xpose.msra.mxu0 %v1763
  %1829 = vmatprep.subr.mxu0 0.0
  %1830 = vmatpush1.xpose.msra.mxu0 %v1765
  %1831 = vmatprep.subr.mxu0 0.0
  %1832 = vmatpush1.xpose.msra.mxu0 %v1767
  %1833 = vmatprep.subr.mxu0 0.0
  %1834 = vmatpush1.xpose.msra.mxu0 %v1769
  %1835 = vmatprep.subr.mxu0 0.0
  %1836 = vmatpush1.xpose.msra.mxu0 %v1771
  %1837 = vmatprep.subr.mxu0 0.0
  %1838 = vmatpush1.xpose.msra.mxu0 %v1773
  %1839 = vmatprep.subr.mxu0 0.0
  %1840 = vmatpush1.xpose.msra.mxu0 %v1775
  %1841 = vmatprep.subr.mxu0 0.0
  %1842 = vmatpush1.xpose.msra.mxu0 %v1777
  %1843 = vmatprep.subr.mxu0 0.0
  %1844 = vmatpush1.xpose.msra.mxu0 %v1779
  %1845 = vmatprep.subr.mxu0 0.0
  %1846 = vmatpush1.xpose.msra.mxu0 %v1781
  %1847 = vmatprep.mubr.f32.mxu0 0.0
  %1848 = vmatmul.mubr.f32.gmra.mrb[0].mxu0 %v1717
  %v1849 = vpop.f32.mrb[0].mxu0
  %v1850 = vadd.f32 0.0, %v1849
  %v1851 = vpop.f32.mrb[0].mxu0
  %v1852 = vadd.f32 0.0, %v1851
  %1853 = vdwg.mxu0
  %v1854 = vmax.f32 %v1648, %v1650
  %1855 = vmax.xlane.f32.xlu0 %v1854
  %v1856 = vpop.xlane.xlu0 %1855
  %v1857 = vmax.f32 %v1850, %v1852
  %1858 = vmax.xlane.f32.xlu0 %v1857
  %v1859 = vpop.xlane.xlu0 %1858
  %v1860 = vsub.f32 %v1648, %v1856
  %v1861 = vsub.f32 %v1650, %v1856
  %v1862 = vsub.f32 %v1850, %v1859
  %v1863 = vsub.f32 %v1852, %v1859
  %v1864 = vmul.f32 %v1860, 1.442695
  %v1865 = vpow.pop %v1864
  %v1866 = vmul.f32 %v1861, 1.442695
  %v1867 = vpow.pop %v1866
  %v1868 = vmul.f32 %v1862, 1.442695
  %v1869 = vpow.pop %v1868
  %v1870 = vmul.f32 %v1863, 1.442695
  %v1871 = vpow.pop %v1870
  %v1872 = vadd.f32 %v1865, %v1867
  %1873 = vadd.xlane.f32.xlu0 %v1872
  %v1874 = vpop.xlane.xlu0 %1873
  %v1875 = vadd.f32 %v1869, %v1871
  %1876 = vadd.xlane.f32.xlu0 %v1875
  %v1877 = vpop.xlane.xlu0 %1876
  %v1878 = vrcp.pop %v1874
  %v1879 = vrcp.pop %v1877
  %v1880 = vmul.f32 %v1865, %v1878
  %v1881 = vmul.f32 %v1867, %v1878
  %v1882 = vmul.f32 %v1869, %v1879
  %v1883 = vmul.f32 %v1871, %v1879
  %1884 = vrot.lane.b32.xlu0 %v339, 32
  %v1885 = vpop.permute.xlu0 %1884
  %1886 = vrot.lane.b32.xlu0 %v341, 32
  %v1887 = vpop.permute.xlu0 %1886
  %1888 = vrot.lane.b32.xlu0 %v343, 32
  %v1889 = vpop.permute.xlu0 %1888
  %1890 = vrot.lane.b32.xlu0 %v345, 32
  %v1891 = vpop.permute.xlu0 %1890
  %1892 = vrot.lane.b32.xlu0 %v347, 32
  %v1893 = vpop.permute.xlu0 %1892
  %1894 = vrot.lane.b32.xlu0 %v349, 32
  %v1895 = vpop.permute.xlu0 %1894
  %1896 = vrot.lane.b32.xlu0 %v351, 32
  %v1897 = vpop.permute.xlu0 %1896
  %1898 = vrot.lane.b32.xlu0 %v353, 32
  %v1899 = vpop.permute.xlu0 %1898
  %1900 = vrot.lane.b32.xlu0 %v355, 32
  %v1901 = vpop.permute.xlu0 %1900
  %1902 = vrot.lane.b32.xlu0 %v357, 32
  %v1903 = vpop.permute.xlu0 %1902
  %1904 = vrot.lane.b32.xlu0 %v359, 32
  %v1905 = vpop.permute.xlu0 %1904
  %1906 = vrot.lane.b32.xlu0 %v361, 32
  %v1907 = vpop.permute.xlu0 %1906
  %1908 = vrot.lane.b32.xlu0 %v363, 32
  %v1909 = vpop.permute.xlu0 %1908
  %1910 = vrot.lane.b32.xlu0 %v365, 32
  %v1911 = vpop.permute.xlu0 %1910
  %1912 = vrot.lane.b32.xlu0 %v367, 32
  %v1913 = vpop.permute.xlu0 %1912
  %1914 = vrot.lane.b32.xlu0 %v369, 32
  %v1915 = vpop.permute.xlu0 %1914
  %1916 = vrot.lane.b32.xlu0 %v371, 32
  %v1917 = vpop.permute.xlu0 %1916
  %1918 = vrot.lane.b32.xlu0 %v373, 32
  %v1919 = vpop.permute.xlu0 %1918
  %1920 = vrot.lane.b32.xlu0 %v375, 32
  %v1921 = vpop.permute.xlu0 %1920
  %1922 = vrot.lane.b32.xlu0 %v377, 32
  %v1923 = vpop.permute.xlu0 %1922
  %1924 = vrot.lane.b32.xlu0 %v379, 32
  %v1925 = vpop.permute.xlu0 %1924
  %1926 = vrot.lane.b32.xlu0 %v381, 32
  %v1927 = vpop.permute.xlu0 %1926
  %1928 = vrot.lane.b32.xlu0 %v383, 32
  %v1929 = vpop.permute.xlu0 %1928
  %1930 = vrot.lane.b32.xlu0 %v385, 32
  %v1931 = vpop.permute.xlu0 %1930
  %1932 = vrot.lane.b32.xlu0 %v387, 32
  %v1933 = vpop.permute.xlu0 %1932
  %1934 = vrot.lane.b32.xlu0 %v389, 32
  %v1935 = vpop.permute.xlu0 %1934
  %1936 = vrot.lane.b32.xlu0 %v391, 32
  %v1937 = vpop.permute.xlu0 %1936
  %1938 = vrot.lane.b32.xlu0 %v393, 32
  %v1939 = vpop.permute.xlu0 %1938
  %1940 = vrot.lane.b32.xlu0 %v395, 32
  %v1941 = vpop.permute.xlu0 %1940
  %1942 = vrot.lane.b32.xlu0 %v397, 32
  %v1943 = vpop.permute.xlu0 %1942
  %1944 = vrot.lane.b32.xlu0 %v399, 32
  %v1945 = vpop.permute.xlu0 %1944
  %1946 = vrot.lane.b32.xlu0 %v401, 32
  %v1947 = vpop.permute.xlu0 %1946
  %1980 = vmatprep.subr.mxu0 0.0
  %1981 = vmatpush1.msra.mxu0 %v1885
  %1982 = vmatprep.subr.mxu0 0.0
  %1983 = vmatpush1.msra.mxu0 %v1887
  %1984 = vmatprep.subr.mxu0 0.0
  %1985 = vmatpush1.msra.mxu0 %v1889
  %1986 = vmatprep.subr.mxu0 0.0
  %1987 = vmatpush1.msra.mxu0 %v1891
  %1988 = vmatprep.subr.mxu0 0.0
  %1989 = vmatpush1.msra.mxu0 %v1893
  %1990 = vmatprep.subr.mxu0 0.0
  %1991 = vmatpush1.msra.mxu0 %v1895
  %1992 = vmatprep.subr.mxu0 0.0
  %1993 = vmatpush1.msra.mxu0 %v1897
  %1994 = vmatprep.subr.mxu0 0.0
  %1995 = vmatpush1.msra.mxu0 %v1899
  %1996 = vmatprep.subr.mxu0 0.0
  %1997 = vmatpush1.msra.mxu0 %v1901
  %1998 = vmatprep.subr.mxu0 0.0
  %1999 = vmatpush1.msra.mxu0 %v1903
  %2000 = vmatprep.subr.mxu0 0.0
  %2001 = vmatpush1.msra.mxu0 %v1905
  %2002 = vmatprep.subr.mxu0 0.0
  %2003 = vmatpush1.msra.mxu0 %v1907
  %2004 = vmatprep.subr.mxu0 0.0
  %2005 = vmatpush1.msra.mxu0 %v1909
  %2006 = vmatprep.subr.mxu0 0.0
  %2007 = vmatpush1.msra.mxu0 %v1911
  %2008 = vmatprep.subr.mxu0 0.0
  %2009 = vmatpush1.msra.mxu0 %v1913
  %2010 = vmatprep.subr.mxu0 0.0
  %2011 = vmatpush1.msra.mxu0 %v1915
  %2012 = vmatprep.subr.mxu0 0.0
  %2013 = vmatpush1.msra.mxu0 %v1917
  %2014 = vmatprep.subr.mxu0 0.0
  %2015 = vmatpush1.msra.mxu0 %v1919
  %2016 = vmatprep.subr.mxu0 0.0
  %2017 = vmatpush1.msra.mxu0 %v1921
  %2018 = vmatprep.subr.mxu0 0.0
  %2019 = vmatpush1.msra.mxu0 %v1923
  %2020 = vmatprep.subr.mxu0 0.0
  %2021 = vmatpush1.msra.mxu0 %v1925
  %2022 = vmatprep.subr.mxu0 0.0
  %2023 = vmatpush1.msra.mxu0 %v1927
  %2024 = vmatprep.subr.mxu0 0.0
  %2025 = vmatpush1.msra.mxu0 %v1929
  %2026 = vmatprep.subr.mxu0 0.0
  %2027 = vmatpush1.msra.mxu0 %v1931
  %2028 = vmatprep.subr.mxu0 0.0
  %2029 = vmatpush1.msra.mxu0 %v1933
  %2030 = vmatprep.subr.mxu0 0.0
  %2031 = vmatpush1.msra.mxu0 %v1935
  %2032 = vmatprep.subr.mxu0 0.0
  %2033 = vmatpush1.msra.mxu0 %v1937
  %2034 = vmatprep.subr.mxu0 0.0
  %2035 = vmatpush1.msra.mxu0 %v1939
  %2036 = vmatprep.subr.mxu0 0.0
  %2037 = vmatpush1.msra.mxu0 %v1941
  %2038 = vmatprep.subr.mxu0 0.0
  %2039 = vmatpush1.msra.mxu0 %v1943
  %2040 = vmatprep.subr.mxu0 0.0
  %2041 = vmatpush1.msra.mxu0 %v1945
  %2042 = vmatprep.subr.mxu0 0.0
  %2043 = vmatpush1.msra.mxu0 %v1947
  %2044 = vmatprep.mubr.f32.mxu0 %v1881
  %2045 = vmatmul.mubr.f32.gmra.mrb[0].mxu0 %v1880
  %v2046 = vpop.f32.mrb[0].mxu0
  %v2047 = vadd.f32 0.0, %v2046
  %v2048 = vpop.f32.mrb[0].mxu0
  %2049 = vdwg.mxu0
  %2050 = vrot.lane.b32.xlu0 %v403, 32
  %v2051 = vpop.permute.xlu0 %2050
  %2052 = vrot.lane.b32.xlu0 %v405, 32
  %v2053 = vpop.permute.xlu0 %2052
  %2054 = vrot.lane.b32.xlu0 %v407, 32
  %v2055 = vpop.permute.xlu0 %2054
  %2056 = vrot.lane.b32.xlu0 %v409, 32
  %v2057 = vpop.permute.xlu0 %2056
  %2058 = vrot.lane.b32.xlu0 %v411, 32
  %v2059 = vpop.permute.xlu0 %2058
  %2060 = vrot.lane.b32.xlu0 %v413, 32
  %v2061 = vpop.permute.xlu0 %2060
  %2062 = vrot.lane.b32.xlu0 %v415, 32
  %v2063 = vpop.permute.xlu0 %2062
  %2064 = vrot.lane.b32.xlu0 %v417, 32
  %v2065 = vpop.permute.xlu0 %2064
  %2066 = vrot.lane.b32.xlu0 %v419, 32
  %v2067 = vpop.permute.xlu0 %2066
  %2068 = vrot.lane.b32.xlu0 %v421, 32
  %v2069 = vpop.permute.xlu0 %2068
  %2070 = vrot.lane.b32.xlu0 %v423, 32
  %v2071 = vpop.permute.xlu0 %2070
  %2072 = vrot.lane.b32.xlu0 %v425, 32
  %v2073 = vpop.permute.xlu0 %2072
  %2074 = vrot.lane.b32.xlu0 %v427, 32
  %v2075 = vpop.permute.xlu0 %2074
  %2076 = vrot.lane.b32.xlu0 %v429, 32
  %v2077 = vpop.permute.xlu0 %2076
  %2078 = vrot.lane.b32.xlu0 %v431, 32
  %v2079 = vpop.permute.xlu0 %2078
  %2080 = vrot.lane.b32.xlu0 %v433, 32
  %v2081 = vpop.permute.xlu0 %2080
  %2082 = vrot.lane.b32.xlu0 %v435, 32
  %v2083 = vpop.permute.xlu0 %2082
  %2084 = vrot.lane.b32.xlu0 %v437, 32
  %v2085 = vpop.permute.xlu0 %2084
  %2086 = vrot.lane.b32.xlu0 %v439, 32
  %v2087 = vpop.permute.xlu0 %2086
  %2088 = vrot.lane.b32.xlu0 %v441, 32
  %v2089 = vpop.permute.xlu0 %2088
  %2090 = vrot.lane.b32.xlu0 %v443, 32
  %v2091 = vpop.permute.xlu0 %2090
  %2092 = vrot.lane.b32.xlu0 %v445, 32
  %v2093 = vpop.permute.xlu0 %2092
  %2094 = vrot.lane.b32.xlu0 %v447, 32
  %v2095 = vpop.permute.xlu0 %2094
  %2096 = vrot.lane.b32.xlu0 %v449, 32
  %v2097 = vpop.permute.xlu0 %2096
  %2098 = vrot.lane.b32.xlu0 %v451, 32
  %v2099 = vpop.permute.xlu0 %2098
  %2100 = vrot.lane.b32.xlu0 %v453, 32
  %v2101 = vpop.permute.xlu0 %2100
  %2102 = vrot.lane.b32.xlu0 %v455, 32
  %v2103 = vpop.permute.xlu0 %2102
  %2104 = vrot.lane.b32.xlu0 %v457, 32
  %v2105 = vpop.permute.xlu0 %2104
  %2106 = vrot.lane.b32.xlu0 %v459, 32
  %v2107 = vpop.permute.xlu0 %2106
  %2108 = vrot.lane.b32.xlu0 %v461, 32
  %v2109 = vpop.permute.xlu0 %2108
  %2110 = vrot.lane.b32.xlu0 %v463, 32
  %v2111 = vpop.permute.xlu0 %2110
  %2112 = vrot.lane.b32.xlu0 %v465, 32
  %v2113 = vpop.permute.xlu0 %2112
  %2146 = vmatprep.subr.mxu0 0.0
  %2147 = vmatpush1.msra.mxu0 %v2051
  %2148 = vmatprep.subr.mxu0 0.0
  %2149 = vmatpush1.msra.mxu0 %v2053
  %2150 = vmatprep.subr.mxu0 0.0
  %2151 = vmatpush1.msra.mxu0 %v2055
  %2152 = vmatprep.subr.mxu0 0.0
  %2153 = vmatpush1.msra.mxu0 %v2057
  %2154 = vmatprep.subr.mxu0 0.0
  %2155 = vmatpush1.msra.mxu0 %v2059
  %2156 = vmatprep.subr.mxu0 0.0
  %2157 = vmatpush1.msra.mxu0 %v2061
  %2158 = vmatprep.subr.mxu0 0.0
  %2159 = vmatpush1.msra.mxu0 %v2063
  %2160 = vmatprep.subr.mxu0 0.0
  %2161 = vmatpush1.msra.mxu0 %v2065
  %2162 = vmatprep.subr.mxu0 0.0
  %2163 = vmatpush1.msra.mxu0 %v2067
  %2164 = vmatprep.subr.mxu0 0.0
  %2165 = vmatpush1.msra.mxu0 %v2069
  %2166 = vmatprep.subr.mxu0 0.0
  %2167 = vmatpush1.msra.mxu0 %v2071
  %2168 = vmatprep.subr.mxu0 0.0
  %2169 = vmatpush1.msra.mxu0 %v2073
  %2170 = vmatprep.subr.mxu0 0.0
  %2171 = vmatpush1.msra.mxu0 %v2075
  %2172 = vmatprep.subr.mxu0 0.0
  %2173 = vmatpush1.msra.mxu0 %v2077
  %2174 = vmatprep.subr.mxu0 0.0
  %2175 = vmatpush1.msra.mxu0 %v2079
  %2176 = vmatprep.subr.mxu0 0.0
  %2177 = vmatpush1.msra.mxu0 %v2081
  %2178 = vmatprep.subr.mxu0 0.0
  %2179 = vmatpush1.msra.mxu0 %v2083
  %2180 = vmatprep.subr.mxu0 0.0
  %2181 = vmatpush1.msra.mxu0 %v2085
  %2182 = vmatprep.subr.mxu0 0.0
  %2183 = vmatpush1.msra.mxu0 %v2087
  %2184 = vmatprep.subr.mxu0 0.0
  %2185 = vmatpush1.msra.mxu0 %v2089
  %2186 = vmatprep.subr.mxu0 0.0
  %2187 = vmatpush1.msra.mxu0 %v2091
  %2188 = vmatprep.subr.mxu0 0.0
  %2189 = vmatpush1.msra.mxu0 %v2093
  %2190 = vmatprep.subr.mxu0 0.0
  %2191 = vmatpush1.msra.mxu0 %v2095
  %2192 = vmatprep.subr.mxu0 0.0
  %2193 = vmatpush1.msra.mxu0 %v2097
  %2194 = vmatprep.subr.mxu0 0.0
  %2195 = vmatpush1.msra.mxu0 %v2099
  %2196 = vmatprep.subr.mxu0 0.0
  %2197 = vmatpush1.msra.mxu0 %v2101
  %2198 = vmatprep.subr.mxu0 0.0
  %2199 = vmatpush1.msra.mxu0 %v2103
  %2200 = vmatprep.subr.mxu0 0.0
  %2201 = vmatpush1.msra.mxu0 %v2105
  %2202 = vmatprep.subr.mxu0 0.0
  %2203 = vmatpush1.msra.mxu0 %v2107
  %2204 = vmatprep.subr.mxu0 0.0
  %2205 = vmatpush1.msra.mxu0 %v2109
  %2206 = vmatprep.subr.mxu0 0.0
  %2207 = vmatpush1.msra.mxu0 %v2111
  %2208 = vmatprep.subr.mxu0 0.0
  %2209 = vmatpush1.msra.mxu0 %v2113
  %2210 = vmatprep.mubr.f32.mxu0 %v1883
  %2211 = vmatmul.mubr.f32.gmra.mrb[0].mxu0 %v1882
  %v2212 = vpop.f32.mrb[0].mxu0
  %v2213 = vadd.f32 0.0, %v2212
  %v2214 = vpop.f32.mrb[0].mxu0
  %2215 = vdwg.mxu0
  %s2216 = scalar_lea.vmem %s10, 32
  %v2217 = vld [vmem:[%s2216] sm:$0xff]
  %v2218 = vld [vmem:[%s2216 + $0x8] sm:$0xff]
  %v2219 = vld [vmem:[%s2216 + $0x10] sm:$0xff]
  %v2220 = vld [vmem:[%s2216 + $0x18] sm:$0xff]
  %s2221 = scalar_lea.vmem %s11, 1
  %v2222 = vld [vmem:[%s2221] sm:$0x1]
  %v2224 = vlaneseq
  %v2225 = vshrl.u32 %v2224, 7
  %v2226 = vsub.s32 0, %v2225
  %v2227 = vrot.slane %v2222, %v2226
  %v2230 = vsel %vm478, %v2047, 0
  %v2233 = vsel %vm478, %v2213, 0
  %2235 = vmatprep.subr.mxu0 0.0
  %2236 = vmatpush1.msra.mxu0 %v2217
  %2237 = vmatprep.subr.mxu0 0.0
  %2238 = vmatpush1.msra.mxu0 %v2218
  %2239 = vmatprep.subr.mxu0 0.0
  %2240 = vmatpush1.msra.mxu0 %v2219
  %2241 = vmatprep.subr.mxu0 0.0
  %2242 = vmatpush1.msra.mxu0 %v2220
  %2243 = vmatprep.subr.mxu0 0.0
  %2244 = vmatpush1.msra.mxu0 0.0
  %2245 = vmatprep.subr.mxu0 0.0
  %2246 = vmatpush1.msra.mxu0 0.0
  %2247 = vmatprep.subr.mxu0 0.0
  %2248 = vmatpush1.msra.mxu0 0.0
  %2249 = vmatprep.subr.mxu0 0.0
  %2250 = vmatpush1.msra.mxu0 0.0
  %2251 = vmatprep.subr.mxu0 0.0
  %2252 = vmatpush1.msra.mxu0 0.0
  %2253 = vmatprep.subr.mxu0 0.0
  %2254 = vmatpush1.msra.mxu0 0.0
  %2255 = vmatprep.subr.mxu0 0.0
  %2256 = vmatpush1.msra.mxu0 0.0
  %2257 = vmatprep.subr.mxu0 0.0
  %2258 = vmatpush1.msra.mxu0 0.0
  %2259 = vmatprep.subr.mxu0 0.0
  %2260 = vmatpush1.msra.mxu0 0.0
  %2261 = vmatprep.subr.mxu0 0.0
  %2262 = vmatpush1.msra.mxu0 0.0
  %2263 = vmatprep.subr.mxu0 0.0
  %2264 = vmatpush1.msra.mxu0 0.0
  %2265 = vmatprep.subr.mxu0 0.0
  %2266 = vmatpush1.msra.mxu0 0.0
  %2267 = vmatprep.subr.mxu0 0.0
  %2268 = vmatpush1.msra.mxu0 0.0
  %2269 = vmatprep.subr.mxu0 0.0
  %2270 = vmatpush1.msra.mxu0 0.0
  %2271 = vmatprep.subr.mxu0 0.0
  %2272 = vmatpush1.msra.mxu0 0.0
  %2273 = vmatprep.subr.mxu0 0.0
  %2274 = vmatpush1.msra.mxu0 0.0
  %2275 = vmatprep.subr.mxu0 0.0
  %2276 = vmatpush1.msra.mxu0 0.0
  %2277 = vmatprep.subr.mxu0 0.0
  %2278 = vmatpush1.msra.mxu0 0.0
  %2279 = vmatprep.subr.mxu0 0.0
  %2280 = vmatpush1.msra.mxu0 0.0
  %2281 = vmatprep.subr.mxu0 0.0
  %2282 = vmatpush1.msra.mxu0 0.0
  %2283 = vmatprep.subr.mxu0 0.0
  %2284 = vmatpush1.msra.mxu0 0.0
  %2285 = vmatprep.subr.mxu0 0.0
  %2286 = vmatpush1.msra.mxu0 0.0
  %2287 = vmatprep.subr.mxu0 0.0
  %2288 = vmatpush1.msra.mxu0 0.0
  %2289 = vmatprep.subr.mxu0 0.0
  %2290 = vmatpush1.msra.mxu0 0.0
  %2291 = vmatprep.subr.mxu0 0.0
  %2292 = vmatpush1.msra.mxu0 0.0
  %2293 = vmatprep.subr.mxu0 0.0
  %2294 = vmatpush1.msra.mxu0 0.0
  %2295 = vmatprep.subr.mxu0 0.0
  %2296 = vmatpush1.msra.mxu0 0.0
  %2297 = vmatprep.subr.mxu0 0.0
  %2298 = vmatpush1.msra.mxu0 0.0
  %2299 = vmatprep.mubr.f32.mxu0 0.0
  %2300 = vmatmul.mubr.f32.gmra.mrb[0].mxu0 %v2230
  %v2301 = vpop.f32.mrb[0].mxu0
  %v2302 = vadd.f32 %v2227, %v2301
  %v2303 = vpop.f32.mrb[0].mxu0
  %2304 = vmatprep.mubr.f32.mxu0 0.0
  %2305 = vmatmul.mubr.f32.gmra.mrb[0].mxu0 %v2233
  %v2306 = vpop.f32.mrb[0].mxu0
  %v2307 = vadd.f32 %v2227, %v2306
  %v2308 = vpop.f32.mrb[0].mxu0
  %2309 = vdwg.mxu0
  %v2310 = vadd.f32 %v1354, %v2302
  %v2311 = vadd.f32 %v1355, %v2307
  %s2312 = scalar_lea.vmem %s8, 64
  %v2313 = vld [vmem:[%s2312] sm:$0xff]
  %v2314 = vld [vmem:[%s2312 + $0x8] sm:$0xff]
  %v2315 = vld [vmem:[%s2312 + $0x10] sm:$0xff]
  %v2316 = vld [vmem:[%s2312 + $0x18] sm:$0xff]
  %s2317 = scalar_lea.vmem %s9, 2
  %v2318 = vld [vmem:[%s2317] sm:$0x1]
  %v2320 = vlaneseq
  %v2321 = vshrl.u32 %v2320, 7
  %v2322 = vsub.s32 0, %v2321
  %v2323 = vrot.slane %v2318, %v2322
  %v2326 = vsel %vm478, %v2310, 0
  %v2329 = vsel %vm478, %v2311, 0
  %2331 = vmatprep.subr.mxu0 0.0
  %2332 = vmatpush1.msra.mxu0 %v2313
  %2333 = vmatprep.subr.mxu0 0.0
  %2334 = vmatpush1.msra.mxu0 %v2314
  %2335 = vmatprep.subr.mxu0 0.0
  %2336 = vmatpush1.msra.mxu0 %v2315
  %2337 = vmatprep.subr.mxu0 0.0
  %2338 = vmatpush1.msra.mxu0 %v2316
  %2339 = vmatprep.subr.mxu0 0.0
  %2340 = vmatpush1.msra.mxu0 0.0
  %2341 = vmatprep.subr.mxu0 0.0
  %2342 = vmatpush1.msra.mxu0 0.0
  %2343 = vmatprep.subr.mxu0 0.0
  %2344 = vmatpush1.msra.mxu0 0.0
  %2345 = vmatprep.subr.mxu0 0.0
  %2346 = vmatpush1.msra.mxu0 0.0
  %2347 = vmatprep.subr.mxu0 0.0
  %2348 = vmatpush1.msra.mxu0 0.0
  %2349 = vmatprep.subr.mxu0 0.0
  %2350 = vmatpush1.msra.mxu0 0.0
  %2351 = vmatprep.subr.mxu0 0.0
  %2352 = vmatpush1.msra.mxu0 0.0
  %2353 = vmatprep.subr.mxu0 0.0
  %2354 = vmatpush1.msra.mxu0 0.0
  %2355 = vmatprep.subr.mxu0 0.0
  %2356 = vmatpush1.msra.mxu0 0.0
  %2357 = vmatprep.subr.mxu0 0.0
  %2358 = vmatpush1.msra.mxu0 0.0
  %2359 = vmatprep.subr.mxu0 0.0
  %2360 = vmatpush1.msra.mxu0 0.0
  %2361 = vmatprep.subr.mxu0 0.0
  %2362 = vmatpush1.msra.mxu0 0.0
  %2363 = vmatprep.subr.mxu0 0.0
  %2364 = vmatpush1.msra.mxu0 0.0
  %2365 = vmatprep.subr.mxu0 0.0
  %2366 = vmatpush1.msra.mxu0 0.0
  %2367 = vmatprep.subr.mxu0 0.0
  %2368 = vmatpush1.msra.mxu0 0.0
  %2369 = vmatprep.subr.mxu0 0.0
  %2370 = vmatpush1.msra.mxu0 0.0
  %2371 = vmatprep.subr.mxu0 0.0
  %2372 = vmatpush1.msra.mxu0 0.0
  %2373 = vmatprep.subr.mxu0 0.0
  %2374 = vmatpush1.msra.mxu0 0.0
  %2375 = vmatprep.subr.mxu0 0.0
  %2376 = vmatpush1.msra.mxu0 0.0
  %2377 = vmatprep.subr.mxu0 0.0
  %2378 = vmatpush1.msra.mxu0 0.0
  %2379 = vmatprep.subr.mxu0 0.0
  %2380 = vmatpush1.msra.mxu0 0.0
  %2381 = vmatprep.subr.mxu0 0.0
  %2382 = vmatpush1.msra.mxu0 0.0
  %2383 = vmatprep.subr.mxu0 0.0
  %2384 = vmatpush1.msra.mxu0 0.0
  %2385 = vmatprep.subr.mxu0 0.0
  %2386 = vmatpush1.msra.mxu0 0.0
  %2387 = vmatprep.subr.mxu0 0.0
  %2388 = vmatpush1.msra.mxu0 0.0
  %2389 = vmatprep.subr.mxu0 0.0
  %2390 = vmatpush1.msra.mxu0 0.0
  %2391 = vmatprep.subr.mxu0 0.0
  %2392 = vmatpush1.msra.mxu0 0.0
  %2393 = vmatprep.subr.mxu0 0.0
  %2394 = vmatpush1.msra.mxu0 0.0
  %2395 = vmatprep.mubr.f32.mxu0 0.0
  %2396 = vmatmul.mubr.f32.gmra.mrb[0].mxu0 %v2326
  %v2397 = vpop.f32.mrb[0].mxu0
  %v2398 = vadd.f32 %v2323, %v2397
  %v2399 = vpop.f32.mrb[0].mxu0
  %2400 = vmatprep.mubr.f32.mxu0 0.0
  %2401 = vmatmul.mubr.f32.gmra.mrb[0].mxu0 %v2329
  %v2402 = vpop.f32.mrb[0].mxu0
  %v2403 = vadd.f32 %v2323, %v2402
  %v2404 = vpop.f32.mrb[0].mxu0
  %2405 = vdwg.mxu0
  %v2407 = vsel %vm478, %v2398, 0
  %v2410 = vsel %vm478, %v340, 0
  %v2413 = vsel %vm478, %v342, 0
  %v2416 = vsel %vm478, %v344, 0
  %v2419 = vsel %vm478, %v346, 0
  %v2422 = vsel %vm478, %v348, 0
  %v2425 = vsel %vm478, %v350, 0
  %v2428 = vsel %vm478, %v352, 0
  %v2431 = vsel %vm478, %v354, 0
  %v2434 = vsel %vm478, %v356, 0
  %v2437 = vsel %vm478, %v358, 0
  %v2440 = vsel %vm478, %v360, 0
  %v2443 = vsel %vm478, %v362, 0
  %v2446 = vsel %vm478, %v364, 0
  %v2449 = vsel %vm478, %v366, 0
  %v2452 = vsel %vm478, %v368, 0
  %v2455 = vsel %vm478, %v370, 0
  %v2458 = vsel %vm478, %v372, 0
  %v2461 = vsel %vm478, %v374, 0
  %v2464 = vsel %vm478, %v376, 0
  %v2467 = vsel %vm478, %v378, 0
  %v2470 = vsel %vm478, %v380, 0
  %v2473 = vsel %vm478, %v382, 0
  %v2476 = vsel %vm478, %v384, 0
  %v2479 = vsel %vm478, %v386, 0
  %v2482 = vsel %vm478, %v388, 0
  %v2485 = vsel %vm478, %v390, 0
  %v2488 = vsel %vm478, %v392, 0
  %v2491 = vsel %vm478, %v394, 0
  %v2494 = vsel %vm478, %v396, 0
  %v2497 = vsel %vm478, %v398, 0
  %v2500 = vsel %vm478, %v400, 0
  %v2503 = vsel %vm478, %v402, 0
  %2505 = vmatprep.subr.mxu0 0.0
  %2506 = vmatpush1.xpose.msra.mxu0 %v2410
  %2507 = vmatprep.subr.mxu0 0.0
  %2508 = vmatpush1.xpose.msra.mxu0 %v2413
  %2509 = vmatprep.subr.mxu0 0.0
  %2510 = vmatpush1.xpose.msra.mxu0 %v2416
  %2511 = vmatprep.subr.mxu0 0.0
  %2512 = vmatpush1.xpose.msra.mxu0 %v2419
  %2513 = vmatprep.subr.mxu0 0.0
  %2514 = vmatpush1.xpose.msra.mxu0 %v2422
  %2515 = vmatprep.subr.mxu0 0.0
  %2516 = vmatpush1.xpose.msra.mxu0 %v2425
  %2517 = vmatprep.subr.mxu0 0.0
  %2518 = vmatpush1.xpose.msra.mxu0 %v2428
  %2519 = vmatprep.subr.mxu0 0.0
  %2520 = vmatpush1.xpose.msra.mxu0 %v2431
  %2521 = vmatprep.subr.mxu0 0.0
  %2522 = vmatpush1.xpose.msra.mxu0 %v2434
  %2523 = vmatprep.subr.mxu0 0.0
  %2524 = vmatpush1.xpose.msra.mxu0 %v2437
  %2525 = vmatprep.subr.mxu0 0.0
  %2526 = vmatpush1.xpose.msra.mxu0 %v2440
  %2527 = vmatprep.subr.mxu0 0.0
  %2528 = vmatpush1.xpose.msra.mxu0 %v2443
  %2529 = vmatprep.subr.mxu0 0.0
  %2530 = vmatpush1.xpose.msra.mxu0 %v2446
  %2531 = vmatprep.subr.mxu0 0.0
  %2532 = vmatpush1.xpose.msra.mxu0 %v2449
  %2533 = vmatprep.subr.mxu0 0.0
  %2534 = vmatpush1.xpose.msra.mxu0 %v2452
  %2535 = vmatprep.subr.mxu0 0.0
  %2536 = vmatpush1.xpose.msra.mxu0 %v2455
  %2537 = vmatprep.subr.mxu0 0.0
  %2538 = vmatpush1.xpose.msra.mxu0 %v2458
  %2539 = vmatprep.subr.mxu0 0.0
  %2540 = vmatpush1.xpose.msra.mxu0 %v2461
  %2541 = vmatprep.subr.mxu0 0.0
  %2542 = vmatpush1.xpose.msra.mxu0 %v2464
  %2543 = vmatprep.subr.mxu0 0.0
  %2544 = vmatpush1.xpose.msra.mxu0 %v2467
  %2545 = vmatprep.subr.mxu0 0.0
  %2546 = vmatpush1.xpose.msra.mxu0 %v2470
  %2547 = vmatprep.subr.mxu0 0.0
  %2548 = vmatpush1.xpose.msra.mxu0 %v2473
  %2549 = vmatprep.subr.mxu0 0.0
  %2550 = vmatpush1.xpose.msra.mxu0 %v2476
  %2551 = vmatprep.subr.mxu0 0.0
  %2552 = vmatpush1.xpose.msra.mxu0 %v2479
  %2553 = vmatprep.subr.mxu0 0.0
  %2554 = vmatpush1.xpose.msra.mxu0 %v2482
  %2555 = vmatprep.subr.mxu0 0.0
  %2556 = vmatpush1.xpose.msra.mxu0 %v2485
  %2557 = vmatprep.subr.mxu0 0.0
  %2558 = vmatpush1.xpose.msra.mxu0 %v2488
  %2559 = vmatprep.subr.mxu0 0.0
  %2560 = vmatpush1.xpose.msra.mxu0 %v2491
  %2561 = vmatprep.subr.mxu0 0.0
  %2562 = vmatpush1.xpose.msra.mxu0 %v2494
  %2563 = vmatprep.subr.mxu0 0.0
  %2564 = vmatpush1.xpose.msra.mxu0 %v2497
  %2565 = vmatprep.subr.mxu0 0.0
  %2566 = vmatpush1.xpose.msra.mxu0 %v2500
  %2567 = vmatprep.subr.mxu0 0.0
  %2568 = vmatpush1.xpose.msra.mxu0 %v2503
  %2569 = vmatprep.mubr.f32.mxu0 0.0
  %2570 = vmatmul.mubr.f32.gmra.mrb[0].mxu0 %v2407
  %v2571 = vpop.f32.mrb[0].mxu0
  %v2572 = vadd.f32 0.0, %v2571
  %v2573 = vpop.f32.mrb[0].mxu0
  %v2574 = vadd.f32 0.0, %v2573
  %2575 = vdwg.mxu0
  %v2577 = vsel %vm478, %v2403, 0
  %v2580 = vsel %vm478, %v404, 0
  %v2583 = vsel %vm478, %v406, 0
  %v2586 = vsel %vm478, %v408, 0
  %v2589 = vsel %vm478, %v410, 0
  %v2592 = vsel %vm478, %v412, 0
  %v2595 = vsel %vm478, %v414, 0
  %v2598 = vsel %vm478, %v416, 0
  %v2601 = vsel %vm478, %v418, 0
  %v2604 = vsel %vm478, %v420, 0
  %v2607 = vsel %vm478, %v422, 0
  %v2610 = vsel %vm478, %v424, 0
  %v2613 = vsel %vm478, %v426, 0
  %v2616 = vsel %vm478, %v428, 0
  %v2619 = vsel %vm478, %v430, 0
  %v2622 = vsel %vm478, %v432, 0
  %v2625 = vsel %vm478, %v434, 0
  %v2628 = vsel %vm478, %v436, 0
  %v2631 = vsel %vm478, %v438, 0
  %v2634 = vsel %vm478, %v440, 0
  %v2637 = vsel %vm478, %v442, 0
  %v2640 = vsel %vm478, %v444, 0
  %v2643 = vsel %vm478, %v446, 0
  %v2646 = vsel %vm478, %v448, 0
  %v2649 = vsel %vm478, %v450, 0
  %v2652 = vsel %vm478, %v452, 0
  %v2655 = vsel %vm478, %v454, 0
  %v2658 = vsel %vm478, %v456, 0
  %v2661 = vsel %vm478, %v458, 0
  %v2664 = vsel %vm478, %v460, 0
  %v2667 = vsel %vm478, %v462, 0
  %v2670 = vsel %vm478, %v464, 0
  %v2673 = vsel %vm478, %v466, 0
  %2675 = vmatprep.subr.mxu0 0.0
  %2676 = vmatpush1.xpose.msra.mxu0 %v2580
  %2677 = vmatprep.subr.mxu0 0.0
  %2678 = vmatpush1.xpose.msra.mxu0 %v2583
  %2679 = vmatprep.subr.mxu0 0.0
  %2680 = vmatpush1.xpose.msra.mxu0 %v2586
  %2681 = vmatprep.subr.mxu0 0.0
  %2682 = vmatpush1.xpose.msra.mxu0 %v2589
  %2683 = vmatprep.subr.mxu0 0.0
  %2684 = vmatpush1.xpose.msra.mxu0 %v2592
  %2685 = vmatprep.subr.mxu0 0.0
  %2686 = vmatpush1.xpose.msra.mxu0 %v2595
  %2687 = vmatprep.subr.mxu0 0.0
  %2688 = vmatpush1.xpose.msra.mxu0 %v2598
  %2689 = vmatprep.subr.mxu0 0.0
  %2690 = vmatpush1.xpose.msra.mxu0 %v2601
  %2691 = vmatprep.subr.mxu0 0.0
  %2692 = vmatpush1.xpose.msra.mxu0 %v2604
  %2693 = vmatprep.subr.mxu0 0.0
  %2694 = vmatpush1.xpose.msra.mxu0 %v2607
  %2695 = vmatprep.subr.mxu0 0.0
  %2696 = vmatpush1.xpose.msra.mxu0 %v2610
  %2697 = vmatprep.subr.mxu0 0.0
  %2698 = vmatpush1.xpose.msra.mxu0 %v2613
  %2699 = vmatprep.subr.mxu0 0.0
  %2700 = vmatpush1.xpose.msra.mxu0 %v2616
  %2701 = vmatprep.subr.mxu0 0.0
  %2702 = vmatpush1.xpose.msra.mxu0 %v2619
  %2703 = vmatprep.subr.mxu0 0.0
  %2704 = vmatpush1.xpose.msra.mxu0 %v2622
  %2705 = vmatprep.subr.mxu0 0.0
  %2706 = vmatpush1.xpose.msra.mxu0 %v2625
  %2707 = vmatprep.subr.mxu0 0.0
  %2708 = vmatpush1.xpose.msra.mxu0 %v2628
  %2709 = vmatprep.subr.mxu0 0.0
  %2710 = vmatpush1.xpose.msra.mxu0 %v2631
  %2711 = vmatprep.subr.mxu0 0.0
  %2712 = vmatpush1.xpose.msra.mxu0 %v2634
  %2713 = vmatprep.subr.mxu0 0.0
  %2714 = vmatpush1.xpose.msra.mxu0 %v2637
  %2715 = vmatprep.subr.mxu0 0.0
  %2716 = vmatpush1.xpose.msra.mxu0 %v2640
  %2717 = vmatprep.subr.mxu0 0.0
  %2718 = vmatpush1.xpose.msra.mxu0 %v2643
  %2719 = vmatprep.subr.mxu0 0.0
  %2720 = vmatpush1.xpose.msra.mxu0 %v2646
  %2721 = vmatprep.subr.mxu0 0.0
  %2722 = vmatpush1.xpose.msra.mxu0 %v2649
  %2723 = vmatprep.subr.mxu0 0.0
  %2724 = vmatpush1.xpose.msra.mxu0 %v2652
  %2725 = vmatprep.subr.mxu0 0.0
  %2726 = vmatpush1.xpose.msra.mxu0 %v2655
  %2727 = vmatprep.subr.mxu0 0.0
  %2728 = vmatpush1.xpose.msra.mxu0 %v2658
  %2729 = vmatprep.subr.mxu0 0.0
  %2730 = vmatpush1.xpose.msra.mxu0 %v2661
  %2731 = vmatprep.subr.mxu0 0.0
  %2732 = vmatpush1.xpose.msra.mxu0 %v2664
  %2733 = vmatprep.subr.mxu0 0.0
  %2734 = vmatpush1.xpose.msra.mxu0 %v2667
  %2735 = vmatprep.subr.mxu0 0.0
  %2736 = vmatpush1.xpose.msra.mxu0 %v2670
  %2737 = vmatprep.subr.mxu0 0.0
  %2738 = vmatpush1.xpose.msra.mxu0 %v2673
  %2739 = vmatprep.mubr.f32.mxu0 0.0
  %2740 = vmatmul.mubr.f32.gmra.mrb[0].mxu0 %v2577
  %v2741 = vpop.f32.mrb[0].mxu0
  %v2742 = vadd.f32 0.0, %v2741
  %v2743 = vpop.f32.mrb[0].mxu0
  %v2744 = vadd.f32 0.0, %v2743
  %2745 = vdwg.mxu0
  %v2746 = vmax.f32 %v2572, %v2574
  %2747 = vmax.xlane.f32.xlu0 %v2746
  %v2748 = vpop.xlane.xlu0 %2747
  %v2749 = vmax.f32 %v2742, %v2744
  %2750 = vmax.xlane.f32.xlu0 %v2749
  %v2751 = vpop.xlane.xlu0 %2750
  %v2752 = vsub.f32 %v2572, %v2748
  %v2753 = vsub.f32 %v2574, %v2748
  %v2754 = vsub.f32 %v2742, %v2751
  %v2755 = vsub.f32 %v2744, %v2751
  %v2756 = vmul.f32 %v2752, 1.442695
  %v2757 = vpow.pop %v2756
  %v2758 = vmul.f32 %v2753, 1.442695
  %v2759 = vpow.pop %v2758
  %v2760 = vmul.f32 %v2754, 1.442695
  %v2761 = vpow.pop %v2760
  %v2762 = vmul.f32 %v2755, 1.442695
  %v2763 = vpow.pop %v2762
  %v2764 = vadd.f32 %v2757, %v2759
  %2765 = vadd.xlane.f32.xlu0 %v2764
  %v2766 = vpop.xlane.xlu0 %2765
  %v2767 = vadd.f32 %v2761, %v2763
  %2768 = vadd.xlane.f32.xlu0 %v2767
  %v2769 = vpop.xlane.xlu0 %2768
  %v2770 = vrcp.pop %v2766
  %v2771 = vrcp.pop %v2769
  %v2772 = vmul.f32 %v2757, %v2770
  %v2773 = vmul.f32 %v2759, %v2770
  %v2774 = vmul.f32 %v2761, %v2771
  %v2775 = vmul.f32 %v2763, %v2771
  %2776 = vrot.lane.b32.xlu0 %v340, 96
  %v2777 = vpop.permute.xlu0 %2776
  %2778 = vrot.lane.b32.xlu0 %v342, 96
  %v2779 = vpop.permute.xlu0 %2778
  %2780 = vrot.lane.b32.xlu0 %v344, 96
  %v2781 = vpop.permute.xlu0 %2780
  %2782 = vrot.lane.b32.xlu0 %v346, 96
  %v2783 = vpop.permute.xlu0 %2782
  %2784 = vrot.lane.b32.xlu0 %v348, 96
  %v2785 = vpop.permute.xlu0 %2784
  %2786 = vrot.lane.b32.xlu0 %v350, 96
  %v2787 = vpop.permute.xlu0 %2786
  %2788 = vrot.lane.b32.xlu0 %v352, 96
  %v2789 = vpop.permute.xlu0 %2788
  %2790 = vrot.lane.b32.xlu0 %v354, 96
  %v2791 = vpop.permute.xlu0 %2790
  %2792 = vrot.lane.b32.xlu0 %v356, 96
  %v2793 = vpop.permute.xlu0 %2792
  %2794 = vrot.lane.b32.xlu0 %v358, 96
  %v2795 = vpop.permute.xlu0 %2794
  %2796 = vrot.lane.b32.xlu0 %v360, 96
  %v2797 = vpop.permute.xlu0 %2796
  %2798 = vrot.lane.b32.xlu0 %v362, 96
  %v2799 = vpop.permute.xlu0 %2798
  %2800 = vrot.lane.b32.xlu0 %v364, 96
  %v2801 = vpop.permute.xlu0 %2800
  %2802 = vrot.lane.b32.xlu0 %v366, 96
  %v2803 = vpop.permute.xlu0 %2802
  %2804 = vrot.lane.b32.xlu0 %v368, 96
  %v2805 = vpop.permute.xlu0 %2804
  %2806 = vrot.lane.b32.xlu0 %v370, 96
  %v2807 = vpop.permute.xlu0 %2806
  %2808 = vrot.lane.b32.xlu0 %v372, 96
  %v2809 = vpop.permute.xlu0 %2808
  %2810 = vrot.lane.b32.xlu0 %v374, 96
  %v2811 = vpop.permute.xlu0 %2810
  %2812 = vrot.lane.b32.xlu0 %v376, 96
  %v2813 = vpop.permute.xlu0 %2812
  %2814 = vrot.lane.b32.xlu0 %v378, 96
  %v2815 = vpop.permute.xlu0 %2814
  %2816 = vrot.lane.b32.xlu0 %v380, 96
  %v2817 = vpop.permute.xlu0 %2816
  %2818 = vrot.lane.b32.xlu0 %v382, 96
  %v2819 = vpop.permute.xlu0 %2818
  %2820 = vrot.lane.b32.xlu0 %v384, 96
  %v2821 = vpop.permute.xlu0 %2820
  %2822 = vrot.lane.b32.xlu0 %v386, 96
  %v2823 = vpop.permute.xlu0 %2822
  %2824 = vrot.lane.b32.xlu0 %v388, 96
  %v2825 = vpop.permute.xlu0 %2824
  %2826 = vrot.lane.b32.xlu0 %v390, 96
  %v2827 = vpop.permute.xlu0 %2826
  %2828 = vrot.lane.b32.xlu0 %v392, 96
  %v2829 = vpop.permute.xlu0 %2828
  %2830 = vrot.lane.b32.xlu0 %v394, 96
  %v2831 = vpop.permute.xlu0 %2830
  %2832 = vrot.lane.b32.xlu0 %v396, 96
  %v2833 = vpop.permute.xlu0 %2832
  %2834 = vrot.lane.b32.xlu0 %v398, 96
  %v2835 = vpop.permute.xlu0 %2834
  %2836 = vrot.lane.b32.xlu0 %v400, 96
  %v2837 = vpop.permute.xlu0 %2836
  %2838 = vrot.lane.b32.xlu0 %v402, 96
  %v2839 = vpop.permute.xlu0 %2838
  %2872 = vmatprep.subr.mxu0 0.0
  %2873 = vmatpush1.msra.mxu0 %v2777
  %2874 = vmatprep.subr.mxu0 0.0
  %2875 = vmatpush1.msra.mxu0 %v2779
  %2876 = vmatprep.subr.mxu0 0.0
  %2877 = vmatpush1.msra.mxu0 %v2781
  %2878 = vmatprep.subr.mxu0 0.0
  %2879 = vmatpush1.msra.mxu0 %v2783
  %2880 = vmatprep.subr.mxu0 0.0
  %2881 = vmatpush1.msra.mxu0 %v2785
  %2882 = vmatprep.subr.mxu0 0.0
  %2883 = vmatpush1.msra.mxu0 %v2787
  %2884 = vmatprep.subr.mxu0 0.0
  %2885 = vmatpush1.msra.mxu0 %v2789
  %2886 = vmatprep.subr.mxu0 0.0
  %2887 = vmatpush1.msra.mxu0 %v2791
  %2888 = vmatprep.subr.mxu0 0.0
  %2889 = vmatpush1.msra.mxu0 %v2793
  %2890 = vmatprep.subr.mxu0 0.0
  %2891 = vmatpush1.msra.mxu0 %v2795
  %2892 = vmatprep.subr.mxu0 0.0
  %2893 = vmatpush1.msra.mxu0 %v2797
  %2894 = vmatprep.subr.mxu0 0.0
  %2895 = vmatpush1.msra.mxu0 %v2799
  %2896 = vmatprep.subr.mxu0 0.0
  %2897 = vmatpush1.msra.mxu0 %v2801
  %2898 = vmatprep.subr.mxu0 0.0
  %2899 = vmatpush1.msra.mxu0 %v2803
  %2900 = vmatprep.subr.mxu0 0.0
  %2901 = vmatpush1.msra.mxu0 %v2805
  %2902 = vmatprep.subr.mxu0 0.0
  %2903 = vmatpush1.msra.mxu0 %v2807
  %2904 = vmatprep.subr.mxu0 0.0
  %2905 = vmatpush1.msra.mxu0 %v2809
  %2906 = vmatprep.subr.mxu0 0.0
  %2907 = vmatpush1.msra.mxu0 %v2811
  %2908 = vmatprep.subr.mxu0 0.0
  %2909 = vmatpush1.msra.mxu0 %v2813
  %2910 = vmatprep.subr.mxu0 0.0
  %2911 = vmatpush1.msra.mxu0 %v2815
  %2912 = vmatprep.subr.mxu0 0.0
  %2913 = vmatpush1.msra.mxu0 %v2817
  %2914 = vmatprep.subr.mxu0 0.0
  %2915 = vmatpush1.msra.mxu0 %v2819
  %2916 = vmatprep.subr.mxu0 0.0
  %2917 = vmatpush1.msra.mxu0 %v2821
  %2918 = vmatprep.subr.mxu0 0.0
  %2919 = vmatpush1.msra.mxu0 %v2823
  %2920 = vmatprep.subr.mxu0 0.0
  %2921 = vmatpush1.msra.mxu0 %v2825
  %2922 = vmatprep.subr.mxu0 0.0
  %2923 = vmatpush1.msra.mxu0 %v2827
  %2924 = vmatprep.subr.mxu0 0.0
  %2925 = vmatpush1.msra.mxu0 %v2829
  %2926 = vmatprep.subr.mxu0 0.0
  %2927 = vmatpush1.msra.mxu0 %v2831
  %2928 = vmatprep.subr.mxu0 0.0
  %2929 = vmatpush1.msra.mxu0 %v2833
  %2930 = vmatprep.subr.mxu0 0.0
  %2931 = vmatpush1.msra.mxu0 %v2835
  %2932 = vmatprep.subr.mxu0 0.0
  %2933 = vmatpush1.msra.mxu0 %v2837
  %2934 = vmatprep.subr.mxu0 0.0
  %2935 = vmatpush1.msra.mxu0 %v2839
  %2936 = vmatprep.mubr.f32.mxu0 %v2773
  %2937 = vmatmul.mubr.f32.gmra.mrb[0].mxu0 %v2772
  %v2938 = vpop.f32.mrb[0].mxu0
  %v2939 = vadd.f32 0.0, %v2938
  %v2940 = vpop.f32.mrb[0].mxu0
  %2941 = vdwg.mxu0
  %2942 = vrot.lane.b32.xlu0 %v404, 96
  %v2943 = vpop.permute.xlu0 %2942
  %2944 = vrot.lane.b32.xlu0 %v406, 96
  %v2945 = vpop.permute.xlu0 %2944
  %2946 = vrot.lane.b32.xlu0 %v408, 96
  %v2947 = vpop.permute.xlu0 %2946
  %2948 = vrot.lane.b32.xlu0 %v410, 96
  %v2949 = vpop.permute.xlu0 %2948
  %2950 = vrot.lane.b32.xlu0 %v412, 96
  %v2951 = vpop.permute.xlu0 %2950
  %2952 = vrot.lane.b32.xlu0 %v414, 96
  %v2953 = vpop.permute.xlu0 %2952
  %2954 = vrot.lane.b32.xlu0 %v416, 96
  %v2955 = vpop.permute.xlu0 %2954
  %2956 = vrot.lane.b32.xlu0 %v418, 96
  %v2957 = vpop.permute.xlu0 %2956
  %2958 = vrot.lane.b32.xlu0 %v420, 96
  %v2959 = vpop.permute.xlu0 %2958
  %2960 = vrot.lane.b32.xlu0 %v422, 96
  %v2961 = vpop.permute.xlu0 %2960
  %2962 = vrot.lane.b32.xlu0 %v424, 96
  %v2963 = vpop.permute.xlu0 %2962
  %2964 = vrot.lane.b32.xlu0 %v426, 96
  %v2965 = vpop.permute.xlu0 %2964
  %2966 = vrot.lane.b32.xlu0 %v428, 96
  %v2967 = vpop.permute.xlu0 %2966
  %2968 = vrot.lane.b32.xlu0 %v430, 96
  %v2969 = vpop.permute.xlu0 %2968
  %2970 = vrot.lane.b32.xlu0 %v432, 96
  %v2971 = vpop.permute.xlu0 %2970
  %2972 = vrot.lane.b32.xlu0 %v434, 96
  %v2973 = vpop.permute.xlu0 %2972
  %2974 = vrot.lane.b32.xlu0 %v436, 96
  %v2975 = vpop.permute.xlu0 %2974
  %2976 = vrot.lane.b32.xlu0 %v438, 96
  %v2977 = vpop.permute.xlu0 %2976
  %2978 = vrot.lane.b32.xlu0 %v440, 96
  %v2979 = vpop.permute.xlu0 %2978
  %2980 = vrot.lane.b32.xlu0 %v442, 96
  %v2981 = vpop.permute.xlu0 %2980
  %2982 = vrot.lane.b32.xlu0 %v444, 96
  %v2983 = vpop.permute.xlu0 %2982
  %2984 = vrot.lane.b32.xlu0 %v446, 96
  %v2985 = vpop.permute.xlu0 %2984
  %2986 = vrot.lane.b32.xlu0 %v448, 96
  %v2987 = vpop.permute.xlu0 %2986
  %2988 = vrot.lane.b32.xlu0 %v450, 96
  %v2989 = vpop.permute.xlu0 %2988
  %2990 = vrot.lane.b32.xlu0 %v452, 96
  %v2991 = vpop.permute.xlu0 %2990
  %2992 = vrot.lane.b32.xlu0 %v454, 96
  %v2993 = vpop.permute.xlu0 %2992
  %2994 = vrot.lane.b32.xlu0 %v456, 96
  %v2995 = vpop.permute.xlu0 %2994
  %2996 = vrot.lane.b32.xlu0 %v458, 96
  %v2997 = vpop.permute.xlu0 %2996
  %2998 = vrot.lane.b32.xlu0 %v460, 96
  %v2999 = vpop.permute.xlu0 %2998
  %3000 = vrot.lane.b32.xlu0 %v462, 96
  %v3001 = vpop.permute.xlu0 %3000
  %3002 = vrot.lane.b32.xlu0 %v464, 96
  %v3003 = vpop.permute.xlu0 %3002
  %3004 = vrot.lane.b32.xlu0 %v466, 96
  %v3005 = vpop.permute.xlu0 %3004
  %3038 = vmatprep.subr.mxu0 0.0
  %3039 = vmatpush1.msra.mxu0 %v2943
  %3040 = vmatprep.subr.mxu0 0.0
  %3041 = vmatpush1.msra.mxu0 %v2945
  %3042 = vmatprep.subr.mxu0 0.0
  %3043 = vmatpush1.msra.mxu0 %v2947
  %3044 = vmatprep.subr.mxu0 0.0
  %3045 = vmatpush1.msra.mxu0 %v2949
  %3046 = vmatprep.subr.mxu0 0.0
  %3047 = vmatpush1.msra.mxu0 %v2951
  %3048 = vmatprep.subr.mxu0 0.0
  %3049 = vmatpush1.msra.mxu0 %v2953
  %3050 = vmatprep.subr.mxu0 0.0
  %3051 = vmatpush1.msra.mxu0 %v2955
  %3052 = vmatprep.subr.mxu0 0.0
  %3053 = vmatpush1.msra.mxu0 %v2957
  %3054 = vmatprep.subr.mxu0 0.0
  %3055 = vmatpush1.msra.mxu0 %v2959
  %3056 = vmatprep.subr.mxu0 0.0
  %3057 = vmatpush1.msra.mxu0 %v2961
  %3058 = vmatprep.subr.mxu0 0.0
  %3059 = vmatpush1.msra.mxu0 %v2963
  %3060 = vmatprep.subr.mxu0 0.0
  %3061 = vmatpush1.msra.mxu0 %v2965
  %3062 = vmatprep.subr.mxu0 0.0
  %3063 = vmatpush1.msra.mxu0 %v2967
  %3064 = vmatprep.subr.mxu0 0.0
  %3065 = vmatpush1.msra.mxu0 %v2969
  %3066 = vmatprep.subr.mxu0 0.0
  %3067 = vmatpush1.msra.mxu0 %v2971
  %3068 = vmatprep.subr.mxu0 0.0
  %3069 = vmatpush1.msra.mxu0 %v2973
  %3070 = vmatprep.subr.mxu0 0.0
  %3071 = vmatpush1.msra.mxu0 %v2975
  %3072 = vmatprep.subr.mxu0 0.0
  %3073 = vmatpush1.msra.mxu0 %v2977
  %3074 = vmatprep.subr.mxu0 0.0
  %3075 = vmatpush1.msra.mxu0 %v2979
  %3076 = vmatprep.subr.mxu0 0.0
  %3077 = vmatpush1.msra.mxu0 %v2981
  %3078 = vmatprep.subr.mxu0 0.0
  %3079 = vmatpush1.msra.mxu0 %v2983
  %3080 = vmatprep.subr.mxu0 0.0
  %3081 = vmatpush1.msra.mxu0 %v2985
  %3082 = vmatprep.subr.mxu0 0.0
  %3083 = vmatpush1.msra.mxu0 %v2987
  %3084 = vmatprep.subr.mxu0 0.0
  %3085 = vmatpush1.msra.mxu0 %v2989
  %3086 = vmatprep.subr.mxu0 0.0
  %3087 = vmatpush1.msra.mxu0 %v2991
  %3088 = vmatprep.subr.mxu0 0.0
  %3089 = vmatpush1.msra.mxu0 %v2993
  %3090 = vmatprep.subr.mxu0 0.0
  %3091 = vmatpush1.msra.mxu0 %v2995
  %3092 = vmatprep.subr.mxu0 0.0
  %3093 = vmatpush1.msra.mxu0 %v2997
  %3094 = vmatprep.subr.mxu0 0.0
  %3095 = vmatpush1.msra.mxu0 %v2999
  %3096 = vmatprep.subr.mxu0 0.0
  %3097 = vmatpush1.msra.mxu0 %v3001
  %3098 = vmatprep.subr.mxu0 0.0
  %3099 = vmatpush1.msra.mxu0 %v3003
  %3100 = vmatprep.subr.mxu0 0.0
  %3101 = vmatpush1.msra.mxu0 %v3005
  %3102 = vmatprep.mubr.f32.mxu0 %v2775
  %3103 = vmatmul.mubr.f32.gmra.mrb[0].mxu0 %v2774
  %v3104 = vpop.f32.mrb[0].mxu0
  %v3105 = vadd.f32 0.0, %v3104
  %v3106 = vpop.f32.mrb[0].mxu0
  %3107 = vdwg.mxu0
  %s3108 = scalar_lea.vmem %s10, 64
  %v3109 = vld [vmem:[%s3108] sm:$0xff]
  %v3110 = vld [vmem:[%s3108 + $0x8] sm:$0xff]
  %v3111 = vld [vmem:[%s3108 + $0x10] sm:$0xff]
  %v3112 = vld [vmem:[%s3108 + $0x18] sm:$0xff]
  %s3113 = scalar_lea.vmem %s11, 2
  %v3114 = vld [vmem:[%s3113] sm:$0x1]
  %v3116 = vlaneseq
  %v3117 = vshrl.u32 %v3116, 7
  %v3118 = vsub.s32 0, %v3117
  %v3119 = vrot.slane %v3114, %v3118
  %v3122 = vsel %vm478, %v2939, 0
  %v3125 = vsel %vm478, %v3105, 0
  %3127 = vmatprep.subr.mxu0 0.0
  %3128 = vmatpush1.msra.mxu0 %v3109
  %3129 = vmatprep.subr.mxu0 0.0
  %3130 = vmatpush1.msra.mxu0 %v3110
  %3131 = vmatprep.subr.mxu0 0.0
  %3132 = vmatpush1.msra.mxu0 %v3111
  %3133 = vmatprep.subr.mxu0 0.0
  %3134 = vmatpush1.msra.mxu0 %v3112
  %3135 = vmatprep.subr.mxu0 0.0
  %3136 = vmatpush1.msra.mxu0 0.0
  %3137 = vmatprep.subr.mxu0 0.0
  %3138 = vmatpush1.msra.mxu0 0.0
  %3139 = vmatprep.subr.mxu0 0.0
  %3140 = vmatpush1.msra.mxu0 0.0
  %3141 = vmatprep.subr.mxu0 0.0
  %3142 = vmatpush1.msra.mxu0 0.0
  %3143 = vmatprep.subr.mxu0 0.0
  %3144 = vmatpush1.msra.mxu0 0.0
  %3145 = vmatprep.subr.mxu0 0.0
  %3146 = vmatpush1.msra.mxu0 0.0
  %3147 = vmatprep.subr.mxu0 0.0
  %3148 = vmatpush1.msra.mxu0 0.0
  %3149 = vmatprep.subr.mxu0 0.0
  %3150 = vmatpush1.msra.mxu0 0.0
  %3151 = vmatprep.subr.mxu0 0.0
  %3152 = vmatpush1.msra.mxu0 0.0
  %3153 = vmatprep.subr.mxu0 0.0
  %3154 = vmatpush1.msra.mxu0 0.0
  %3155 = vmatprep.subr.mxu0 0.0
  %3156 = vmatpush1.msra.mxu0 0.0
  %3157 = vmatprep.subr.mxu0 0.0
  %3158 = vmatpush1.msra.mxu0 0.0
  %3159 = vmatprep.subr.mxu0 0.0
  %3160 = vmatpush1.msra.mxu0 0.0
  %3161 = vmatprep.subr.mxu0 0.0
  %3162 = vmatpush1.msra.mxu0 0.0
  %3163 = vmatprep.subr.mxu0 0.0
  %3164 = vmatpush1.msra.mxu0 0.0
  %3165 = vmatprep.subr.mxu0 0.0
  %3166 = vmatpush1.msra.mxu0 0.0
  %3167 = vmatprep.subr.mxu0 0.0
  %3168 = vmatpush1.msra.mxu0 0.0
  %3169 = vmatprep.subr.mxu0 0.0
  %3170 = vmatpush1.msra.mxu0 0.0
  %3171 = vmatprep.subr.mxu0 0.0
  %3172 = vmatpush1.msra.mxu0 0.0
  %3173 = vmatprep.subr.mxu0 0.0
  %3174 = vmatpush1.msra.mxu0 0.0
  %3175 = vmatprep.subr.mxu0 0.0
  %3176 = vmatpush1.msra.mxu0 0.0
  %3177 = vmatprep.subr.mxu0 0.0
  %3178 = vmatpush1.msra.mxu0 0.0
  %3179 = vmatprep.subr.mxu0 0.0
  %3180 = vmatpush1.msra.mxu0 0.0
  %3181 = vmatprep.subr.mxu0 0.0
  %3182 = vmatpush1.msra.mxu0 0.0
  %3183 = vmatprep.subr.mxu0 0.0
  %3184 = vmatpush1.msra.mxu0 0.0
  %3185 = vmatprep.subr.mxu0 0.0
  %3186 = vmatpush1.msra.mxu0 0.0
  %3187 = vmatprep.subr.mxu0 0.0
  %3188 = vmatpush1.msra.mxu0 0.0
  %3189 = vmatprep.subr.mxu0 0.0
  %3190 = vmatpush1.msra.mxu0 0.0
  %3191 = vmatprep.mubr.f32.mxu0 0.0
  %3192 = vmatmul.mubr.f32.gmra.mrb[0].mxu0 %v3122
  %v3193 = vpop.f32.mrb[0].mxu0
  %v3194 = vadd.f32 %v3119, %v3193
  %v3195 = vpop.f32.mrb[0].mxu0
  %3196 = vmatprep.mubr.f32.mxu0 0.0
  %3197 = vmatmul.mubr.f32.gmra.mrb[0].mxu0 %v3125
  %v3198 = vpop.f32.mrb[0].mxu0
  %v3199 = vadd.f32 %v3119, %v3198
  %v3200 = vpop.f32.mrb[0].mxu0
  %3201 = vdwg.mxu0
  %v3202 = vadd.f32 %v2310, %v3194
  %v3203 = vadd.f32 %v2311, %v3199
  %v3204 = vld [vmem:[%s12] sm:$0xff]
  %v3205 = vld [vmem:[%s12 + $0x8] sm:$0xff]
  %v3206 = vld [vmem:[%s12 + $0x10] sm:$0xff]
  %v3207 = vld [vmem:[%s12 + $0x18] sm:$0xff]
  %v3208 = vld [vmem:[%s13] sm:$0x1]
  %v3210 = vlaneseq
  %v3211 = vshrl.u32 %v3210, 7
  %v3212 = vsub.s32 0, %v3211
  %v3213 = vrot.slane %v3208, %v3212
  %v3216 = vsel %vm478, %v3202, 0
  %v3219 = vsel %vm478, %v3203, 0
  %3221 = vmatprep.subr.mxu0 0.0
  %3222 = vmatpush1.msra.mxu0 %v3204
  %3223 = vmatprep.subr.mxu0 0.0
  %3224 = vmatpush1.msra.mxu0 %v3205
  %3225 = vmatprep.subr.mxu0 0.0
  %3226 = vmatpush1.msra.mxu0 %v3206
  %3227 = vmatprep.subr.mxu0 0.0
  %3228 = vmatpush1.msra.mxu0 %v3207
  %3229 = vmatprep.subr.mxu0 0.0
  %3230 = vmatpush1.msra.mxu0 0.0
  %3231 = vmatprep.subr.mxu0 0.0
  %3232 = vmatpush1.msra.mxu0 0.0
  %3233 = vmatprep.subr.mxu0 0.0
  %3234 = vmatpush1.msra.mxu0 0.0
  %3235 = vmatprep.subr.mxu0 0.0
  %3236 = vmatpush1.msra.mxu0 0.0
  %3237 = vmatprep.subr.mxu0 0.0
  %3238 = vmatpush1.msra.mxu0 0.0
  %3239 = vmatprep.subr.mxu0 0.0
  %3240 = vmatpush1.msra.mxu0 0.0
  %3241 = vmatprep.subr.mxu0 0.0
  %3242 = vmatpush1.msra.mxu0 0.0
  %3243 = vmatprep.subr.mxu0 0.0
  %3244 = vmatpush1.msra.mxu0 0.0
  %3245 = vmatprep.subr.mxu0 0.0
  %3246 = vmatpush1.msra.mxu0 0.0
  %3247 = vmatprep.subr.mxu0 0.0
  %3248 = vmatpush1.msra.mxu0 0.0
  %3249 = vmatprep.subr.mxu0 0.0
  %3250 = vmatpush1.msra.mxu0 0.0
  %3251 = vmatprep.subr.mxu0 0.0
  %3252 = vmatpush1.msra.mxu0 0.0
  %3253 = vmatprep.subr.mxu0 0.0
  %3254 = vmatpush1.msra.mxu0 0.0
  %3255 = vmatprep.subr.mxu0 0.0
  %3256 = vmatpush1.msra.mxu0 0.0
  %3257 = vmatprep.subr.mxu0 0.0
  %3258 = vmatpush1.msra.mxu0 0.0
  %3259 = vmatprep.subr.mxu0 0.0
  %3260 = vmatpush1.msra.mxu0 0.0
  %3261 = vmatprep.subr.mxu0 0.0
  %3262 = vmatpush1.msra.mxu0 0.0
  %3263 = vmatprep.subr.mxu0 0.0
  %3264 = vmatpush1.msra.mxu0 0.0
  %3265 = vmatprep.subr.mxu0 0.0
  %3266 = vmatpush1.msra.mxu0 0.0
  %3267 = vmatprep.subr.mxu0 0.0
  %3268 = vmatpush1.msra.mxu0 0.0
  %3269 = vmatprep.subr.mxu0 0.0
  %3270 = vmatpush1.msra.mxu0 0.0
  %3271 = vmatprep.subr.mxu0 0.0
  %3272 = vmatpush1.msra.mxu0 0.0
  %3273 = vmatprep.subr.mxu0 0.0
  %3274 = vmatpush1.msra.mxu0 0.0
  %3275 = vmatprep.subr.mxu0 0.0
  %3276 = vmatpush1.msra.mxu0 0.0
  %3277 = vmatprep.subr.mxu0 0.0
  %3278 = vmatpush1.msra.mxu0 0.0
  %3279 = vmatprep.subr.mxu0 0.0
  %3280 = vmatpush1.msra.mxu0 0.0
  %3281 = vmatprep.subr.mxu0 0.0
  %3282 = vmatpush1.msra.mxu0 0.0
  %3283 = vmatprep.subr.mxu0 0.0
  %3284 = vmatpush1.msra.mxu0 0.0
  %3285 = vmatprep.mubr.f32.mxu0 0.0
  %3286 = vmatmul.mubr.f32.gmra.mrb[0].mxu0 %v3216
  %v3287 = vpop.f32.mrb[0].mxu0
  %v3288 = vadd.f32 %v3213, %v3287
  %v3289 = vpop.f32.mrb[0].mxu0
  %3290 = vmatprep.mubr.f32.mxu0 0.0
  %3291 = vmatmul.mubr.f32.gmra.mrb[0].mxu0 %v3219
  %v3292 = vpop.f32.mrb[0].mxu0
  %v3293 = vadd.f32 %v3213, %v3292
  %v3294 = vpop.f32.mrb[0].mxu0
  %3295 = vdwg.mxu0
  %v3296 = vmax.f32 %v3288, 0.0
  %v3297 = vmax.f32 %v3293, 0.0
  %v3298 = vld [vmem:[%s14] sm:$0xff]
  %v3299 = vld [vmem:[%s14 + $0x8] sm:$0xff]
  %v3300 = vld [vmem:[%s14 + $0x10] sm:$0xff]
  %v3301 = vld [vmem:[%s14 + $0x18] sm:$0xff]
  %v3302 = vld [vmem:[%s15] sm:$0x1]
  %v3304 = vlaneseq
  %v3305 = vshrl.u32 %v3304, 7
  %v3306 = vsub.s32 0, %v3305
  %v3307 = vrot.slane %v3302, %v3306
  %v3310 = vsel %vm478, %v3296, 0
  %v3313 = vsel %vm478, %v3297, 0
  %3315 = vmatprep.subr.mxu0 0.0
  %3316 = vmatpush1.msra.mxu0 %v3298
  %3317 = vmatprep.subr.mxu0 0.0
  %3318 = vmatpush1.msra.mxu0 %v3299
  %3319 = vmatprep.subr.mxu0 0.0
  %3320 = vmatpush1.msra.mxu0 %v3300
  %3321 = vmatprep.subr.mxu0 0.0
  %3322 = vmatpush1.msra.mxu0 %v3301
  %3323 = vmatprep.subr.mxu0 0.0
  %3324 = vmatpush1.msra.mxu0 0.0
  %3325 = vmatprep.subr.mxu0 0.0
  %3326 = vmatpush1.msra.mxu0 0.0
  %3327 = vmatprep.subr.mxu0 0.0
  %3328 = vmatpush1.msra.mxu0 0.0
  %3329 = vmatprep.subr.mxu0 0.0
  %3330 = vmatpush1.msra.mxu0 0.0
  %3331 = vmatprep.subr.mxu0 0.0
  %3332 = vmatpush1.msra.mxu0 0.0
  %3333 = vmatprep.subr.mxu0 0.0
  %3334 = vmatpush1.msra.mxu0 0.0
  %3335 = vmatprep.subr.mxu0 0.0
  %3336 = vmatpush1.msra.mxu0 0.0
  %3337 = vmatprep.subr.mxu0 0.0
  %3338 = vmatpush1.msra.mxu0 0.0
  %3339 = vmatprep.subr.mxu0 0.0
  %3340 = vmatpush1.msra.mxu0 0.0
  %3341 = vmatprep.subr.mxu0 0.0
  %3342 = vmatpush1.msra.mxu0 0.0
  %3343 = vmatprep.subr.mxu0 0.0
  %3344 = vmatpush1.msra.mxu0 0.0
  %3345 = vmatprep.subr.mxu0 0.0
  %3346 = vmatpush1.msra.mxu0 0.0
  %3347 = vmatprep.subr.mxu0 0.0
  %3348 = vmatpush1.msra.mxu0 0.0
  %3349 = vmatprep.subr.mxu0 0.0
  %3350 = vmatpush1.msra.mxu0 0.0
  %3351 = vmatprep.subr.mxu0 0.0
  %3352 = vmatpush1.msra.mxu0 0.0
  %3353 = vmatprep.subr.mxu0 0.0
  %3354 = vmatpush1.msra.mxu0 0.0
  %3355 = vmatprep.subr.mxu0 0.0
  %3356 = vmatpush1.msra.mxu0 0.0
  %3357 = vmatprep.subr.mxu0 0.0
  %3358 = vmatpush1.msra.mxu0 0.0
  %3359 = vmatprep.subr.mxu0 0.0
  %3360 = vmatpush1.msra.mxu0 0.0
  %3361 = vmatprep.subr.mxu0 0.0
  %3362 = vmatpush1.msra.mxu0 0.0
  %3363 = vmatprep.subr.mxu0 0.0
  %3364 = vmatpush1.msra.mxu0 0.0
  %3365 = vmatprep.subr.mxu0 0.0
  %3366 = vmatpush1.msra.mxu0 0.0
  %3367 = vmatprep.subr.mxu0 0.0
  %3368 = vmatpush1.msra.mxu0 0.0
  %3369 = vmatprep.subr.mxu0 0.0
  %3370 = vmatpush1.msra.mxu0 0.0
  %3371 = vmatprep.subr.mxu0 0.0
  %3372 = vmatpush1.msra.mxu0 0.0
  %3373 = vmatprep.subr.mxu0 0.0
  %3374 = vmatpush1.msra.mxu0 0.0
  %3375 = vmatprep.subr.mxu0 0.0
  %3376 = vmatpush1.msra.mxu0 0.0
  %3377 = vmatprep.subr.mxu0 0.0
  %3378 = vmatpush1.msra.mxu0 0.0
  %3379 = vmatprep.mubr.f32.mxu0 0.0
  %3380 = vmatmul.mubr.f32.gmra.mrb[0].mxu0 %v3310
  %v3381 = vpop.f32.mrb[0].mxu0
  %v3382 = vadd.f32 %v3307, %v3381
  %v3383 = vpop.f32.mrb[0].mxu0
  %3384 = vmatprep.mubr.f32.mxu0 0.0
  %3385 = vmatmul.mubr.f32.gmra.mrb[0].mxu0 %v3313
  %v3386 = vpop.f32.mrb[0].mxu0
  %v3387 = vadd.f32 %v3307, %v3386
  %v3388 = vpop.f32.mrb[0].mxu0
  %3389 = vdwg.mxu0
  %v3390 = vmax.f32 %v3382, 0.0
  %v3391 = vmax.f32 %v3387, 0.0
  %v3392 = vld [vmem:[%s16] sm:$0xff]
  %v3393 = vld [vmem:[%s16 + $0x8] sm:$0xff]
  %v3394 = vld [vmem:[%s16 + $0x10] sm:$0xff]
  %v3395 = vld [vmem:[%s16 + $0x18] sm:$0xff]
  %v3396 = vld [vmem:[%s17] sm:$0xff]
  %v3397 = vld [vmem:[%s17 + $0x8] sm:$0xff]
  %v3398 = vld [vmem:[%s17 + $0x10] sm:$0xff]
  %v3399 = vld [vmem:[%s17 + $0x18] sm:$0xff]
  %v3401 = vsel %vm478, %v3390, 0
  %v3404 = vsel %vm478, %v3391, 0
  %3406 = vmatprep.subr.mxu0 0.0
  %3407 = vmatpush1.msra.mxu0 %v3396
  %3408 = vmatprep.subr.mxu0 0.0
  %3409 = vmatpush1.msra.mxu0 %v3397
  %3410 = vmatprep.subr.mxu0 0.0
  %3411 = vmatpush1.msra.mxu0 %v3398
  %3412 = vmatprep.subr.mxu0 0.0
  %3413 = vmatpush1.msra.mxu0 %v3399
  %3414 = vmatprep.subr.mxu0 0.0
  %3415 = vmatpush1.msra.mxu0 0.0
  %3416 = vmatprep.subr.mxu0 0.0
  %3417 = vmatpush1.msra.mxu0 0.0
  %3418 = vmatprep.subr.mxu0 0.0
  %3419 = vmatpush1.msra.mxu0 0.0
  %3420 = vmatprep.subr.mxu0 0.0
  %3421 = vmatpush1.msra.mxu0 0.0
  %3422 = vmatprep.subr.mxu0 0.0
  %3423 = vmatpush1.msra.mxu0 0.0
  %3424 = vmatprep.subr.mxu0 0.0
  %3425 = vmatpush1.msra.mxu0 0.0
  %3426 = vmatprep.subr.mxu0 0.0
  %3427 = vmatpush1.msra.mxu0 0.0
  %3428 = vmatprep.subr.mxu0 0.0
  %3429 = vmatpush1.msra.mxu0 0.0
  %3430 = vmatprep.subr.mxu0 0.0
  %3431 = vmatpush1.msra.mxu0 0.0
  %3432 = vmatprep.subr.mxu0 0.0
  %3433 = vmatpush1.msra.mxu0 0.0
  %3434 = vmatprep.subr.mxu0 0.0
  %3435 = vmatpush1.msra.mxu0 0.0
  %3436 = vmatprep.subr.mxu0 0.0
  %3437 = vmatpush1.msra.mxu0 0.0
  %3438 = vmatprep.subr.mxu0 0.0
  %3439 = vmatpush1.msra.mxu0 0.0
  %3440 = vmatprep.subr.mxu0 0.0
  %3441 = vmatpush1.msra.mxu0 0.0
  %3442 = vmatprep.subr.mxu0 0.0
  %3443 = vmatpush1.msra.mxu0 0.0
  %3444 = vmatprep.subr.mxu0 0.0
  %3445 = vmatpush1.msra.mxu0 0.0
  %3446 = vmatprep.subr.mxu0 0.0
  %3447 = vmatpush1.msra.mxu0 0.0
  %3448 = vmatprep.subr.mxu0 0.0
  %3449 = vmatpush1.msra.mxu0 0.0
  %3450 = vmatprep.subr.mxu0 0.0
  %3451 = vmatpush1.msra.mxu0 0.0
  %3452 = vmatprep.subr.mxu0 0.0
  %3453 = vmatpush1.msra.mxu0 0.0
  %3454 = vmatprep.subr.mxu0 0.0
  %3455 = vmatpush1.msra.mxu0 0.0
  %3456 = vmatprep.subr.mxu0 0.0
  %3457 = vmatpush1.msra.mxu0 0.0
  %3458 = vmatprep.subr.mxu0 0.0
  %3459 = vmatpush1.msra.mxu0 0.0
  %3460 = vmatprep.subr.mxu0 0.0
  %3461 = vmatpush1.msra.mxu0 0.0
  %3462 = vmatprep.subr.mxu0 0.0
  %3463 = vmatpush1.msra.mxu0 0.0
  %3464 = vmatprep.subr.mxu0 0.0
  %3465 = vmatpush1.msra.mxu0 0.0
  %3466 = vmatprep.subr.mxu0 0.0
  %3467 = vmatpush1.msra.mxu0 0.0
  %3468 = vmatprep.subr.mxu0 0.0
  %3469 = vmatpush1.msra.mxu0 0.0
  %3470 = vmatprep.mubr.f32.mxu0 0.0
  %3471 = vmatmul.mubr.f32.gmra.mrb[0].mxu0 %v3401
  %v3472 = vpop.f32.mrb[0].mxu0
  %v3473 = vadd.f32 0.0, %v3472
  %v3474 = vpop.f32.mrb[0].mxu0
  %3475 = vmatprep.mubr.f32.mxu0 0.0
  %3476 = vmatmul.mubr.f32.gmra.mrb[0].mxu0 %v3404
  %v3477 = vpop.f32.mrb[0].mxu0
  %v3478 = vadd.f32 0.0, %v3477
  %v3479 = vpop.f32.mrb[0].mxu0
  %3480 = vdwg.mxu0
  %3481 = vmatprep.subr.mxu0 0.0
  %3482 = vmatpush1.msra.mxu0 %v3392
  %3483 = vmatprep.subr.mxu0 0.0
  %3484 = vmatpush1.msra.mxu0 %v3393
  %3485 = vmatprep.subr.mxu0 0.0
  %3486 = vmatpush1.msra.mxu0 %v3394
  %3487 = vmatprep.subr.mxu0 0.0
  %3488 = vmatpush1.msra.mxu0 %v3395
  %3489 = vmatprep.subr.mxu0 0.0
  %3490 = vmatpush1.msra.mxu0 0.0
  %3491 = vmatprep.subr.mxu0 0.0
  %3492 = vmatpush1.msra.mxu0 0.0
  %3493 = vmatprep.subr.mxu0 0.0
  %3494 = vmatpush1.msra.mxu0 0.0
  %3495 = vmatprep.subr.mxu0 0.0
  %3496 = vmatpush1.msra.mxu0 0.0
  %3497 = vmatprep.subr.mxu0 0.0
  %3498 = vmatpush1.msra.mxu0 0.0
  %3499 = vmatprep.subr.mxu0 0.0
  %3500 = vmatpush1.msra.mxu0 0.0
  %3501 = vmatprep.subr.mxu0 0.0
  %3502 = vmatpush1.msra.mxu0 0.0
  %3503 = vmatprep.subr.mxu0 0.0
  %3504 = vmatpush1.msra.mxu0 0.0
  %3505 = vmatprep.subr.mxu0 0.0
  %3506 = vmatpush1.msra.mxu0 0.0
  %3507 = vmatprep.subr.mxu0 0.0
  %3508 = vmatpush1.msra.mxu0 0.0
  %3509 = vmatprep.subr.mxu0 0.0
  %3510 = vmatpush1.msra.mxu0 0.0
  %3511 = vmatprep.subr.mxu0 0.0
  %3512 = vmatpush1.msra.mxu0 0.0
  %3513 = vmatprep.subr.mxu0 0.0
  %3514 = vmatpush1.msra.mxu0 0.0
  %3515 = vmatprep.subr.mxu0 0.0
  %3516 = vmatpush1.msra.mxu0 0.0
  %3517 = vmatprep.subr.mxu0 0.0
  %3518 = vmatpush1.msra.mxu0 0.0
  %3519 = vmatprep.subr.mxu0 0.0
  %3520 = vmatpush1.msra.mxu0 0.0
  %3521 = vmatprep.subr.mxu0 0.0
  %3522 = vmatpush1.msra.mxu0 0.0
  %3523 = vmatprep.subr.mxu0 0.0
  %3524 = vmatpush1.msra.mxu0 0.0
  %3525 = vmatprep.subr.mxu0 0.0
  %3526 = vmatpush1.msra.mxu0 0.0
  %3527 = vmatprep.subr.mxu0 0.0
  %3528 = vmatpush1.msra.mxu0 0.0
  %3529 = vmatprep.subr.mxu0 0.0
  %3530 = vmatpush1.msra.mxu0 0.0
  %3531 = vmatprep.subr.mxu0 0.0
  %3532 = vmatpush1.msra.mxu0 0.0
  %3533 = vmatprep.subr.mxu0 0.0
  %3534 = vmatpush1.msra.mxu0 0.0
  %3535 = vmatprep.subr.mxu0 0.0
  %3536 = vmatpush1.msra.mxu0 0.0
  %3537 = vmatprep.subr.mxu0 0.0
  %3538 = vmatpush1.msra.mxu0 0.0
  %3539 = vmatprep.subr.mxu0 0.0
  %3540 = vmatpush1.msra.mxu0 0.0
  %3541 = vmatprep.subr.mxu0 0.0
  %3542 = vmatpush1.msra.mxu0 0.0
  %3543 = vmatprep.subr.mxu0 0.0
  %3544 = vmatpush1.msra.mxu0 0.0
  %3545 = vmatprep.mubr.f32.mxu0 0.0
  %3546 = vmatmul.mubr.f32.gmra.mrb[0].mxu0 %v3216
  %v3547 = vpop.f32.mrb[0].mxu0
  %v3548 = vadd.f32 %v3473, %v3547
  %v3549 = vpop.f32.mrb[0].mxu0
  %3550 = vmatprep.mubr.f32.mxu0 0.0
  %3551 = vmatmul.mubr.f32.gmra.mrb[0].mxu0 %v3219
  %v3552 = vpop.f32.mrb[0].mxu0
  %v3553 = vadd.f32 %v3478, %v3552
  %v3554 = vpop.f32.mrb[0].mxu0
  %3555 = vdwg.mxu0
  %v3556 = vld [vmem:[%s18] sm:$0x1]
  %v3558 = vlaneseq
  %v3559 = vshrl.u32 %v3558, 7
  %v3560 = vsub.s32 0, %v3559
  %v3561 = vrot.slane %v3556, %v3560
  %v3563 = vadd.f32 %v3548, %v3561
  %v3564 = vadd.f32 %v3553, %v3561
  %v3565 = vxor.u32 %v3563, 2147483648
  %v3566 = vxor.u32 %v3564, 2147483648
  %v3567 = vmul.f32 %v3565, 1.442695
  %v3568 = vpow.pop %v3567
  %v3569 = vmul.f32 %v3566, 1.442695
  %v3570 = vpow.pop %v3569
  %v3571 = vadd.f32 %v3568, 1.0
  %v3572 = vadd.f32 %v3570, 1.0
  %v3573 = vrcp.pop %v3571
  %v3574 = vmul.f32 1.0, %v3573
  %v3575 = vrcp.pop %v3572
  %v3576 = vmul.f32 1.0, %v3575
  %3577 = vst [vmem:[%s19] sm:$0xff] %v3574
  %3578 = vst [vmem:[%s19 + $0x8] sm:$0xff] %v3576
  // Predicated region
  $region78: #{detr_forward.3} parent=0 // pred_check
    _
  $region79: #{detr_forward.3} parent=0 // pred_check_branch
    %3580 = sbr.rel (0) target = $region81
  $region80: #{detr_forward.3} parent=0 // pred_region
    _
  $region81: #{detr_forward.3} parent=0 // pred_fallthru
    _
  // Predicated region
  $region82: #{detr_forward.3} parent=0 // pred_check
    _
  $region83: #{detr_forward.3} parent=0 // pred_check_branch
    %3582 = sbr.rel (0) target = $region85
  $region84: #{detr_forward.3} parent=0 // pred_region
    _
  $region85: #{detr_forward.3} parent=0 // pred_fallthru
    _

</llo_original>
